<compile_context>
chip_gen: v7x
topology: tpu7x:2x2x1
jax: 0.10.0
libtpu: 0.0.40
codegen_flags: <defaults>
</compile_context>

<pallas_src>
import functools

import jax
import jax.numpy as jnp
from jax import lax
from jax.experimental import pallas as pl
from jax.experimental.pallas import tpu as pltpu


# bf16 operands are the native MXU path on v5e/v6e/v7x; accumulation stays
# f32.  Set to jnp.float32 to recover exact-f32 numerics (tolerance adapts).
MATMUL_DTYPE = jnp.bfloat16


def _convlstm_kernel(comb_ref, c_ref, w_ref, out_ref, *, K, L, H, lane_pad):
    """One batch-block of the ConvLSTM cell.

    comb_ref: (Bb, L + 2*pad, C_in + H) f32  zero border rows, channels-last [x | h]
    c_ref:    (Bb, L, H)                f32  current cell state
    w_ref:    (Kc, 4H)                  bf16 tap-major conv weight + bias row + zero pad
    out_ref:  (Bb, L, 2H)               f32  fused [h_next | c_next]
    """
    Bb = comb_ref.shape[0]
    M = Bb * L

    comb = comb_ref[...]                                    # f32, padded rows
    # im2col: the K conv taps are plain static row slices of the padded
    # buffer (the zero border rows realize the 'same' padding — no masks,
    # no in-kernel zero concatenation along sublanes).
    pieces = [comb[:, k:k + L, :] for k in range(K)]
    # Bias lane + zero lanes bring the contraction up to a 128 multiple.
    pieces.append(jnp.ones((Bb, L, 1), jnp.float32))        # ones column -> bias
    if lane_pad > 1:
        pieces.append(jnp.zeros((Bb, L, lane_pad - 1), jnp.float32))
    lhs = jnp.concatenate(pieces, axis=-1).reshape(M, -1)   # (M, Kc) f32

    # Single MXU matmul for the whole conv (+bias).  LATE bf16 cast, f32 acc.
    acc = jnp.dot(lhs.astype(MATMUL_DTYPE), w_ref[...],
                  preferred_element_type=jnp.float32)       # (M, 4H)

    # Gate order matches torch.split(combined_conv, H, dim=1): i, f, o, g.
    sig = jax.nn.sigmoid(acc[:, :3 * H])                    # one wide EUP op
    i_g = sig[:, 0 * H:1 * H]
    f_g = sig[:, 1 * H:2 * H]
    o_g = sig[:, 2 * H:3 * H]
    g_g = jnp.tanh(acc[:, 3 * H:])

    c_cur = c_ref[...].astype(jnp.float32).reshape(M, H)
    c_next = f_g * c_cur + i_g * g_g
    h_next = o_g * jnp.tanh(c_next)

    # Fused, lane-dense store: 2H lanes in one slab (128 lanes for H=64).
    out = jnp.concatenate([h_next, c_next], axis=-1)        # (M, 2H)
    out_ref[...] = out.reshape(Bb, L, 2 * H).astype(out_ref.dtype)


def _round_up(x, m):
    return ((x + m - 1) // m) * m


def _choose_batch_block(B, L, *, target_rows=512, max_rows=2048):
    """Pick Bb | B with Bb*L >= target_rows (pipelining / MXU fill) while
    keeping >= 2 grid steps when possible (v7x has 2 TensorCores)."""
    divisors = [d for d in range(1, B + 1) if B % d == 0]
    for d in divisors:                       # smallest divisor hitting target
        if d * L >= target_rows and (B // d) >= 2 and d * L <= max_rows:
            return d
    for d in reversed(divisors):             # else fattest block under the cap
        if d * L <= max_rows:
            return d
    return 1


def conv_lstm_block(x_ncl, h_ncl, c_ncl, weight, bias, padding, *, batch_block=None):
    """Forward pass of ConvLSTMBlock.

    x_ncl:  (B, C_in, L)       float32 (PyTorch NCL layout)
    h_ncl:  (B, H, L)          float32
    c_ncl:  (B, H, L)          float32
    weight: (4H, C_in + H, K)  PyTorch Conv1d weight layout
    bias:   (4H,)
    Returns (h_next, c_next), each (B, H, L) — same as the PyTorch module.
    """
    B, C_in, L = x_ncl.shape
    H = h_ncl.shape[1]
    four_h, c_tot, K = weight.shape
    assert four_h == 4 * H and c_tot == C_in + H
    assert L + 2 * padding - K + 1 == L, \
        "kernel assumes a 'same' conv (L_out == L) so gates align with c_cur"

    Bb = batch_block if batch_block is not None else _choose_batch_block(B, L)
    assert B % Bb == 0, "batch must be divisible by the batch block"
    Lp = L + 2 * padding
    M = Bb * L

    # Contraction: K taps of (C_in+H) lanes + 1 bias lane, padded to a
    # multiple of 128 when that adds <= 1/3 zero-lanes, else a multiple of 8.
    kc_raw = K * c_tot + 1
    kc128 = _round_up(kc_raw, 128)
    Kc = kc128 if kc128 * 3 <= kc_raw * 4 else _round_up(kc_raw, 8)
    lane_pad = Kc - K * c_tot                  # >= 1 (ones/bias lane + zeros)

    # ---- HBM layout (in real recurrent use, carry h/c in this channels-last
    # fused layout and hoist these transposes + the weight packing out of the
    # per-timestep path; they are per-call here only to match the PyTorch
    # single-step NCL forward() interface).
    xh = jnp.concatenate([jnp.transpose(x_ncl, (0, 2, 1)),
                          jnp.transpose(h_ncl, (0, 2, 1))], axis=-1)    # (B, L, Ct)
    comb = jnp.pad(xh.astype(jnp.float32),
                   ((0, 0), (padding, padding), (0, 0)))                # (B, Lp, Ct)
    c_blc = jnp.transpose(c_ncl, (0, 2, 1)).astype(jnp.float32)         # (B, L, H)

    # Pre-pack weight: (4H, Ct, K) -> tap-major (K*Ct, 4H), + bias row + pad.
    w_taps = jnp.transpose(weight, (2, 1, 0)).reshape(K * c_tot, 4 * H)
    w_full = jnp.concatenate(
        [w_taps,
         bias.reshape(1, 4 * H).astype(weight.dtype),
         jnp.zeros((Kc - K * c_tot - 1, 4 * H), weight.dtype)],
        axis=0).astype(MATMUL_DTYPE)                                     # (Kc, 4H)

    # VMEM budget check (v7x: 64 MiB physical, 32 MiB scoped default).
    bytes_blocks = (Bb * Lp * c_tot + Bb * L * H + Bb * L * 2 * H) * 4 + Kc * 4 * H * 2
    vmem_est = 2 * bytes_blocks + M * Kc * 6 + M * 4 * H * 8
    assert vmem_est < 24 * 2 ** 20, \
        "batch_block too large for TPU VMEM (v7x = 64 MiB); reduce it"

    kernel = functools.partial(_convlstm_kernel, K=K, L=L, H=H, lane_pad=lane_pad)

    out = pl.pallas_call(
        kernel,
        out_shape=jax.ShapeDtypeStruct((B, L, 2 * H), jnp.float32),
        grid_spec=pltpu.PrefetchScalarGridSpec(
            num_scalar_prefetch=0,
            grid=(B // Bb,),
            in_specs=[
                pl.BlockSpec((Bb, Lp, c_tot), lambda i: (i, 0, 0)),
                pl.BlockSpec((Bb, L, H), lambda i: (i, 0, 0)),
                # Grid-invariant weight block (128 KiB here).  For large H,
                # add pipeline_mode=pl.Buffered(1) to drop its second buffer
                # inside v7x's 64 MiB VMEM.
                pl.BlockSpec((Kc, 4 * H), lambda i: (0, 0)),
            ],
            out_specs=pl.BlockSpec((Bb, L, 2 * H), lambda i: (i, 0, 0)),
        ),
        compiler_params=pltpu.CompilerParams(
            dimension_semantics=("parallel",)),
    )(comb, c_blc, w_full)

    # TODO(synk): for multi-timestep recurrent use, keep h/c in the fused
    # (B, L, 2H) kernel layout with input_output_aliases (in-place state
    # update) instead of transposing back to NCL every step.
    h_next = jnp.transpose(out[..., :H], (0, 2, 1))        # (B, H, L)
    c_next = jnp.transpose(out[..., H:], (0, 2, 1))        # (B, H, L)
    return h_next, c_next


def _reference(x_ncl, h_ncl, c_ncl, weight, bias, padding):
    """Pure-JAX reference mirroring the PyTorch forward (NCL conv)."""
    combined = jnp.concatenate([x_ncl, h_ncl], axis=1)
    conv = lax.conv_general_dilated(
        combined, weight, window_strides=(1,),
        padding=[(padding, padding)],
        dimension_numbers=("NCH", "OIH", "NCH")) + bias[None, :, None]
    cc_i, cc_f, cc_o, cc_g = jnp.split(conv, 4, axis=1)
    i = jax.nn.sigmoid(cc_i)
    f = jax.nn.sigmoid(cc_f)
    o = jax.nn.sigmoid(cc_o)
    g = jnp.tanh(cc_g)
    c_next = f * c_ncl + i * g
    h_next = o * jnp.tanh(c_next)
    return h_next, c_next


if __name__ == "__main__":
    # Demo config: H=64 -> the fused [h|c] output store is a dense 128-lane
    # (unmasked) store; B=64, L=16 -> batch_block=32 gives two 512-row
    # "parallel" grid steps (feeds both v7x TensorCores); contraction
    # 3*(4+64)+1 is zero-padded to 256 with the bias folded into the matmul.
    B, C_in, H, L = 64, 4, 64, 16
    K, PAD = 3, 1          # 'same' conv so gate maps align with c_cur

    key = jax.random.PRNGKey(0)
    kx, kh, kc, kw, kb = jax.random.split(key, 5)

    x = jax.random.normal(kx, (B, C_in, L), jnp.float32)        # NCL input
    h_cur = jax.random.normal(kh, (B, H, L), jnp.float32)
    c_cur = jax.random.normal(kc, (B, H, L), jnp.float32)

    # Deterministic parameter init (Conv1d weight/bias shapes).
    weight = 0.1 * jax.random.normal(kw, (4 * H, C_in + H, K), jnp.float32)
    bias = 0.1 * jax.random.normal(kb, (4 * H,), jnp.float32)

    h_next, c_next = conv_lstm_block(x, h_cur, c_cur, weight, bias, PAD)
    jax.block_until_ready((h_next, c_next))

    h_ref, c_ref = _reference(x, h_cur, c_cur, weight, bias, PAD)
    # bf16 matmul operands (f32 accumulation) -> bf16-level tolerance.
    tol = 2e-5 if MATMUL_DTYPE == jnp.float32 else 5e-2
    assert jnp.allclose(h_next, h_ref, atol=tol, rtol=tol), \
        float(jnp.max(jnp.abs(h_next - h_ref)))
    assert jnp.allclose(c_next, c_ref, atol=tol, rtol=tol), \
        float(jnp.max(jnp.abs(c_next - c_ref)))

    print("KERNEL_OK")
</pallas_src>

<mosaic_0001>
module attributes {stable_mosaic.version = 11 : i64} {
  func.func @_convlstm_kernel(%arg0: i32, %arg1: memref<32x18x68xf32, #tpu.memory_space<vmem>>, %arg2: memref<32x16x64xf32, #tpu.memory_space<vmem>>, %arg3: memref<256x256xbf16, #tpu.memory_space<vmem>>, %arg4: memref<32x16x128xf32, #tpu.memory_space<vmem>>) attributes {dimension_semantics = [#tpu.dimension_semantics<parallel>], iteration_bounds = array<i64: 2>, scalar_prefetch = 0 : i64, scratch_operands = 0 : i64, tpu.core_type = #tpu.core_type<tc>, window_params = [{transform_indices = @transform_0, window_bounds = array<i64: 32, 18, 68>}, {transform_indices = @transform_1, window_bounds = array<i64: 32, 16, 64>}, {pipeline_mode = #tpu.pipeline_mode<synchronous>, transform_indices = @transform_2, window_bounds = array<i64: 256, 256>}, {transform_indices = @transform_3, window_bounds = array<i64: 32, 16, 128>}]} {
    %c0 = arith.constant 0 : index
    %c0_0 = arith.constant 0 : index
    %c0_1 = arith.constant 0 : index
    %0 = vector.load %arg1[%c0, %c0_0, %c0_1] : memref<32x18x68xf32, #tpu.memory_space<vmem>>, vector<32x18x68xf32>
    %1 = vector.extract_strided_slice %0 {offsets = [0, 0, 0], sizes = [32, 16, 68], strides = [1, 1, 1]} : vector<32x18x68xf32> to vector<32x16x68xf32>
    %2 = vector.extract_strided_slice %0 {offsets = [0, 1, 0], sizes = [32, 16, 68], strides = [1, 1, 1]} : vector<32x18x68xf32> to vector<32x16x68xf32>
    %3 = vector.extract_strided_slice %0 {offsets = [0, 2, 0], sizes = [32, 16, 68], strides = [1, 1, 1]} : vector<32x18x68xf32> to vector<32x16x68xf32>
    %cst = arith.constant 1.000000e+00 : f32
    %4 = vector.broadcast %cst : f32 to vector<32x16x1xf32>
    %cst_2 = arith.constant 0.000000e+00 : f32
    %5 = vector.broadcast %cst_2 : f32 to vector<32x16x51xf32>
    %6 = tpu.concatenate %1, %2, %3, %4, %5 in 2 : vector<32x16x68xf32>, vector<32x16x68xf32>, vector<32x16x68xf32>, vector<32x16x1xf32>, vector<32x16x51xf32> -> vector<32x16x256xf32>
    %7 = vector.shape_cast %6 : vector<32x16x256xf32> to vector<512x256xf32>
    %8 = arith.truncf %7 : vector<512x256xf32> to vector<512x256xbf16>
    %c0_3 = arith.constant 0 : index
    %c0_4 = arith.constant 0 : index
    %9 = vector.load %arg3[%c0_3, %c0_4] : memref<256x256xbf16, #tpu.memory_space<vmem>>, vector<256x256xbf16>
    %cst_5 = arith.constant dense<0.000000e+00> : vector<512x256xf32>
    %10 = tpu.matmul %8, %9, %cst_5 {dimension_numbers = #tpu.dot_dimension_numbers<[1], [0], [0], [1], [0, 0, 1, 1], [], []>} : vector<512x256xbf16>, vector<256x256xbf16>, vector<512x256xf32> -> vector<512x256xf32>
    %11 = vector.extract_strided_slice %10 {offsets = [0, 0], sizes = [512, 192], strides = [1, 1]} : vector<512x256xf32> to vector<512x192xf32>
    %12 = arith.negf %11 : vector<512x192xf32>
    %13 = math.exp %12 : vector<512x192xf32>
    %cst_6 = arith.constant 1.000000e+00 : f32
    %14 = vector.broadcast %cst_6 : f32 to vector<512x192xf32>
    %15 = arith.addf %14, %13 : vector<512x192xf32>
    %16 = arith.divf %14, %15 : vector<512x192xf32>
    %17 = vector.extract_strided_slice %16 {offsets = [0, 0], sizes = [512, 64], strides = [1, 1]} : vector<512x192xf32> to vector<512x64xf32>
    %18 = vector.extract_strided_slice %16 {offsets = [0, 64], sizes = [512, 64], strides = [1, 1]} : vector<512x192xf32> to vector<512x64xf32>
    %19 = vector.extract_strided_slice %16 {offsets = [0, 128], sizes = [512, 64], strides = [1, 1]} : vector<512x192xf32> to vector<512x64xf32>
    %20 = vector.extract_strided_slice %10 {offsets = [0, 192], sizes = [512, 64], strides = [1, 1]} : vector<512x256xf32> to vector<512x64xf32>
    %21 = math.tanh %20 : vector<512x64xf32>
    %c0_7 = arith.constant 0 : index
    %c0_8 = arith.constant 0 : index
    %c0_9 = arith.constant 0 : index
    %22 = vector.load %arg2[%c0_7, %c0_8, %c0_9] : memref<32x16x64xf32, #tpu.memory_space<vmem>>, vector<32x16x64xf32>
    %23 = vector.shape_cast %22 : vector<32x16x64xf32> to vector<512x64xf32>
    %24 = arith.mulf %18, %23 : vector<512x64xf32>
    %25 = arith.mulf %17, %21 : vector<512x64xf32>
    %26 = arith.addf %24, %25 : vector<512x64xf32>
    %27 = math.tanh %26 : vector<512x64xf32>
    %28 = arith.mulf %19, %27 : vector<512x64xf32>
    %29 = tpu.concatenate %28, %26 in 1 : vector<512x64xf32>, vector<512x64xf32> -> vector<512x128xf32>
    %30 = vector.shape_cast %29 : vector<512x128xf32> to vector<32x16x128xf32>
    %c0_10 = arith.constant 0 : index
    %c0_11 = arith.constant 0 : index
    %c0_12 = arith.constant 0 : index
    %31 = vector.load %arg4[%c0_10, %c0_11, %c0_12] : memref<32x16x128xf32, #tpu.memory_space<vmem>>, vector<32x16x128xf32>
    tpu.vector_store %arg4[%c0_10, %c0_11, %c0_12], %30 {strides = array<i32>} : memref<32x16x128xf32, #tpu.memory_space<vmem>>, vector<32x16x128xf32>,
    return
  }
  func.func @transform_0(%arg0: i32) -> (i32, i32, i32) {
    %c0_i32 = arith.constant 0 : i32
    %c0_i32_0 = arith.constant 0 : i32
    %c0_i32_1 = arith.constant 0 : i32
    return %arg0, %c0_i32, %c0_i32_0 : i32, i32, i32
  }
  func.func @transform_1(%arg0: i32) -> (i32, i32, i32) {
    %c0_i32 = arith.constant 0 : i32
    %c0_i32_0 = arith.constant 0 : i32
    %c0_i32_1 = arith.constant 0 : i32
    return %arg0, %c0_i32, %c0_i32_0 : i32, i32, i32
  }
  func.func @transform_2(%arg0: i32) -> (i32, i32) {
    %c0_i32 = arith.constant 0 : i32
    %c0_i32_0 = arith.constant 0 : i32
    %c0_i32_1 = arith.constant 0 : i32
    return %c0_i32, %c0_i32_0 : i32, i32
  }
  func.func @transform_3(%arg0: i32) -> (i32, i32, i32) {
    %c0_i32 = arith.constant 0 : i32
    %c0_i32_0 = arith.constant 0 : i32
    %c0_i32_1 = arith.constant 0 : i32
    return %arg0, %c0_i32, %c0_i32_0 : i32, i32, i32
  }
}

</mosaic_0001>

<llo_original>
// kernel: tpu_custom_call.1
$region0: #{tpu_custom_call.1}
  #allocation0 [shape = 'u32[]', space=smem, size = 0x4, offset = 0x4, fixed_abs, tag = 'smem constant byte address 0x4 - core index']
  #allocation1 [shape = 'u32[144,128]{1,0:T(1,128)}', space=vmem, size = 0x12000, scoped, tag = 'internal scratch']
  %s0 = inlined_call_operand.vmem [shape: f32[64,18,68], index: 0, kind: input, shape index: {}]
  %s1 = inlined_call_operand.vmem [shape: f32[64,16,64], index: 1, kind: input, shape index: {}]
  %s2 = inlined_call_operand.vmem [shape: bf16[256,256], index: 2, kind: input, shape index: {}]
  %s3 = inlined_call_operand.hbm [shape: f32[64,16,128], index: 3, kind: output, shape index: {}]
  %s4 = sld [smem:[#allocation0]]
  $region45: #{tpu_custom_call.1} parent=0
    _
  %s6 = ssub.s32 1, %s4
  %s7 = scalar_select 0, %s6, %s4
  $region1: #{tpu_custom_call.1} parent=0
    #allocation2 [shape = 'u8[524288]{0}', space=vmem, size = 0x80000, scoped, tag = 'output window, operand 0']
    #allocation3 [shape = 's32[2]{0}', space=sflag, size = 0x8, scoped, tag = 'scoped memory for tpu_custom_call.1']
    %8 = vsyncpa [#allocation3], 0
    %s9 = scalar_lea.sflag [#allocation3], 1
    %10 = vsyncpa %s9, 0
    loop: start=0, step=1, limit=4
    $region2: #{tpu_custom_call.1} parent=1 // loop_pre_header
      _
    $region3: #{tpu_custom_call.1} parent=1 // loop_header
      %s12 = sphi 0, %s16
      %p13 = scmp.ge.s32.totalorder %s12, 4
      %s22 = sphi 0, %s24
      %s25 = sphi 0, %s22
      %s26 = sphi 0, %s25
      %s42 = sphi 0, %s26
      %s48 = sphi 0, %s50
      %s51 = sphi 0, %s48
      %s52 = sphi 0, %s51
      %s68 = sphi 0, %s52
      %s72 = sphi 0, %s72
      %s74 = sphi 0, %s72
      %s75 = sphi 0, %s74
      %s89 = sphi 0, %s75
      %s95 = sphi 0, %s97
      %s98 = sphi 0, %s95
      %s99 = sphi 0, %s98
      %s115 = sphi 0, %s99
    $region4: #{tpu_custom_call.1} parent=1 // loop_header_branch
      %15 = sbr.rel (%p13) target = $region8
    $region5: #{tpu_custom_call.1} parent=1 // loop_body
      %s17 = ssub.s32 %s12, 1
      %s18 = ssub.s32 %s12, 2
      %s19 = sadd.s32 %s12, 1
      %s20 = ssub.s32 %s12, %s19
      %p21 = scmp.eq.s32.totalorder %s20, 0
      %s23 = sadd.s32 %s22, 1
      %s24 = scalar_select %p21, %s22, %s23
      %p27 = pneg %p21
      %p28 = scmp.eq.s32.totalorder %s12, 1
      %p29 = por %p27, %p28
      %p30 = scmp.ne.s32.totalorder %s22, %s25
      %p31 = scmp.eq.s32.totalorder %s12, 0
      %p32 = por %p30, %p31
      %p33 = scmp.ne.s32.totalorder %s22, %s25
      %p34 = scmp.eq.s32.totalorder %s17, 1
      %p35 = por %p33, %p34
      %p36 = scmp.ne.s32.totalorder %s25, %s26
      %p37 = scmp.eq.s32.totalorder %s17, 0
      %p38 = por %p36, %p37
      %p39 = scmp.ne.s32.totalorder %s25, %s26
      %p40 = scmp.eq.s32.totalorder %s18, 1
      %p41 = por %p39, %p40
      %p43 = scmp.ne.s32.totalorder %s26, %s42
      %p44 = scmp.eq.s32.totalorder %s18, 0
      %p45 = por %p43, %p44
      %s46 = ssub.s32 %s12, %s19
      %p47 = scmp.eq.s32.totalorder %s46, 0
      %s49 = sadd.s32 %s48, 1
      %s50 = scalar_select %p47, %s48, %s49
      %p53 = pneg %p47
      %p54 = scmp.eq.s32.totalorder %s12, 1
      %p55 = por %p53, %p54
      %p56 = scmp.ne.s32.totalorder %s48, %s51
      %p57 = scmp.eq.s32.totalorder %s12, 0
      %p58 = por %p56, %p57
      %p59 = scmp.ne.s32.totalorder %s48, %s51
      %p60 = scmp.eq.s32.totalorder %s17, 1
      %p61 = por %p59, %p60
      %p62 = scmp.ne.s32.totalorder %s51, %s52
      %p63 = scmp.eq.s32.totalorder %s17, 0
      %p64 = por %p62, %p63
      %p65 = scmp.ne.s32.totalorder %s51, %s52
      %p66 = scmp.eq.s32.totalorder %s18, 1
      %p67 = por %p65, %p66
      %p69 = scmp.ne.s32.totalorder %s52, %s68
      %p70 = scmp.eq.s32.totalorder %s18, 0
      %p71 = por %p69, %p70
      %s73 = sadd.s32 %s72, 1
      %p76 = scmp.eq.s32.totalorder %s12, 1
      %p77 = scmp.ne.s32.totalorder %s72, %s74
      %p78 = scmp.eq.s32.totalorder %s12, 0
      %p79 = por %p77, %p78
      %p80 = scmp.ne.s32.totalorder %s72, %s74
      %p81 = scmp.eq.s32.totalorder %s17, 1
      %p82 = por %p80, %p81
      %p83 = scmp.ne.s32.totalorder %s74, %s75
      %p84 = scmp.eq.s32.totalorder %s17, 0
      %p85 = por %p83, %p84
      %p86 = scmp.ne.s32.totalorder %s74, %s75
      %p87 = scmp.eq.s32.totalorder %s18, 1
      %p88 = por %p86, %p87
      %p90 = scmp.ne.s32.totalorder %s75, %s89
      %p91 = scmp.eq.s32.totalorder %s18, 0
      %p92 = por %p90, %p91
      %s93 = ssub.s32 %s12, %s19
      %p94 = scmp.eq.s32.totalorder %s93, 0
      %s96 = sadd.s32 %s95, 1
      %s97 = scalar_select %p94, %s95, %s96
      %p100 = pneg %p94
      %p101 = scmp.eq.s32.totalorder %s12, 1
      %p102 = por %p100, %p101
      %p103 = scmp.ne.s32.totalorder %s95, %s98
      %p104 = scmp.eq.s32.totalorder %s12, 0
      %p105 = por %p103, %p104
      %p106 = scmp.ne.s32.totalorder %s95, %s98
      %p107 = scmp.eq.s32.totalorder %s17, 1
      %p108 = por %p106, %p107
      %p109 = scmp.ne.s32.totalorder %s98, %s99
      %p110 = scmp.eq.s32.totalorder %s17, 0
      %p111 = por %p109, %p110
      %p112 = scmp.ne.s32.totalorder %s98, %s99
      %p113 = scmp.eq.s32.totalorder %s18, 1
      %p114 = por %p112, %p113
      %p116 = scmp.ne.s32.totalorder %s99, %s115
      %p117 = scmp.eq.s32.totalorder %s18, 0
      %p118 = por %p116, %p117
      %p119 = scmp.le.s32.totalorder 1, %s12
      %p120 = scmp.lt.s32.totalorder %s12, 3
      %p121 = pnand %p119, %p120
      %p122 = pneg %p121
      // Predicated region
      $region9: #{tpu_custom_call.1} parent=5 // pred_check
        _
      $region10: #{tpu_custom_call.1} parent=5 // pred_check_branch
        %124 = sbr.rel (%p121) target = $region12
      $region11: #{tpu_custom_call.1} parent=5 // pred_region
        %s125 = ssub.s32 %s12, 1
        // Predicated region
        $region13: #{tpu_custom_call.1} parent=11 // pred_check
          %p126 = pneg %p85
        $region14: #{tpu_custom_call.1} parent=11 // pred_check_branch
          %128 = sbr.rel (%p126) target = $region16
        $region15: #{tpu_custom_call.1} parent=11 // pred_region
          _
        $region16: #{tpu_custom_call.1} parent=11 // pred_fallthru
          _
      $region12: #{tpu_custom_call.1} parent=5 // pred_fallthru
        _
      %p129 = scmp.lt.s32.totalorder %s12, 2
      // Predicated region
      $region17: #{tpu_custom_call.1} parent=5 // pred_check
        %p130 = pneg %p129
      $region18: #{tpu_custom_call.1} parent=5 // pred_check_branch
        %132 = sbr.rel (%p130) target = $region20
      $region19: #{tpu_custom_call.1} parent=5 // pred_region
        // Predicated region
        $region21: #{tpu_custom_call.1} parent=19 // pred_check
          %p133 = pneg %p32
        $region22: #{tpu_custom_call.1} parent=19 // pred_check_branch
          %135 = sbr.rel (%p133) target = $region24
        $region23: #{tpu_custom_call.1} parent=19 // pred_region
          %s136 = smul.u32 32, %s12
          %p137 = scmp.lt.s32.totalorder %s136, 63
          %s138 = scalar_select %p137, %s136, 63
          %s139 = smul.addr %s138, 3
          %s140 = smul.addr %s139, 8
          %s141 = scalar_lea.vmem %s0, %s140
          %s142 = smul.u32 32, %s12
        $region24: #{tpu_custom_call.1} parent=19 // pred_fallthru
          _
        // Predicated region
        $region25: #{tpu_custom_call.1} parent=19 // pred_check
          %p143 = pneg %p58
        $region26: #{tpu_custom_call.1} parent=19 // pred_check_branch
          %145 = sbr.rel (%p143) target = $region28
        $region27: #{tpu_custom_call.1} parent=19 // pred_region
          %s146 = smul.u32 32, %s12
          %p147 = scmp.lt.s32.totalorder %s146, 63
          %s148 = scalar_select %p147, %s146, 63
          %s149 = smul.addr %s148, 2
          %s150 = smul.addr %s149, 8
          %s151 = scalar_lea.vmem %s1, %s150
          %s152 = smul.u32 32, %s12
        $region28: #{tpu_custom_call.1} parent=19 // pred_fallthru
          _
      $region20: #{tpu_custom_call.1} parent=5 // pred_fallthru
        _
      %p153 = scmp.le.s32.totalorder 1, %s12
      %p154 = scmp.lt.s32.totalorder %s12, 3
      %p155 = pnand %p153, %p154
      %p156 = pneg %p155
      // Predicated region
      $region29: #{tpu_custom_call.1} parent=5 // pred_check
        _
      $region30: #{tpu_custom_call.1} parent=5 // pred_check_branch
        %158 = sbr.rel (%p155) target = $region32
      $region31: #{tpu_custom_call.1} parent=5 // pred_region
        %s159 = ssub.s32 %s12, 1
        %s160 = smul.u32 32, %s17
        %p161 = scmp.lt.s32.totalorder %s160, 63
        %s162 = scalar_select %p161, %s160, 63
        %s163 = smul.addr %s162, 3
        %s164 = smul.addr %s163, 8
        %s165 = scalar_lea.vmem %s0, %s164
        %p166 = pneg %p38
        %p167 = pneg %p35
        %s168 = smul.u32 32, %s17
        %p169 = scmp.lt.s32.totalorder %s168, 63
        %s170 = scalar_select %p169, %s168, 63
        %s171 = smul.addr %s170, 2
        %s172 = smul.addr %s171, 8
        %s173 = scalar_lea.vmem %s1, %s172
        %p174 = pneg %p64
        %p175 = pneg %p61
        %p176 = pneg %p85
        %p177 = pneg %p82
        %p178 = pneg %p111
        %p179 = pneg %p108
        %s180 = sand.u32 %s98, 1
        %s181 = scalar_lea.sflag [#allocation3], %s180
        %s182 = sand.u32 %s98, 1
        %s183 = smul.addr %s182, 512
        %s184 = scalar_lea.vmem [#allocation2], %s183
        %s185 = smul.u32 32, %s17
        %p186 = scmp.lt.s32.totalorder %s185, 63
        %s187 = scalar_select %p186, %s185, 63
        %s188 = smul.addr %s187, 3
        %s189 = smul.addr %s188, 8
        %s190 = scalar_lea.vmem %s0, %s189
        %s191 = smul.u32 32, %s17
        %s192 = smul.u32 32, %s17
        %p193 = scmp.lt.s32.totalorder %s192, 63
        %s194 = scalar_select %p193, %s192, 63
        %s195 = smul.addr %s194, 2
        %s196 = smul.addr %s195, 8
        %s197 = scalar_lea.vmem %s1, %s196
        %s198 = smul.u32 32, %s17
        %s199 = smul.u32 32, %s17
        %v200 = vld [vmem:[%s190] sm:$0xff]
        %v201 = vld [vmem:[%s190 + $0x8] sm:$0xff]
        %v202 = vld [vmem:[%s190 + $0x10] sm:$0x3]
        %v203 = vld [vmem:[%s190 + $0x18] sm:$0xff]
        %v204 = vld [vmem:[%s190 + $0x20] sm:$0xff]
        %v205 = vld [vmem:[%s190 + $0x28] sm:$0x3]
        %v206 = vld [vmem:[%s190 + $0x30] sm:$0xff]
        %v207 = vld [vmem:[%s190 + $0x38] sm:$0xff]
        %v208 = vld [vmem:[%s190 + $0x40] sm:$0x3]
        %v209 = vld [vmem:[%s190 + $0x48] sm:$0xff]
        %v210 = vld [vmem:[%s190 + $0x50] sm:$0xff]
        %v211 = vld [vmem:[%s190 + $0x58] sm:$0x3]
        %v212 = vld [vmem:[%s190 + $0x60] sm:$0xff]
        %v213 = vld [vmem:[%s190 + $0x68] sm:$0xff]
        %v214 = vld [vmem:[%s190 + $0x70] sm:$0x3]
        %v215 = vld [vmem:[%s190 + $0x78] sm:$0xff]
        %v216 = vld [vmem:[%s190 + $0x80] sm:$0xff]
        %v217 = vld [vmem:[%s190 + $0x88] sm:$0x3]
        %v218 = vld [vmem:[%s190 + $0x90] sm:$0xff]
        %v219 = vld [vmem:[%s190 + $0x98] sm:$0xff]
        %v220 = vld [vmem:[%s190 + $0xa0] sm:$0x3]
        %v221 = vld [vmem:[%s190 + $0xa8] sm:$0xff]
        %v222 = vld [vmem:[%s190 + $0xb0] sm:$0xff]
        %v223 = vld [vmem:[%s190 + $0xb8] sm:$0x3]
        %v224 = vld [vmem:[%s190 + $0xc0] sm:$0xff]
        %v225 = vld [vmem:[%s190 + $0xc8] sm:$0xff]
        %v226 = vld [vmem:[%s190 + $0xd0] sm:$0x3]
        %v227 = vld [vmem:[%s190 + $0xd8] sm:$0xff]
        %v228 = vld [vmem:[%s190 + $0xe0] sm:$0xff]
        %v229 = vld [vmem:[%s190 + $0xe8] sm:$0x3]
        %v230 = vld [vmem:[%s190 + $0xf0] sm:$0xff]
        %v231 = vld [vmem:[%s190 + $0xf8] sm:$0xff]
        %v232 = vld [vmem:[%s190 + $0x100] sm:$0x3]
        %v233 = vld [vmem:[%s190 + $0x108] sm:$0xff]
        %v234 = vld [vmem:[%s190 + $0x110] sm:$0xff]
        %v235 = vld [vmem:[%s190 + $0x118] sm:$0x3]
        %v236 = vld [vmem:[%s190 + $0x120] sm:$0xff]
        %v237 = vld [vmem:[%s190 + $0x128] sm:$0xff]
        %v238 = vld [vmem:[%s190 + $0x130] sm:$0x3]
        %v239 = vld [vmem:[%s190 + $0x138] sm:$0xff]
        %v240 = vld [vmem:[%s190 + $0x140] sm:$0xff]
        %v241 = vld [vmem:[%s190 + $0x148] sm:$0x3]
        %v242 = vld [vmem:[%s190 + $0x150] sm:$0xff]
        %v243 = vld [vmem:[%s190 + $0x158] sm:$0xff]
        %v244 = vld [vmem:[%s190 + $0x160] sm:$0x3]
        %v245 = vld [vmem:[%s190 + $0x168] sm:$0xff]
        %v246 = vld [vmem:[%s190 + $0x170] sm:$0xff]
        %v247 = vld [vmem:[%s190 + $0x178] sm:$0x3]
        %v248 = vld [vmem:[%s190 + $0x180] sm:$0xff]
        %v249 = vld [vmem:[%s190 + $0x188] sm:$0xff]
        %v250 = vld [vmem:[%s190 + $0x190] sm:$0x3]
        %v251 = vld [vmem:[%s190 + $0x198] sm:$0xff]
        %v252 = vld [vmem:[%s190 + $0x1a0] sm:$0xff]
        %v253 = vld [vmem:[%s190 + $0x1a8] sm:$0x3]
        %v254 = vld [vmem:[%s190 + $0x1b0] sm:$0xff]
        %v255 = vld [vmem:[%s190 + $0x1b8] sm:$0xff]
        %v256 = vld [vmem:[%s190 + $0x1c0] sm:$0x3]
        %v257 = vld [vmem:[%s190 + $0x1c8] sm:$0xff]
        %v258 = vld [vmem:[%s190 + $0x1d0] sm:$0xff]
        %v259 = vld [vmem:[%s190 + $0x1d8] sm:$0x3]
        %v260 = vld [vmem:[%s190 + $0x1e0] sm:$0xff]
        %v261 = vld [vmem:[%s190 + $0x1e8] sm:$0xff]
        %v262 = vld [vmem:[%s190 + $0x1f0] sm:$0x3]
        %v263 = vld [vmem:[%s190 + $0x1f8] sm:$0xff]
        %v264 = vld [vmem:[%s190 + $0x200] sm:$0xff]
        %v265 = vld [vmem:[%s190 + $0x208] sm:$0x3]
        %v266 = vld [vmem:[%s190 + $0x210] sm:$0xff]
        %v267 = vld [vmem:[%s190 + $0x218] sm:$0xff]
        %v268 = vld [vmem:[%s190 + $0x220] sm:$0x3]
        %v269 = vld [vmem:[%s190 + $0x228] sm:$0xff]
        %v270 = vld [vmem:[%s190 + $0x230] sm:$0xff]
        %v271 = vld [vmem:[%s190 + $0x238] sm:$0x3]
        %v272 = vld [vmem:[%s190 + $0x240] sm:$0xff]
        %v273 = vld [vmem:[%s190 + $0x248] sm:$0xff]
        %v274 = vld [vmem:[%s190 + $0x250] sm:$0x3]
        %v275 = vld [vmem:[%s190 + $0x258] sm:$0xff]
        %v276 = vld [vmem:[%s190 + $0x260] sm:$0xff]
        %v277 = vld [vmem:[%s190 + $0x268] sm:$0x3]
        %v278 = vld [vmem:[%s190 + $0x270] sm:$0xff]
        %v279 = vld [vmem:[%s190 + $0x278] sm:$0xff]
        %v280 = vld [vmem:[%s190 + $0x280] sm:$0x3]
        %v281 = vld [vmem:[%s190 + $0x288] sm:$0xff]
        %v282 = vld [vmem:[%s190 + $0x290] sm:$0xff]
        %v283 = vld [vmem:[%s190 + $0x298] sm:$0x3]
        %v284 = vld [vmem:[%s190 + $0x2a0] sm:$0xff]
        %v285 = vld [vmem:[%s190 + $0x2a8] sm:$0xff]
        %v286 = vld [vmem:[%s190 + $0x2b0] sm:$0x3]
        %v287 = vld [vmem:[%s190 + $0x2b8] sm:$0xff]
        %v288 = vld [vmem:[%s190 + $0x2c0] sm:$0xff]
        %v289 = vld [vmem:[%s190 + $0x2c8] sm:$0x3]
        %v290 = vld [vmem:[%s190 + $0x2d0] sm:$0xff]
        %v291 = vld [vmem:[%s190 + $0x2d8] sm:$0xff]
        %v292 = vld [vmem:[%s190 + $0x2e0] sm:$0x3]
        %v293 = vld [vmem:[%s190 + $0x2e8] sm:$0xff]
        %v294 = vld [vmem:[%s190 + $0x2f0] sm:$0xff]
        %v295 = vld [vmem:[%s190 + $0x2f8] sm:$0x3]
        %vm392 = vcmask 1046528
        %v393 = vrot.slane %v200, 1
        %v394 = vrot.slane %v201, 1
        %v395 = vsel %vm392, %v393, %v394
        %v396 = vrot.slane %v202, 1
        %v397 = vsel %vm392, %v394, %v396
        %v398 = vrot.slane %v203, 1
        %v399 = vrot.slane %v204, 1
        %v400 = vsel %vm392, %v398, %v399
        %v401 = vrot.slane %v205, 1
        %v402 = vsel %vm392, %v399, %v401
        %v403 = vrot.slane %v206, 1
        %v404 = vrot.slane %v207, 1
        %v405 = vsel %vm392, %v403, %v404
        %v406 = vrot.slane %v208, 1
        %v407 = vsel %vm392, %v404, %v406
        %v408 = vrot.slane %v209, 1
        %v409 = vrot.slane %v210, 1
        %v410 = vsel %vm392, %v408, %v409
        %v411 = vrot.slane %v211, 1
        %v412 = vsel %vm392, %v409, %v411
        %v413 = vrot.slane %v212, 1
        %v414 = vrot.slane %v213, 1
        %v415 = vsel %vm392, %v413, %v414
        %v416 = vrot.slane %v214, 1
        %v417 = vsel %vm392, %v414, %v416
        %v418 = vrot.slane %v215, 1
        %v419 = vrot.slane %v216, 1
        %v420 = vsel %vm392, %v418, %v419
        %v421 = vrot.slane %v217, 1
        %v422 = vsel %vm392, %v419, %v421
        %v423 = vrot.slane %v218, 1
        %v424 = vrot.slane %v219, 1
        %v425 = vsel %vm392, %v423, %v424
        %v426 = vrot.slane %v220, 1
        %v427 = vsel %vm392, %v424, %v426
        %v428 = vrot.slane %v221, 1
        %v429 = vrot.slane %v222, 1
        %v430 = vsel %vm392, %v428, %v429
        %v431 = vrot.slane %v223, 1
        %v432 = vsel %vm392, %v429, %v431
        %v433 = vrot.slane %v224, 1
        %v434 = vrot.slane %v225, 1
        %v435 = vsel %vm392, %v433, %v434
        %v436 = vrot.slane %v226, 1
        %v437 = vsel %vm392, %v434, %v436
        %v438 = vrot.slane %v227, 1
        %v439 = vrot.slane %v228, 1
        %v440 = vsel %vm392, %v438, %v439
        %v441 = vrot.slane %v229, 1
        %v442 = vsel %vm392, %v439, %v441
        %v443 = vrot.slane %v230, 1
        %v444 = vrot.slane %v231, 1
        %v445 = vsel %vm392, %v443, %v444
        %v446 = vrot.slane %v232, 1
        %v447 = vsel %vm392, %v444, %v446
        %v448 = vrot.slane %v233, 1
        %v449 = vrot.slane %v234, 1
        %v450 = vsel %vm392, %v448, %v449
        %v451 = vrot.slane %v235, 1
        %v452 = vsel %vm392, %v449, %v451
        %v453 = vrot.slane %v236, 1
        %v454 = vrot.slane %v237, 1
        %v455 = vsel %vm392, %v453, %v454
        %v456 = vrot.slane %v238, 1
        %v457 = vsel %vm392, %v454, %v456
        %v458 = vrot.slane %v239, 1
        %v459 = vrot.slane %v240, 1
        %v460 = vsel %vm392, %v458, %v459
        %v461 = vrot.slane %v241, 1
        %v462 = vsel %vm392, %v459, %v461
        %v463 = vrot.slane %v242, 1
        %v464 = vrot.slane %v243, 1
        %v465 = vsel %vm392, %v463, %v464
        %v466 = vrot.slane %v244, 1
        %v467 = vsel %vm392, %v464, %v466
        %v468 = vrot.slane %v245, 1
        %v469 = vrot.slane %v246, 1
        %v470 = vsel %vm392, %v468, %v469
        %v471 = vrot.slane %v247, 1
        %v472 = vsel %vm392, %v469, %v471
        %v473 = vrot.slane %v248, 1
        %v474 = vrot.slane %v249, 1
        %v475 = vsel %vm392, %v473, %v474
        %v476 = vrot.slane %v250, 1
        %v477 = vsel %vm392, %v474, %v476
        %v478 = vrot.slane %v251, 1
        %v479 = vrot.slane %v252, 1
        %v480 = vsel %vm392, %v478, %v479
        %v481 = vrot.slane %v253, 1
        %v482 = vsel %vm392, %v479, %v481
        %v483 = vrot.slane %v254, 1
        %v484 = vrot.slane %v255, 1
        %v485 = vsel %vm392, %v483, %v484
        %v486 = vrot.slane %v256, 1
        %v487 = vsel %vm392, %v484, %v486
        %v488 = vrot.slane %v257, 1
        %v489 = vrot.slane %v258, 1
        %v490 = vsel %vm392, %v488, %v489
        %v491 = vrot.slane %v259, 1
        %v492 = vsel %vm392, %v489, %v491
        %v493 = vrot.slane %v260, 1
        %v494 = vrot.slane %v261, 1
        %v495 = vsel %vm392, %v493, %v494
        %v496 = vrot.slane %v262, 1
        %v497 = vsel %vm392, %v494, %v496
        %v498 = vrot.slane %v263, 1
        %v499 = vrot.slane %v264, 1
        %v500 = vsel %vm392, %v498, %v499
        %v501 = vrot.slane %v265, 1
        %v502 = vsel %vm392, %v499, %v501
        %v503 = vrot.slane %v266, 1
        %v504 = vrot.slane %v267, 1
        %v505 = vsel %vm392, %v503, %v504
        %v506 = vrot.slane %v268, 1
        %v507 = vsel %vm392, %v504, %v506
        %v508 = vrot.slane %v269, 1
        %v509 = vrot.slane %v270, 1
        %v510 = vsel %vm392, %v508, %v509
        %v511 = vrot.slane %v271, 1
        %v512 = vsel %vm392, %v509, %v511
        %v513 = vrot.slane %v272, 1
        %v514 = vrot.slane %v273, 1
        %v515 = vsel %vm392, %v513, %v514
        %v516 = vrot.slane %v274, 1
        %v517 = vsel %vm392, %v514, %v516
        %v518 = vrot.slane %v275, 1
        %v519 = vrot.slane %v276, 1
        %v520 = vsel %vm392, %v518, %v519
        %v521 = vrot.slane %v277, 1
        %v522 = vsel %vm392, %v519, %v521
        %v523 = vrot.slane %v278, 1
        %v524 = vrot.slane %v279, 1
        %v525 = vsel %vm392, %v523, %v524
        %v526 = vrot.slane %v280, 1
        %v527 = vsel %vm392, %v524, %v526
        %v528 = vrot.slane %v281, 1
        %v529 = vrot.slane %v282, 1
        %v530 = vsel %vm392, %v528, %v529
        %v531 = vrot.slane %v283, 1
        %v532 = vsel %vm392, %v529, %v531
        %v533 = vrot.slane %v284, 1
        %v534 = vrot.slane %v285, 1
        %v535 = vsel %vm392, %v533, %v534
        %v536 = vrot.slane %v286, 1
        %v537 = vsel %vm392, %v534, %v536
        %v538 = vrot.slane %v287, 1
        %v539 = vrot.slane %v288, 1
        %v540 = vsel %vm392, %v538, %v539
        %v541 = vrot.slane %v289, 1
        %v542 = vsel %vm392, %v539, %v541
        %v543 = vrot.slane %v290, 1
        %v544 = vrot.slane %v291, 1
        %v545 = vsel %vm392, %v543, %v544
        %v546 = vrot.slane %v292, 1
        %v547 = vsel %vm392, %v544, %v546
        %v548 = vrot.slane %v293, 1
        %v549 = vrot.slane %v294, 1
        %v550 = vsel %vm392, %v548, %v549
        %v551 = vrot.slane %v295, 1
        %v552 = vsel %vm392, %v549, %v551
        %553 = vrot.lane.b32.xlu0 %v395, 68
        %v554 = vpop.permute.xlu0 %553
        %555 = vrot.lane.b32.xlu0 %v397, 68
        %v556 = vpop.permute.xlu0 %555
        %557 = vrot.lane.b32.xlu0 %v400, 68
        %v558 = vpop.permute.xlu0 %557
        %559 = vrot.lane.b32.xlu0 %v402, 68
        %v560 = vpop.permute.xlu0 %559
        %561 = vrot.lane.b32.xlu0 %v405, 68
        %v562 = vpop.permute.xlu0 %561
        %563 = vrot.lane.b32.xlu0 %v407, 68
        %v564 = vpop.permute.xlu0 %563
        %565 = vrot.lane.b32.xlu0 %v410, 68
        %v566 = vpop.permute.xlu0 %565
        %567 = vrot.lane.b32.xlu0 %v412, 68
        %v568 = vpop.permute.xlu0 %567
        %569 = vrot.lane.b32.xlu0 %v415, 68
        %v570 = vpop.permute.xlu0 %569
        %571 = vrot.lane.b32.xlu0 %v417, 68
        %v572 = vpop.permute.xlu0 %571
        %573 = vrot.lane.b32.xlu0 %v420, 68
        %v574 = vpop.permute.xlu0 %573
        %575 = vrot.lane.b32.xlu0 %v422, 68
        %v576 = vpop.permute.xlu0 %575
        %577 = vrot.lane.b32.xlu0 %v425, 68
        %v578 = vpop.permute.xlu0 %577
        %579 = vrot.lane.b32.xlu0 %v427, 68
        %v580 = vpop.permute.xlu0 %579
        %581 = vrot.lane.b32.xlu0 %v430, 68
        %v582 = vpop.permute.xlu0 %581
        %583 = vrot.lane.b32.xlu0 %v432, 68
        %v584 = vpop.permute.xlu0 %583
        %585 = vrot.lane.b32.xlu0 %v435, 68
        %v586 = vpop.permute.xlu0 %585
        %587 = vrot.lane.b32.xlu0 %v437, 68
        %v588 = vpop.permute.xlu0 %587
        %589 = vrot.lane.b32.xlu0 %v440, 68
        %v590 = vpop.permute.xlu0 %589
        %591 = vrot.lane.b32.xlu0 %v442, 68
        %v592 = vpop.permute.xlu0 %591
        %593 = vrot.lane.b32.xlu0 %v445, 68
        %v594 = vpop.permute.xlu0 %593
        %595 = vrot.lane.b32.xlu0 %v447, 68
        %v596 = vpop.permute.xlu0 %595
        %597 = vrot.lane.b32.xlu0 %v450, 68
        %v598 = vpop.permute.xlu0 %597
        %599 = vrot.lane.b32.xlu0 %v452, 68
        %v600 = vpop.permute.xlu0 %599
        %601 = vrot.lane.b32.xlu0 %v455, 68
        %v602 = vpop.permute.xlu0 %601
        %603 = vrot.lane.b32.xlu0 %v457, 68
        %v604 = vpop.permute.xlu0 %603
        %605 = vrot.lane.b32.xlu0 %v460, 68
        %v606 = vpop.permute.xlu0 %605
        %607 = vrot.lane.b32.xlu0 %v462, 68
        %v608 = vpop.permute.xlu0 %607
        %609 = vrot.lane.b32.xlu0 %v465, 68
        %v610 = vpop.permute.xlu0 %609
        %611 = vrot.lane.b32.xlu0 %v467, 68
        %v612 = vpop.permute.xlu0 %611
        %613 = vrot.lane.b32.xlu0 %v470, 68
        %v614 = vpop.permute.xlu0 %613
        %615 = vrot.lane.b32.xlu0 %v472, 68
        %v616 = vpop.permute.xlu0 %615
        %617 = vrot.lane.b32.xlu0 %v475, 68
        %v618 = vpop.permute.xlu0 %617
        %619 = vrot.lane.b32.xlu0 %v477, 68
        %v620 = vpop.permute.xlu0 %619
        %621 = vrot.lane.b32.xlu0 %v480, 68
        %v622 = vpop.permute.xlu0 %621
        %623 = vrot.lane.b32.xlu0 %v482, 68
        %v624 = vpop.permute.xlu0 %623
        %625 = vrot.lane.b32.xlu0 %v485, 68
        %v626 = vpop.permute.xlu0 %625
        %627 = vrot.lane.b32.xlu0 %v487, 68
        %v628 = vpop.permute.xlu0 %627
        %629 = vrot.lane.b32.xlu0 %v490, 68
        %v630 = vpop.permute.xlu0 %629
        %631 = vrot.lane.b32.xlu0 %v492, 68
        %v632 = vpop.permute.xlu0 %631
        %633 = vrot.lane.b32.xlu0 %v495, 68
        %v634 = vpop.permute.xlu0 %633
        %635 = vrot.lane.b32.xlu0 %v497, 68
        %v636 = vpop.permute.xlu0 %635
        %637 = vrot.lane.b32.xlu0 %v500, 68
        %v638 = vpop.permute.xlu0 %637
        %639 = vrot.lane.b32.xlu0 %v502, 68
        %v640 = vpop.permute.xlu0 %639
        %641 = vrot.lane.b32.xlu0 %v505, 68
        %v642 = vpop.permute.xlu0 %641
        %643 = vrot.lane.b32.xlu0 %v507, 68
        %v644 = vpop.permute.xlu0 %643
        %645 = vrot.lane.b32.xlu0 %v510, 68
        %v646 = vpop.permute.xlu0 %645
        %647 = vrot.lane.b32.xlu0 %v512, 68
        %v648 = vpop.permute.xlu0 %647
        %649 = vrot.lane.b32.xlu0 %v515, 68
        %v650 = vpop.permute.xlu0 %649
        %651 = vrot.lane.b32.xlu0 %v517, 68
        %v652 = vpop.permute.xlu0 %651
        %653 = vrot.lane.b32.xlu0 %v520, 68
        %v654 = vpop.permute.xlu0 %653
        %655 = vrot.lane.b32.xlu0 %v522, 68
        %v656 = vpop.permute.xlu0 %655
        %657 = vrot.lane.b32.xlu0 %v525, 68
        %v658 = vpop.permute.xlu0 %657
        %659 = vrot.lane.b32.xlu0 %v527, 68
        %v660 = vpop.permute.xlu0 %659
        %661 = vrot.lane.b32.xlu0 %v530, 68
        %v662 = vpop.permute.xlu0 %661
        %663 = vrot.lane.b32.xlu0 %v532, 68
        %v664 = vpop.permute.xlu0 %663
        %665 = vrot.lane.b32.xlu0 %v535, 68
        %v666 = vpop.permute.xlu0 %665
        %667 = vrot.lane.b32.xlu0 %v537, 68
        %v668 = vpop.permute.xlu0 %667
        %669 = vrot.lane.b32.xlu0 %v540, 68
        %v670 = vpop.permute.xlu0 %669
        %671 = vrot.lane.b32.xlu0 %v542, 68
        %v672 = vpop.permute.xlu0 %671
        %673 = vrot.lane.b32.xlu0 %v545, 68
        %v674 = vpop.permute.xlu0 %673
        %675 = vrot.lane.b32.xlu0 %v547, 68
        %v676 = vpop.permute.xlu0 %675
        %677 = vrot.lane.b32.xlu0 %v550, 68
        %v678 = vpop.permute.xlu0 %677
        %679 = vrot.lane.b32.xlu0 %v552, 68
        %v680 = vpop.permute.xlu0 %679
        %vm745 = vcmask 1045504
        %v746 = vrot.slane %v200, 2
        %v747 = vrot.slane %v201, 2
        %v748 = vsel %vm745, %v746, %v747
        %v749 = vrot.slane %v202, 2
        %v750 = vsel %vm745, %v747, %v749
        %v751 = vrot.slane %v203, 2
        %v752 = vrot.slane %v204, 2
        %v753 = vsel %vm745, %v751, %v752
        %v754 = vrot.slane %v205, 2
        %v755 = vsel %vm745, %v752, %v754
        %v756 = vrot.slane %v206, 2
        %v757 = vrot.slane %v207, 2
        %v758 = vsel %vm745, %v756, %v757
        %v759 = vrot.slane %v208, 2
        %v760 = vsel %vm745, %v757, %v759
        %v761 = vrot.slane %v209, 2
        %v762 = vrot.slane %v210, 2
        %v763 = vsel %vm745, %v761, %v762
        %v764 = vrot.slane %v211, 2
        %v765 = vsel %vm745, %v762, %v764
        %v766 = vrot.slane %v212, 2
        %v767 = vrot.slane %v213, 2
        %v768 = vsel %vm745, %v766, %v767
        %v769 = vrot.slane %v214, 2
        %v770 = vsel %vm745, %v767, %v769
        %v771 = vrot.slane %v215, 2
        %v772 = vrot.slane %v216, 2
        %v773 = vsel %vm745, %v771, %v772
        %v774 = vrot.slane %v217, 2
        %v775 = vsel %vm745, %v772, %v774
        %v776 = vrot.slane %v218, 2
        %v777 = vrot.slane %v219, 2
        %v778 = vsel %vm745, %v776, %v777
        %v779 = vrot.slane %v220, 2
        %v780 = vsel %vm745, %v777, %v779
        %v781 = vrot.slane %v221, 2
        %v782 = vrot.slane %v222, 2
        %v783 = vsel %vm745, %v781, %v782
        %v784 = vrot.slane %v223, 2
        %v785 = vsel %vm745, %v782, %v784
        %v786 = vrot.slane %v224, 2
        %v787 = vrot.slane %v225, 2
        %v788 = vsel %vm745, %v786, %v787
        %v789 = vrot.slane %v226, 2
        %v790 = vsel %vm745, %v787, %v789
        %v791 = vrot.slane %v227, 2
        %v792 = vrot.slane %v228, 2
        %v793 = vsel %vm745, %v791, %v792
        %v794 = vrot.slane %v229, 2
        %v795 = vsel %vm745, %v792, %v794
        %v796 = vrot.slane %v230, 2
        %v797 = vrot.slane %v231, 2
        %v798 = vsel %vm745, %v796, %v797
        %v799 = vrot.slane %v232, 2
        %v800 = vsel %vm745, %v797, %v799
        %v801 = vrot.slane %v233, 2
        %v802 = vrot.slane %v234, 2
        %v803 = vsel %vm745, %v801, %v802
        %v804 = vrot.slane %v235, 2
        %v805 = vsel %vm745, %v802, %v804
        %v806 = vrot.slane %v236, 2
        %v807 = vrot.slane %v237, 2
        %v808 = vsel %vm745, %v806, %v807
        %v809 = vrot.slane %v238, 2
        %v810 = vsel %vm745, %v807, %v809
        %v811 = vrot.slane %v239, 2
        %v812 = vrot.slane %v240, 2
        %v813 = vsel %vm745, %v811, %v812
        %v814 = vrot.slane %v241, 2
        %v815 = vsel %vm745, %v812, %v814
        %v816 = vrot.slane %v242, 2
        %v817 = vrot.slane %v243, 2
        %v818 = vsel %vm745, %v816, %v817
        %v819 = vrot.slane %v244, 2
        %v820 = vsel %vm745, %v817, %v819
        %v821 = vrot.slane %v245, 2
        %v822 = vrot.slane %v246, 2
        %v823 = vsel %vm745, %v821, %v822
        %v824 = vrot.slane %v247, 2
        %v825 = vsel %vm745, %v822, %v824
        %v826 = vrot.slane %v248, 2
        %v827 = vrot.slane %v249, 2
        %v828 = vsel %vm745, %v826, %v827
        %v829 = vrot.slane %v250, 2
        %v830 = vsel %vm745, %v827, %v829
        %v831 = vrot.slane %v251, 2
        %v832 = vrot.slane %v252, 2
        %v833 = vsel %vm745, %v831, %v832
        %v834 = vrot.slane %v253, 2
        %v835 = vsel %vm745, %v832, %v834
        %v836 = vrot.slane %v254, 2
        %v837 = vrot.slane %v255, 2
        %v838 = vsel %vm745, %v836, %v837
        %v839 = vrot.slane %v256, 2
        %v840 = vsel %vm745, %v837, %v839
        %v841 = vrot.slane %v257, 2
        %v842 = vrot.slane %v258, 2
        %v843 = vsel %vm745, %v841, %v842
        %v844 = vrot.slane %v259, 2
        %v845 = vsel %vm745, %v842, %v844
        %v846 = vrot.slane %v260, 2
        %v847 = vrot.slane %v261, 2
        %v848 = vsel %vm745, %v846, %v847
        %v849 = vrot.slane %v262, 2
        %v850 = vsel %vm745, %v847, %v849
        %v851 = vrot.slane %v263, 2
        %v852 = vrot.slane %v264, 2
        %v853 = vsel %vm745, %v851, %v852
        %v854 = vrot.slane %v265, 2
        %v855 = vsel %vm745, %v852, %v854
        %v856 = vrot.slane %v266, 2
        %v857 = vrot.slane %v267, 2
        %v858 = vsel %vm745, %v856, %v857
        %v859 = vrot.slane %v268, 2
        %v860 = vsel %vm745, %v857, %v859
        %v861 = vrot.slane %v269, 2
        %v862 = vrot.slane %v270, 2
        %v863 = vsel %vm745, %v861, %v862
        %v864 = vrot.slane %v271, 2
        %v865 = vsel %vm745, %v862, %v864
        %v866 = vrot.slane %v272, 2
        %v867 = vrot.slane %v273, 2
        %v868 = vsel %vm745, %v866, %v867
        %v869 = vrot.slane %v274, 2
        %v870 = vsel %vm745, %v867, %v869
        %v871 = vrot.slane %v275, 2
        %v872 = vrot.slane %v276, 2
        %v873 = vsel %vm745, %v871, %v872
        %v874 = vrot.slane %v277, 2
        %v875 = vsel %vm745, %v872, %v874
        %v876 = vrot.slane %v278, 2
        %v877 = vrot.slane %v279, 2
        %v878 = vsel %vm745, %v876, %v877
        %v879 = vrot.slane %v280, 2
        %v880 = vsel %vm745, %v877, %v879
        %v881 = vrot.slane %v281, 2
        %v882 = vrot.slane %v282, 2
        %v883 = vsel %vm745, %v881, %v882
        %v884 = vrot.slane %v283, 2
        %v885 = vsel %vm745, %v882, %v884
        %v886 = vrot.slane %v284, 2
        %v887 = vrot.slane %v285, 2
        %v888 = vsel %vm745, %v886, %v887
        %v889 = vrot.slane %v286, 2
        %v890 = vsel %vm745, %v887, %v889
        %v891 = vrot.slane %v287, 2
        %v892 = vrot.slane %v288, 2
        %v893 = vsel %vm745, %v891, %v892
        %v894 = vrot.slane %v289, 2
        %v895 = vsel %vm745, %v892, %v894
        %v896 = vrot.slane %v290, 2
        %v897 = vrot.slane %v291, 2
        %v898 = vsel %vm745, %v896, %v897
        %v899 = vrot.slane %v292, 2
        %v900 = vsel %vm745, %v897, %v899
        %v901 = vrot.slane %v293, 2
        %v902 = vrot.slane %v294, 2
        %v903 = vsel %vm745, %v901, %v902
        %v904 = vrot.slane %v295, 2
        %v905 = vsel %vm745, %v902, %v904
        %906 = vrot.lane.b32.xlu0 %v748, 8
        %v907 = vpop.permute.xlu0 %906
        %908 = vrot.lane.b32.xlu0 %v750, 8
        %v909 = vpop.permute.xlu0 %908
        %910 = vrot.lane.b32.xlu0 %v753, 8
        %v911 = vpop.permute.xlu0 %910
        %912 = vrot.lane.b32.xlu0 %v755, 8
        %v913 = vpop.permute.xlu0 %912
        %914 = vrot.lane.b32.xlu0 %v758, 8
        %v915 = vpop.permute.xlu0 %914
        %916 = vrot.lane.b32.xlu0 %v760, 8
        %v917 = vpop.permute.xlu0 %916
        %918 = vrot.lane.b32.xlu0 %v763, 8
        %v919 = vpop.permute.xlu0 %918
        %920 = vrot.lane.b32.xlu0 %v765, 8
        %v921 = vpop.permute.xlu0 %920
        %922 = vrot.lane.b32.xlu0 %v768, 8
        %v923 = vpop.permute.xlu0 %922
        %924 = vrot.lane.b32.xlu0 %v770, 8
        %v925 = vpop.permute.xlu0 %924
        %926 = vrot.lane.b32.xlu0 %v773, 8
        %v927 = vpop.permute.xlu0 %926
        %928 = vrot.lane.b32.xlu0 %v775, 8
        %v929 = vpop.permute.xlu0 %928
        %930 = vrot.lane.b32.xlu0 %v778, 8
        %v931 = vpop.permute.xlu0 %930
        %932 = vrot.lane.b32.xlu0 %v780, 8
        %v933 = vpop.permute.xlu0 %932
        %934 = vrot.lane.b32.xlu0 %v783, 8
        %v935 = vpop.permute.xlu0 %934
        %936 = vrot.lane.b32.xlu0 %v785, 8
        %v937 = vpop.permute.xlu0 %936
        %938 = vrot.lane.b32.xlu0 %v788, 8
        %v939 = vpop.permute.xlu0 %938
        %940 = vrot.lane.b32.xlu0 %v790, 8
        %v941 = vpop.permute.xlu0 %940
        %942 = vrot.lane.b32.xlu0 %v793, 8
        %v943 = vpop.permute.xlu0 %942
        %944 = vrot.lane.b32.xlu0 %v795, 8
        %v945 = vpop.permute.xlu0 %944
        %946 = vrot.lane.b32.xlu0 %v798, 8
        %v947 = vpop.permute.xlu0 %946
        %948 = vrot.lane.b32.xlu0 %v800, 8
        %v949 = vpop.permute.xlu0 %948
        %950 = vrot.lane.b32.xlu0 %v803, 8
        %v951 = vpop.permute.xlu0 %950
        %952 = vrot.lane.b32.xlu0 %v805, 8
        %v953 = vpop.permute.xlu0 %952
        %954 = vrot.lane.b32.xlu0 %v808, 8
        %v955 = vpop.permute.xlu0 %954
        %956 = vrot.lane.b32.xlu0 %v810, 8
        %v957 = vpop.permute.xlu0 %956
        %958 = vrot.lane.b32.xlu0 %v813, 8
        %v959 = vpop.permute.xlu0 %958
        %960 = vrot.lane.b32.xlu0 %v815, 8
        %v961 = vpop.permute.xlu0 %960
        %962 = vrot.lane.b32.xlu0 %v818, 8
        %v963 = vpop.permute.xlu0 %962
        %964 = vrot.lane.b32.xlu0 %v820, 8
        %v965 = vpop.permute.xlu0 %964
        %966 = vrot.lane.b32.xlu0 %v823, 8
        %v967 = vpop.permute.xlu0 %966
        %968 = vrot.lane.b32.xlu0 %v825, 8
        %v969 = vpop.permute.xlu0 %968
        %970 = vrot.lane.b32.xlu0 %v828, 8
        %v971 = vpop.permute.xlu0 %970
        %972 = vrot.lane.b32.xlu0 %v830, 8
        %v973 = vpop.permute.xlu0 %972
        %974 = vrot.lane.b32.xlu0 %v833, 8
        %v975 = vpop.permute.xlu0 %974
        %976 = vrot.lane.b32.xlu0 %v835, 8
        %v977 = vpop.permute.xlu0 %976
        %978 = vrot.lane.b32.xlu0 %v838, 8
        %v979 = vpop.permute.xlu0 %978
        %980 = vrot.lane.b32.xlu0 %v840, 8
        %v981 = vpop.permute.xlu0 %980
        %982 = vrot.lane.b32.xlu0 %v843, 8
        %v983 = vpop.permute.xlu0 %982
        %984 = vrot.lane.b32.xlu0 %v845, 8
        %v985 = vpop.permute.xlu0 %984
        %986 = vrot.lane.b32.xlu0 %v848, 8
        %v987 = vpop.permute.xlu0 %986
        %988 = vrot.lane.b32.xlu0 %v850, 8
        %v989 = vpop.permute.xlu0 %988
        %990 = vrot.lane.b32.xlu0 %v853, 8
        %v991 = vpop.permute.xlu0 %990
        %992 = vrot.lane.b32.xlu0 %v855, 8
        %v993 = vpop.permute.xlu0 %992
        %994 = vrot.lane.b32.xlu0 %v858, 8
        %v995 = vpop.permute.xlu0 %994
        %996 = vrot.lane.b32.xlu0 %v860, 8
        %v997 = vpop.permute.xlu0 %996
        %998 = vrot.lane.b32.xlu0 %v863, 8
        %v999 = vpop.permute.xlu0 %998
        %1000 = vrot.lane.b32.xlu0 %v865, 8
        %v1001 = vpop.permute.xlu0 %1000
        %1002 = vrot.lane.b32.xlu0 %v868, 8
        %v1003 = vpop.permute.xlu0 %1002
        %1004 = vrot.lane.b32.xlu0 %v870, 8
        %v1005 = vpop.permute.xlu0 %1004
        %1006 = vrot.lane.b32.xlu0 %v873, 8
        %v1007 = vpop.permute.xlu0 %1006
        %1008 = vrot.lane.b32.xlu0 %v875, 8
        %v1009 = vpop.permute.xlu0 %1008
        %1010 = vrot.lane.b32.xlu0 %v878, 8
        %v1011 = vpop.permute.xlu0 %1010
        %1012 = vrot.lane.b32.xlu0 %v880, 8
        %v1013 = vpop.permute.xlu0 %1012
        %1014 = vrot.lane.b32.xlu0 %v883, 8
        %v1015 = vpop.permute.xlu0 %1014
        %1016 = vrot.lane.b32.xlu0 %v885, 8
        %v1017 = vpop.permute.xlu0 %1016
        %1018 = vrot.lane.b32.xlu0 %v888, 8
        %v1019 = vpop.permute.xlu0 %1018
        %1020 = vrot.lane.b32.xlu0 %v890, 8
        %v1021 = vpop.permute.xlu0 %1020
        %1022 = vrot.lane.b32.xlu0 %v893, 8
        %v1023 = vpop.permute.xlu0 %1022
        %1024 = vrot.lane.b32.xlu0 %v895, 8
        %v1025 = vpop.permute.xlu0 %1024
        %1026 = vrot.lane.b32.xlu0 %v898, 8
        %v1027 = vpop.permute.xlu0 %1026
        %1028 = vrot.lane.b32.xlu0 %v900, 8
        %v1029 = vpop.permute.xlu0 %1028
        %1030 = vrot.lane.b32.xlu0 %v903, 8
        %v1031 = vpop.permute.xlu0 %1030
        %1032 = vrot.lane.b32.xlu0 %v905, 8
        %v1033 = vpop.permute.xlu0 %1032
        %vm1098 = vcmask 556032
        %v1099 = vsel %vm1098, %v200, %v554
        %v1100 = vsel %vm1098, %v201, %v556
        %v1101 = vsel %vm1098, %v203, %v558
        %v1102 = vsel %vm1098, %v204, %v560
        %v1103 = vsel %vm1098, %v206, %v562
        %v1104 = vsel %vm1098, %v207, %v564
        %v1105 = vsel %vm1098, %v209, %v566
        %v1106 = vsel %vm1098, %v210, %v568
        %v1107 = vsel %vm1098, %v212, %v570
        %v1108 = vsel %vm1098, %v213, %v572
        %v1109 = vsel %vm1098, %v215, %v574
        %v1110 = vsel %vm1098, %v216, %v576
        %v1111 = vsel %vm1098, %v218, %v578
        %v1112 = vsel %vm1098, %v219, %v580
        %v1113 = vsel %vm1098, %v221, %v582
        %v1114 = vsel %vm1098, %v222, %v584
        %v1115 = vsel %vm1098, %v224, %v586
        %v1116 = vsel %vm1098, %v225, %v588
        %v1117 = vsel %vm1098, %v227, %v590
        %v1118 = vsel %vm1098, %v228, %v592
        %v1119 = vsel %vm1098, %v230, %v594
        %v1120 = vsel %vm1098, %v231, %v596
        %v1121 = vsel %vm1098, %v233, %v598
        %v1122 = vsel %vm1098, %v234, %v600
        %v1123 = vsel %vm1098, %v236, %v602
        %v1124 = vsel %vm1098, %v237, %v604
        %v1125 = vsel %vm1098, %v239, %v606
        %v1126 = vsel %vm1098, %v240, %v608
        %v1127 = vsel %vm1098, %v242, %v610
        %v1128 = vsel %vm1098, %v243, %v612
        %v1129 = vsel %vm1098, %v245, %v614
        %v1130 = vsel %vm1098, %v246, %v616
        %v1131 = vsel %vm1098, %v248, %v618
        %v1132 = vsel %vm1098, %v249, %v620
        %v1133 = vsel %vm1098, %v251, %v622
        %v1134 = vsel %vm1098, %v252, %v624
        %v1135 = vsel %vm1098, %v254, %v626
        %v1136 = vsel %vm1098, %v255, %v628
        %v1137 = vsel %vm1098, %v257, %v630
        %v1138 = vsel %vm1098, %v258, %v632
        %v1139 = vsel %vm1098, %v260, %v634
        %v1140 = vsel %vm1098, %v261, %v636
        %v1141 = vsel %vm1098, %v263, %v638
        %v1142 = vsel %vm1098, %v264, %v640
        %v1143 = vsel %vm1098, %v266, %v642
        %v1144 = vsel %vm1098, %v267, %v644
        %v1145 = vsel %vm1098, %v269, %v646
        %v1146 = vsel %vm1098, %v270, %v648
        %v1147 = vsel %vm1098, %v272, %v650
        %v1148 = vsel %vm1098, %v273, %v652
        %v1149 = vsel %vm1098, %v275, %v654
        %v1150 = vsel %vm1098, %v276, %v656
        %v1151 = vsel %vm1098, %v278, %v658
        %v1152 = vsel %vm1098, %v279, %v660
        %v1153 = vsel %vm1098, %v281, %v662
        %v1154 = vsel %vm1098, %v282, %v664
        %v1155 = vsel %vm1098, %v284, %v666
        %v1156 = vsel %vm1098, %v285, %v668
        %v1157 = vsel %vm1098, %v287, %v670
        %v1158 = vsel %vm1098, %v288, %v672
        %v1159 = vsel %vm1098, %v290, %v674
        %v1160 = vsel %vm1098, %v291, %v676
        %v1161 = vsel %vm1098, %v293, %v678
        %v1162 = vsel %vm1098, %v294, %v680
        %vm1163 = vcmask 64512
        %v1164 = vsel %vm1163, %v554, %v907
        %v1165 = vsel %vm1163, %v556, %v909
        %v1166 = vsel %vm1163, %v558, %v911
        %v1167 = vsel %vm1163, %v560, %v913
        %v1168 = vsel %vm1163, %v562, %v915
        %v1169 = vsel %vm1163, %v564, %v917
        %v1170 = vsel %vm1163, %v566, %v919
        %v1171 = vsel %vm1163, %v568, %v921
        %v1172 = vsel %vm1163, %v570, %v923
        %v1173 = vsel %vm1163, %v572, %v925
        %v1174 = vsel %vm1163, %v574, %v927
        %v1175 = vsel %vm1163, %v576, %v929
        %v1176 = vsel %vm1163, %v578, %v931
        %v1177 = vsel %vm1163, %v580, %v933
        %v1178 = vsel %vm1163, %v582, %v935
        %v1179 = vsel %vm1163, %v584, %v937
        %v1180 = vsel %vm1163, %v586, %v939
        %v1181 = vsel %vm1163, %v588, %v941
        %v1182 = vsel %vm1163, %v590, %v943
        %v1183 = vsel %vm1163, %v592, %v945
        %v1184 = vsel %vm1163, %v594, %v947
        %v1185 = vsel %vm1163, %v596, %v949
        %v1186 = vsel %vm1163, %v598, %v951
        %v1187 = vsel %vm1163, %v600, %v953
        %v1188 = vsel %vm1163, %v602, %v955
        %v1189 = vsel %vm1163, %v604, %v957
        %v1190 = vsel %vm1163, %v606, %v959
        %v1191 = vsel %vm1163, %v608, %v961
        %v1192 = vsel %vm1163, %v610, %v963
        %v1193 = vsel %vm1163, %v612, %v965
        %v1194 = vsel %vm1163, %v614, %v967
        %v1195 = vsel %vm1163, %v616, %v969
        %v1196 = vsel %vm1163, %v618, %v971
        %v1197 = vsel %vm1163, %v620, %v973
        %v1198 = vsel %vm1163, %v622, %v975
        %v1199 = vsel %vm1163, %v624, %v977
        %v1200 = vsel %vm1163, %v626, %v979
        %v1201 = vsel %vm1163, %v628, %v981
        %v1202 = vsel %vm1163, %v630, %v983
        %v1203 = vsel %vm1163, %v632, %v985
        %v1204 = vsel %vm1163, %v634, %v987
        %v1205 = vsel %vm1163, %v636, %v989
        %v1206 = vsel %vm1163, %v638, %v991
        %v1207 = vsel %vm1163, %v640, %v993
        %v1208 = vsel %vm1163, %v642, %v995
        %v1209 = vsel %vm1163, %v644, %v997
        %v1210 = vsel %vm1163, %v646, %v999
        %v1211 = vsel %vm1163, %v648, %v1001
        %v1212 = vsel %vm1163, %v650, %v1003
        %v1213 = vsel %vm1163, %v652, %v1005
        %v1214 = vsel %vm1163, %v654, %v1007
        %v1215 = vsel %vm1163, %v656, %v1009
        %v1216 = vsel %vm1163, %v658, %v1011
        %v1217 = vsel %vm1163, %v660, %v1013
        %v1218 = vsel %vm1163, %v662, %v1015
        %v1219 = vsel %vm1163, %v664, %v1017
        %v1220 = vsel %vm1163, %v666, %v1019
        %v1221 = vsel %vm1163, %v668, %v1021
        %v1222 = vsel %vm1163, %v670, %v1023
        %v1223 = vsel %vm1163, %v672, %v1025
        %v1224 = vsel %vm1163, %v674, %v1027
        %v1225 = vsel %vm1163, %v676, %v1029
        %v1226 = vsel %vm1163, %v678, %v1031
        %v1227 = vsel %vm1163, %v680, %v1033
        %vm1228 = vcmask 621568
        %v1229 = vsel %vm1228, %v1164, 1.0
        %v1230 = vsel %vm1228, %v1165, 1.0
        %v1231 = vsel %vm1228, %v1166, 1.0
        %v1232 = vsel %vm1228, %v1167, 1.0
        %v1233 = vsel %vm1228, %v1168, 1.0
        %v1234 = vsel %vm1228, %v1169, 1.0
        %v1235 = vsel %vm1228, %v1170, 1.0
        %v1236 = vsel %vm1228, %v1171, 1.0
        %v1237 = vsel %vm1228, %v1172, 1.0
        %v1238 = vsel %vm1228, %v1173, 1.0
        %v1239 = vsel %vm1228, %v1174, 1.0
        %v1240 = vsel %vm1228, %v1175, 1.0
        %v1241 = vsel %vm1228, %v1176, 1.0
        %v1242 = vsel %vm1228, %v1177, 1.0
        %v1243 = vsel %vm1228, %v1178, 1.0
        %v1244 = vsel %vm1228, %v1179, 1.0
        %v1245 = vsel %vm1228, %v1180, 1.0
        %v1246 = vsel %vm1228, %v1181, 1.0
        %v1247 = vsel %vm1228, %v1182, 1.0
        %v1248 = vsel %vm1228, %v1183, 1.0
        %v1249 = vsel %vm1228, %v1184, 1.0
        %v1250 = vsel %vm1228, %v1185, 1.0
        %v1251 = vsel %vm1228, %v1186, 1.0
        %v1252 = vsel %vm1228, %v1187, 1.0
        %v1253 = vsel %vm1228, %v1188, 1.0
        %v1254 = vsel %vm1228, %v1189, 1.0
        %v1255 = vsel %vm1228, %v1190, 1.0
        %v1256 = vsel %vm1228, %v1191, 1.0
        %v1257 = vsel %vm1228, %v1192, 1.0
        %v1258 = vsel %vm1228, %v1193, 1.0
        %v1259 = vsel %vm1228, %v1194, 1.0
        %v1260 = vsel %vm1228, %v1195, 1.0
        %v1261 = vsel %vm1228, %v1196, 1.0
        %v1262 = vsel %vm1228, %v1197, 1.0
        %v1263 = vsel %vm1228, %v1198, 1.0
        %v1264 = vsel %vm1228, %v1199, 1.0
        %v1265 = vsel %vm1228, %v1200, 1.0
        %v1266 = vsel %vm1228, %v1201, 1.0
        %v1267 = vsel %vm1228, %v1202, 1.0
        %v1268 = vsel %vm1228, %v1203, 1.0
        %v1269 = vsel %vm1228, %v1204, 1.0
        %v1270 = vsel %vm1228, %v1205, 1.0
        %v1271 = vsel %vm1228, %v1206, 1.0
        %v1272 = vsel %vm1228, %v1207, 1.0
        %v1273 = vsel %vm1228, %v1208, 1.0
        %v1274 = vsel %vm1228, %v1209, 1.0
        %v1275 = vsel %vm1228, %v1210, 1.0
        %v1276 = vsel %vm1228, %v1211, 1.0
        %v1277 = vsel %vm1228, %v1212, 1.0
        %v1278 = vsel %vm1228, %v1213, 1.0
        %v1279 = vsel %vm1228, %v1214, 1.0
        %v1280 = vsel %vm1228, %v1215, 1.0
        %v1281 = vsel %vm1228, %v1216, 1.0
        %v1282 = vsel %vm1228, %v1217, 1.0
        %v1283 = vsel %vm1228, %v1218, 1.0
        %v1284 = vsel %vm1228, %v1219, 1.0
        %v1285 = vsel %vm1228, %v1220, 1.0
        %v1286 = vsel %vm1228, %v1221, 1.0
        %v1287 = vsel %vm1228, %v1222, 1.0
        %v1288 = vsel %vm1228, %v1223, 1.0
        %v1289 = vsel %vm1228, %v1224, 1.0
        %v1290 = vsel %vm1228, %v1225, 1.0
        %v1291 = vsel %vm1228, %v1226, 1.0
        %v1292 = vsel %vm1228, %v1227, 1.0
        %vm1293 = vcmask 629760
        %v1294 = vsel %vm1293, %v1229, 0.0
        %v1295 = vsel %vm1293, %v1230, 0.0
        %v1296 = vsel %vm1293, %v1231, 0.0
        %v1297 = vsel %vm1293, %v1232, 0.0
        %v1298 = vsel %vm1293, %v1233, 0.0
        %v1299 = vsel %vm1293, %v1234, 0.0
        %v1300 = vsel %vm1293, %v1235, 0.0
        %v1301 = vsel %vm1293, %v1236, 0.0
        %v1302 = vsel %vm1293, %v1237, 0.0
        %v1303 = vsel %vm1293, %v1238, 0.0
        %v1304 = vsel %vm1293, %v1239, 0.0
        %v1305 = vsel %vm1293, %v1240, 0.0
        %v1306 = vsel %vm1293, %v1241, 0.0
        %v1307 = vsel %vm1293, %v1242, 0.0
        %v1308 = vsel %vm1293, %v1243, 0.0
        %v1309 = vsel %vm1293, %v1244, 0.0
        %v1310 = vsel %vm1293, %v1245, 0.0
        %v1311 = vsel %vm1293, %v1246, 0.0
        %v1312 = vsel %vm1293, %v1247, 0.0
        %v1313 = vsel %vm1293, %v1248, 0.0
        %v1314 = vsel %vm1293, %v1249, 0.0
        %v1315 = vsel %vm1293, %v1250, 0.0
        %v1316 = vsel %vm1293, %v1251, 0.0
        %v1317 = vsel %vm1293, %v1252, 0.0
        %v1318 = vsel %vm1293, %v1253, 0.0
        %v1319 = vsel %vm1293, %v1254, 0.0
        %v1320 = vsel %vm1293, %v1255, 0.0
        %v1321 = vsel %vm1293, %v1256, 0.0
        %v1322 = vsel %vm1293, %v1257, 0.0
        %v1323 = vsel %vm1293, %v1258, 0.0
        %v1324 = vsel %vm1293, %v1259, 0.0
        %v1325 = vsel %vm1293, %v1260, 0.0
        %v1326 = vsel %vm1293, %v1261, 0.0
        %v1327 = vsel %vm1293, %v1262, 0.0
        %v1328 = vsel %vm1293, %v1263, 0.0
        %v1329 = vsel %vm1293, %v1264, 0.0
        %v1330 = vsel %vm1293, %v1265, 0.0
        %v1331 = vsel %vm1293, %v1266, 0.0
        %v1332 = vsel %vm1293, %v1267, 0.0
        %v1333 = vsel %vm1293, %v1268, 0.0
        %v1334 = vsel %vm1293, %v1269, 0.0
        %v1335 = vsel %vm1293, %v1270, 0.0
        %v1336 = vsel %vm1293, %v1271, 0.0
        %v1337 = vsel %vm1293, %v1272, 0.0
        %v1338 = vsel %vm1293, %v1273, 0.0
        %v1339 = vsel %vm1293, %v1274, 0.0
        %v1340 = vsel %vm1293, %v1275, 0.0
        %v1341 = vsel %vm1293, %v1276, 0.0
        %v1342 = vsel %vm1293, %v1277, 0.0
        %v1343 = vsel %vm1293, %v1278, 0.0
        %v1344 = vsel %vm1293, %v1279, 0.0
        %v1345 = vsel %vm1293, %v1280, 0.0
        %v1346 = vsel %vm1293, %v1281, 0.0
        %v1347 = vsel %vm1293, %v1282, 0.0
        %v1348 = vsel %vm1293, %v1283, 0.0
        %v1349 = vsel %vm1293, %v1284, 0.0
        %v1350 = vsel %vm1293, %v1285, 0.0
        %v1351 = vsel %vm1293, %v1286, 0.0
        %v1352 = vsel %vm1293, %v1287, 0.0
        %v1353 = vsel %vm1293, %v1288, 0.0
        %v1354 = vsel %vm1293, %v1289, 0.0
        %v1355 = vsel %vm1293, %v1290, 0.0
        %v1356 = vsel %vm1293, %v1291, 0.0
        %v1357 = vsel %vm1293, %v1292, 0.0
        %v1358 = vpack.c.bf16 %v1100, %v1099
        %v1359 = vpack.c.bf16 %v1295, %v1294
        %v1360 = vpack.c.bf16 %v1102, %v1101
        %v1361 = vpack.c.bf16 %v1297, %v1296
        %v1362 = vpack.c.bf16 %v1104, %v1103
        %v1363 = vpack.c.bf16 %v1299, %v1298
        %v1364 = vpack.c.bf16 %v1106, %v1105
        %v1365 = vpack.c.bf16 %v1301, %v1300
        %v1366 = vpack.c.bf16 %v1108, %v1107
        %v1367 = vpack.c.bf16 %v1303, %v1302
        %v1368 = vpack.c.bf16 %v1110, %v1109
        %v1369 = vpack.c.bf16 %v1305, %v1304
        %v1370 = vpack.c.bf16 %v1112, %v1111
        %v1371 = vpack.c.bf16 %v1307, %v1306
        %v1372 = vpack.c.bf16 %v1114, %v1113
        %v1373 = vpack.c.bf16 %v1309, %v1308
        %v1374 = vpack.c.bf16 %v1116, %v1115
        %v1375 = vpack.c.bf16 %v1311, %v1310
        %v1376 = vpack.c.bf16 %v1118, %v1117
        %v1377 = vpack.c.bf16 %v1313, %v1312
        %v1378 = vpack.c.bf16 %v1120, %v1119
        %v1379 = vpack.c.bf16 %v1315, %v1314
        %v1380 = vpack.c.bf16 %v1122, %v1121
        %v1381 = vpack.c.bf16 %v1317, %v1316
        %v1382 = vpack.c.bf16 %v1124, %v1123
        %v1383 = vpack.c.bf16 %v1319, %v1318
        %v1384 = vpack.c.bf16 %v1126, %v1125
        %v1385 = vpack.c.bf16 %v1321, %v1320
        %v1386 = vpack.c.bf16 %v1128, %v1127
        %v1387 = vpack.c.bf16 %v1323, %v1322
        %v1388 = vpack.c.bf16 %v1130, %v1129
        %v1389 = vpack.c.bf16 %v1325, %v1324
        %v1390 = vpack.c.bf16 %v1132, %v1131
        %v1391 = vpack.c.bf16 %v1327, %v1326
        %v1392 = vpack.c.bf16 %v1134, %v1133
        %v1393 = vpack.c.bf16 %v1329, %v1328
        %v1394 = vpack.c.bf16 %v1136, %v1135
        %v1395 = vpack.c.bf16 %v1331, %v1330
        %v1396 = vpack.c.bf16 %v1138, %v1137
        %v1397 = vpack.c.bf16 %v1333, %v1332
        %v1398 = vpack.c.bf16 %v1140, %v1139
        %v1399 = vpack.c.bf16 %v1335, %v1334
        %v1400 = vpack.c.bf16 %v1142, %v1141
        %v1401 = vpack.c.bf16 %v1337, %v1336
        %v1402 = vpack.c.bf16 %v1144, %v1143
        %v1403 = vpack.c.bf16 %v1339, %v1338
        %v1404 = vpack.c.bf16 %v1146, %v1145
        %v1405 = vpack.c.bf16 %v1341, %v1340
        %v1406 = vpack.c.bf16 %v1148, %v1147
        %v1407 = vpack.c.bf16 %v1343, %v1342
        %v1408 = vpack.c.bf16 %v1150, %v1149
        %v1409 = vpack.c.bf16 %v1345, %v1344
        %v1410 = vpack.c.bf16 %v1152, %v1151
        %v1411 = vpack.c.bf16 %v1347, %v1346
        %v1412 = vpack.c.bf16 %v1154, %v1153
        %v1413 = vpack.c.bf16 %v1349, %v1348
        %v1414 = vpack.c.bf16 %v1156, %v1155
        %v1415 = vpack.c.bf16 %v1351, %v1350
        %v1416 = vpack.c.bf16 %v1158, %v1157
        %v1417 = vpack.c.bf16 %v1353, %v1352
        %v1418 = vpack.c.bf16 %v1160, %v1159
        %v1419 = vpack.c.bf16 %v1355, %v1354
        %v1420 = vpack.c.bf16 %v1162, %v1161
        %v1421 = vpack.c.bf16 %v1357, %v1356
        %v1422 = vld [vmem:[%s2] sm:$0xff]
        %v1423 = vld [vmem:[%s2 + $0x8] sm:$0xff]
        %v1424 = vld [vmem:[%s2 + $0x10] sm:$0xff]
        %v1425 = vld [vmem:[%s2 + $0x18] sm:$0xff]
        %v1426 = vld [vmem:[%s2 + $0x20] sm:$0xff]
        %v1427 = vld [vmem:[%s2 + $0x28] sm:$0xff]
        %v1428 = vld [vmem:[%s2 + $0x30] sm:$0xff]
        %v1429 = vld [vmem:[%s2 + $0x38] sm:$0xff]
        %v1430 = vld [vmem:[%s2 + $0x40] sm:$0xff]
        %v1431 = vld [vmem:[%s2 + $0x48] sm:$0xff]
        %v1432 = vld [vmem:[%s2 + $0x50] sm:$0xff]
        %v1433 = vld [vmem:[%s2 + $0x58] sm:$0xff]
        %v1434 = vld [vmem:[%s2 + $0x60] sm:$0xff]
        %v1435 = vld [vmem:[%s2 + $0x68] sm:$0xff]
        %v1436 = vld [vmem:[%s2 + $0x70] sm:$0xff]
        %v1437 = vld [vmem:[%s2 + $0x78] sm:$0xff]
        %v1438 = vld [vmem:[%s2 + $0x80] sm:$0xff]
        %v1439 = vld [vmem:[%s2 + $0x88] sm:$0xff]
        %v1440 = vld [vmem:[%s2 + $0x90] sm:$0xff]
        %v1441 = vld [vmem:[%s2 + $0x98] sm:$0xff]
        %v1442 = vld [vmem:[%s2 + $0xa0] sm:$0xff]
        %v1443 = vld [vmem:[%s2 + $0xa8] sm:$0xff]
        %v1444 = vld [vmem:[%s2 + $0xb0] sm:$0xff]
        %v1445 = vld [vmem:[%s2 + $0xb8] sm:$0xff]
        %v1446 = vld [vmem:[%s2 + $0xc0] sm:$0xff]
        %v1447 = vld [vmem:[%s2 + $0xc8] sm:$0xff]
        %v1448 = vld [vmem:[%s2 + $0xd0] sm:$0xff]
        %v1449 = vld [vmem:[%s2 + $0xd8] sm:$0xff]
        %v1450 = vld [vmem:[%s2 + $0xe0] sm:$0xff]
        %v1451 = vld [vmem:[%s2 + $0xe8] sm:$0xff]
        %v1452 = vld [vmem:[%s2 + $0xf0] sm:$0xff]
        %v1453 = vld [vmem:[%s2 + $0xf8] sm:$0xff]
        %v1486 = vunpack.c.l.b16 %v1422
        %v1487 = vunpack.c.h.b16 %v1422
        %v1488 = vunpack.c.l.b16 %v1423
        %v1489 = vunpack.c.h.b16 %v1423
        %v1490 = vunpack.c.l.b16 %v1424
        %v1491 = vunpack.c.h.b16 %v1424
        %v1492 = vunpack.c.l.b16 %v1425
        %v1493 = vunpack.c.h.b16 %v1425
        %v1494 = vunpack.c.l.b16 %v1426
        %v1495 = vunpack.c.h.b16 %v1426
        %v1496 = vunpack.c.l.b16 %v1427
        %v1497 = vunpack.c.h.b16 %v1427
        %v1498 = vunpack.c.l.b16 %v1428
        %v1499 = vunpack.c.h.b16 %v1428
        %v1500 = vunpack.c.l.b16 %v1429
        %v1501 = vunpack.c.h.b16 %v1429
        %v1502 = vunpack.c.l.b16 %v1430
        %v1503 = vunpack.c.h.b16 %v1430
        %v1504 = vunpack.c.l.b16 %v1431
        %v1505 = vunpack.c.h.b16 %v1431
        %v1506 = vunpack.c.l.b16 %v1432
        %v1507 = vunpack.c.h.b16 %v1432
        %v1508 = vunpack.c.l.b16 %v1433
        %v1509 = vunpack.c.h.b16 %v1433
        %v1510 = vunpack.c.l.b16 %v1434
        %v1511 = vunpack.c.h.b16 %v1434
        %v1512 = vunpack.c.l.b16 %v1435
        %v1513 = vunpack.c.h.b16 %v1435
        %v1514 = vunpack.c.l.b16 %v1436
        %v1515 = vunpack.c.h.b16 %v1436
        %v1516 = vunpack.c.l.b16 %v1437
        %v1517 = vunpack.c.h.b16 %v1437
        %v1518 = vunpack.c.l.b16 %v1438
        %v1519 = vunpack.c.h.b16 %v1438
        %v1520 = vunpack.c.l.b16 %v1439
        %v1521 = vunpack.c.h.b16 %v1439
        %v1522 = vunpack.c.l.b16 %v1440
        %v1523 = vunpack.c.h.b16 %v1440
        %v1524 = vunpack.c.l.b16 %v1441
        %v1525 = vunpack.c.h.b16 %v1441
        %v1526 = vunpack.c.l.b16 %v1442
        %v1527 = vunpack.c.h.b16 %v1442
        %v1528 = vunpack.c.l.b16 %v1443
        %v1529 = vunpack.c.h.b16 %v1443
        %v1530 = vunpack.c.l.b16 %v1444
        %v1531 = vunpack.c.h.b16 %v1444
        %v1532 = vunpack.c.l.b16 %v1445
        %v1533 = vunpack.c.h.b16 %v1445
        %v1534 = vunpack.c.l.b16 %v1446
        %v1535 = vunpack.c.h.b16 %v1446
        %v1536 = vunpack.c.l.b16 %v1447
        %v1537 = vunpack.c.h.b16 %v1447
        %v1538 = vunpack.c.l.b16 %v1448
        %v1539 = vunpack.c.h.b16 %v1448
        %v1540 = vunpack.c.l.b16 %v1449
        %v1541 = vunpack.c.h.b16 %v1449
        %v1542 = vunpack.c.l.b16 %v1450
        %v1543 = vunpack.c.h.b16 %v1450
        %v1544 = vunpack.c.l.b16 %v1451
        %v1545 = vunpack.c.h.b16 %v1451
        %v1546 = vunpack.c.l.b16 %v1452
        %v1547 = vunpack.c.h.b16 %v1452
        %v1548 = vunpack.c.l.b16 %v1453
        %v1549 = vunpack.c.h.b16 %v1453
        %v1550 = vpack.c.b16 %v1488, %v1486
        %v1551 = vpack.c.b16 %v1489, %v1487
        %v1552 = vpack.c.b16 %v1492, %v1490
        %v1553 = vpack.c.b16 %v1493, %v1491
        %v1554 = vpack.c.b16 %v1496, %v1494
        %v1555 = vpack.c.b16 %v1497, %v1495
        %v1556 = vpack.c.b16 %v1500, %v1498
        %v1557 = vpack.c.b16 %v1501, %v1499
        %v1558 = vpack.c.b16 %v1504, %v1502
        %v1559 = vpack.c.b16 %v1505, %v1503
        %v1560 = vpack.c.b16 %v1508, %v1506
        %v1561 = vpack.c.b16 %v1509, %v1507
        %v1562 = vpack.c.b16 %v1512, %v1510
        %v1563 = vpack.c.b16 %v1513, %v1511
        %v1564 = vpack.c.b16 %v1516, %v1514
        %v1565 = vpack.c.b16 %v1517, %v1515
        %v1566 = vpack.c.b16 %v1520, %v1518
        %v1567 = vpack.c.b16 %v1521, %v1519
        %v1568 = vpack.c.b16 %v1524, %v1522
        %v1569 = vpack.c.b16 %v1525, %v1523
        %v1570 = vpack.c.b16 %v1528, %v1526
        %v1571 = vpack.c.b16 %v1529, %v1527
        %v1572 = vpack.c.b16 %v1532, %v1530
        %v1573 = vpack.c.b16 %v1533, %v1531
        %v1574 = vpack.c.b16 %v1536, %v1534
        %v1575 = vpack.c.b16 %v1537, %v1535
        %v1576 = vpack.c.b16 %v1540, %v1538
        %v1577 = vpack.c.b16 %v1541, %v1539
        %v1578 = vpack.c.b16 %v1544, %v1542
        %v1579 = vpack.c.b16 %v1545, %v1543
        %v1580 = vpack.c.b16 %v1548, %v1546
        %v1581 = vpack.c.b16 %v1549, %v1547
        %1614 = vmatprep.subr.bf16.mxu0 %v1551
        %1615 = vmatpush1.bf16.msra.mxu0 %v1550
        %1616 = vmatprep.subr.bf16.mxu0 %v1553
        %1617 = vmatpush1.bf16.msra.mxu0 %v1552
        %1618 = vmatprep.subr.bf16.mxu0 %v1555
        %1619 = vmatpush1.bf16.msra.mxu0 %v1554
        %1620 = vmatprep.subr.bf16.mxu0 %v1557
        %1621 = vmatpush1.bf16.msra.mxu0 %v1556
        %1622 = vmatprep.subr.bf16.mxu0 %v1559
        %1623 = vmatpush1.bf16.msra.mxu0 %v1558
        %1624 = vmatprep.subr.bf16.mxu0 %v1561
        %1625 = vmatpush1.bf16.msra.mxu0 %v1560
        %1626 = vmatprep.subr.bf16.mxu0 %v1563
        %1627 = vmatpush1.bf16.msra.mxu0 %v1562
        %1628 = vmatprep.subr.bf16.mxu0 %v1565
        %1629 = vmatpush1.bf16.msra.mxu0 %v1564
        %1630 = vmatprep.subr.bf16.mxu0 %v1567
        %1631 = vmatpush1.bf16.msra.mxu0 %v1566
        %1632 = vmatprep.subr.bf16.mxu0 %v1569
        %1633 = vmatpush1.bf16.msra.mxu0 %v1568
        %1634 = vmatprep.subr.bf16.mxu0 %v1571
        %1635 = vmatpush1.bf16.msra.mxu0 %v1570
        %1636 = vmatprep.subr.bf16.mxu0 %v1573
        %1637 = vmatpush1.bf16.msra.mxu0 %v1572
        %1638 = vmatprep.subr.bf16.mxu0 %v1575
        %1639 = vmatpush1.bf16.msra.mxu0 %v1574
        %1640 = vmatprep.subr.bf16.mxu0 %v1577
        %1641 = vmatpush1.bf16.msra.mxu0 %v1576
        %1642 = vmatprep.subr.bf16.mxu0 %v1579
        %1643 = vmatpush1.bf16.msra.mxu0 %v1578
        %1644 = vmatprep.subr.bf16.mxu0 %v1581
        %1645 = vmatpush1.bf16.msra.mxu0 %v1580
        %1646 = vmatprep.mubr.bf16.mxu0 %v1359
        %1647 = vmatmul.mubr.bf16.gmra.mrb[0].mxu0 %v1358
        %v1648 = vpop.f32.mrb[0].mxu0
        %v1649 = vadd.f32 0.0, %v1648
        %v1650 = vpop.f32.mrb[0].mxu0
        %v1651 = vadd.f32 0.0, %v1650
        %v1652 = vpop.f32.mrb[0].mxu0
        %v1653 = vadd.f32 0.0, %v1652
        %v1654 = vpop.f32.mrb[0].mxu0
        %v1655 = vadd.f32 0.0, %v1654
        %1656 = vmatprep.mubr.bf16.mxu0 %v1361
        %1657 = vmatmul.mubr.bf16.gmra.mrb[0].mxu0 %v1360
        %v1658 = vpop.f32.mrb[0].mxu0
        %v1659 = vadd.f32 0.0, %v1658
        %v1660 = vpop.f32.mrb[0].mxu0
        %v1661 = vadd.f32 0.0, %v1660
        %v1662 = vpop.f32.mrb[0].mxu0
        %v1663 = vadd.f32 0.0, %v1662
        %v1664 = vpop.f32.mrb[0].mxu0
        %v1665 = vadd.f32 0.0, %v1664
        %1666 = vmatprep.mubr.bf16.mxu0 %v1363
        %1667 = vmatmul.mubr.bf16.gmra.mrb[0].mxu0 %v1362
        %v1668 = vpop.f32.mrb[0].mxu0
        %v1669 = vadd.f32 0.0, %v1668
        %v1670 = vpop.f32.mrb[0].mxu0
        %v1671 = vadd.f32 0.0, %v1670
        %v1672 = vpop.f32.mrb[0].mxu0
        %v1673 = vadd.f32 0.0, %v1672
        %v1674 = vpop.f32.mrb[0].mxu0
        %v1675 = vadd.f32 0.0, %v1674
        %1676 = vmatprep.mubr.bf16.mxu0 %v1365
        %1677 = vmatmul.mubr.bf16.gmra.mrb[0].mxu0 %v1364
        %v1678 = vpop.f32.mrb[0].mxu0
        %v1679 = vadd.f32 0.0, %v1678
        %v1680 = vpop.f32.mrb[0].mxu0
        %v1681 = vadd.f32 0.0, %v1680
        %v1682 = vpop.f32.mrb[0].mxu0
        %v1683 = vadd.f32 0.0, %v1682
        %v1684 = vpop.f32.mrb[0].mxu0
        %v1685 = vadd.f32 0.0, %v1684
        %1686 = vmatprep.mubr.bf16.mxu0 %v1367
        %1687 = vmatmul.mubr.bf16.gmra.mrb[0].mxu0 %v1366
        %v1688 = vpop.f32.mrb[0].mxu0
        %v1689 = vadd.f32 0.0, %v1688
        %v1690 = vpop.f32.mrb[0].mxu0
        %v1691 = vadd.f32 0.0, %v1690
        %v1692 = vpop.f32.mrb[0].mxu0
        %v1693 = vadd.f32 0.0, %v1692
        %v1694 = vpop.f32.mrb[0].mxu0
        %v1695 = vadd.f32 0.0, %v1694
        %1696 = vmatprep.mubr.bf16.mxu0 %v1369
        %1697 = vmatmul.mubr.bf16.gmra.mrb[0].mxu0 %v1368
        %v1698 = vpop.f32.mrb[0].mxu0
        %v1699 = vadd.f32 0.0, %v1698
        %v1700 = vpop.f32.mrb[0].mxu0
        %v1701 = vadd.f32 0.0, %v1700
        %v1702 = vpop.f32.mrb[0].mxu0
        %v1703 = vadd.f32 0.0, %v1702
        %v1704 = vpop.f32.mrb[0].mxu0
        %v1705 = vadd.f32 0.0, %v1704
        %1706 = vmatprep.mubr.bf16.mxu0 %v1371
        %1707 = vmatmul.mubr.bf16.gmra.mrb[0].mxu0 %v1370
        %v1708 = vpop.f32.mrb[0].mxu0
        %v1709 = vadd.f32 0.0, %v1708
        %v1710 = vpop.f32.mrb[0].mxu0
        %v1711 = vadd.f32 0.0, %v1710
        %v1712 = vpop.f32.mrb[0].mxu0
        %v1713 = vadd.f32 0.0, %v1712
        %v1714 = vpop.f32.mrb[0].mxu0
        %v1715 = vadd.f32 0.0, %v1714
        %1716 = vmatprep.mubr.bf16.mxu0 %v1373
        %1717 = vmatmul.mubr.bf16.gmra.mrb[0].mxu0 %v1372
        %v1718 = vpop.f32.mrb[0].mxu0
        %v1719 = vadd.f32 0.0, %v1718
        %v1720 = vpop.f32.mrb[0].mxu0
        %v1721 = vadd.f32 0.0, %v1720
        %v1722 = vpop.f32.mrb[0].mxu0
        %v1723 = vadd.f32 0.0, %v1722
        %v1724 = vpop.f32.mrb[0].mxu0
        %v1725 = vadd.f32 0.0, %v1724
        %1726 = vmatprep.mubr.bf16.mxu0 %v1375
        %1727 = vmatmul.mubr.bf16.gmra.mrb[0].mxu0 %v1374
        %v1728 = vpop.f32.mrb[0].mxu0
        %v1729 = vadd.f32 0.0, %v1728
        %v1730 = vpop.f32.mrb[0].mxu0
        %v1731 = vadd.f32 0.0, %v1730
        %v1732 = vpop.f32.mrb[0].mxu0
        %v1733 = vadd.f32 0.0, %v1732
        %v1734 = vpop.f32.mrb[0].mxu0
        %v1735 = vadd.f32 0.0, %v1734
        %1736 = vmatprep.mubr.bf16.mxu0 %v1377
        %1737 = vmatmul.mubr.bf16.gmra.mrb[0].mxu0 %v1376
        %v1738 = vpop.f32.mrb[0].mxu0
        %v1739 = vadd.f32 0.0, %v1738
        %v1740 = vpop.f32.mrb[0].mxu0
        %v1741 = vadd.f32 0.0, %v1740
        %v1742 = vpop.f32.mrb[0].mxu0
        %v1743 = vadd.f32 0.0, %v1742
        %v1744 = vpop.f32.mrb[0].mxu0
        %v1745 = vadd.f32 0.0, %v1744
        %1746 = vmatprep.mubr.bf16.mxu0 %v1379
        %1747 = vmatmul.mubr.bf16.gmra.mrb[0].mxu0 %v1378
        %v1748 = vpop.f32.mrb[0].mxu0
        %v1749 = vadd.f32 0.0, %v1748
        %v1750 = vpop.f32.mrb[0].mxu0
        %v1751 = vadd.f32 0.0, %v1750
        %v1752 = vpop.f32.mrb[0].mxu0
        %v1753 = vadd.f32 0.0, %v1752
        %v1754 = vpop.f32.mrb[0].mxu0
        %v1755 = vadd.f32 0.0, %v1754
        %1756 = vmatprep.mubr.bf16.mxu0 %v1381
        %1757 = vmatmul.mubr.bf16.gmra.mrb[0].mxu0 %v1380
        %v1758 = vpop.f32.mrb[0].mxu0
        %v1759 = vadd.f32 0.0, %v1758
        %v1760 = vpop.f32.mrb[0].mxu0
        %v1761 = vadd.f32 0.0, %v1760
        %v1762 = vpop.f32.mrb[0].mxu0
        %v1763 = vadd.f32 0.0, %v1762
        %v1764 = vpop.f32.mrb[0].mxu0
        %v1765 = vadd.f32 0.0, %v1764
        %1766 = vmatprep.mubr.bf16.mxu0 %v1383
        %1767 = vmatmul.mubr.bf16.gmra.mrb[0].mxu0 %v1382
        %v1768 = vpop.f32.mrb[0].mxu0
        %v1769 = vadd.f32 0.0, %v1768
        %v1770 = vpop.f32.mrb[0].mxu0
        %v1771 = vadd.f32 0.0, %v1770
        %v1772 = vpop.f32.mrb[0].mxu0
        %v1773 = vadd.f32 0.0, %v1772
        %v1774 = vpop.f32.mrb[0].mxu0
        %v1775 = vadd.f32 0.0, %v1774
        %1776 = vmatprep.mubr.bf16.mxu0 %v1385
        %1777 = vmatmul.mubr.bf16.gmra.mrb[0].mxu0 %v1384
        %v1778 = vpop.f32.mrb[0].mxu0
        %v1779 = vadd.f32 0.0, %v1778
        %v1780 = vpop.f32.mrb[0].mxu0
        %v1781 = vadd.f32 0.0, %v1780
        %v1782 = vpop.f32.mrb[0].mxu0
        %v1783 = vadd.f32 0.0, %v1782
        %v1784 = vpop.f32.mrb[0].mxu0
        %v1785 = vadd.f32 0.0, %v1784
        %1786 = vmatprep.mubr.bf16.mxu0 %v1387
        %1787 = vmatmul.mubr.bf16.gmra.mrb[0].mxu0 %v1386
        %v1788 = vpop.f32.mrb[0].mxu0
        %v1789 = vadd.f32 0.0, %v1788
        %v1790 = vpop.f32.mrb[0].mxu0
        %v1791 = vadd.f32 0.0, %v1790
        %v1792 = vpop.f32.mrb[0].mxu0
        %v1793 = vadd.f32 0.0, %v1792
        %v1794 = vpop.f32.mrb[0].mxu0
        %v1795 = vadd.f32 0.0, %v1794
        %1796 = vmatprep.mubr.bf16.mxu0 %v1389
        %1797 = vmatmul.mubr.bf16.gmra.mrb[0].mxu0 %v1388
        %v1798 = vpop.f32.mrb[0].mxu0
        %v1799 = vadd.f32 0.0, %v1798
        %v1800 = vpop.f32.mrb[0].mxu0
        %v1801 = vadd.f32 0.0, %v1800
        %v1802 = vpop.f32.mrb[0].mxu0
        %v1803 = vadd.f32 0.0, %v1802
        %v1804 = vpop.f32.mrb[0].mxu0
        %v1805 = vadd.f32 0.0, %v1804
        %1806 = vmatprep.mubr.bf16.mxu0 %v1391
        %1807 = vmatmul.mubr.bf16.gmra.mrb[0].mxu0 %v1390
        %v1808 = vpop.f32.mrb[0].mxu0
        %v1809 = vadd.f32 0.0, %v1808
        %v1810 = vpop.f32.mrb[0].mxu0
        %v1811 = vadd.f32 0.0, %v1810
        %v1812 = vpop.f32.mrb[0].mxu0
        %v1813 = vadd.f32 0.0, %v1812
        %v1814 = vpop.f32.mrb[0].mxu0
        %v1815 = vadd.f32 0.0, %v1814
        %1816 = vmatprep.mubr.bf16.mxu0 %v1393
        %1817 = vmatmul.mubr.bf16.gmra.mrb[0].mxu0 %v1392
        %v1818 = vpop.f32.mrb[0].mxu0
        %v1819 = vadd.f32 0.0, %v1818
        %v1820 = vpop.f32.mrb[0].mxu0
        %v1821 = vadd.f32 0.0, %v1820
        %v1822 = vpop.f32.mrb[0].mxu0
        %v1823 = vadd.f32 0.0, %v1822
        %v1824 = vpop.f32.mrb[0].mxu0
        %v1825 = vadd.f32 0.0, %v1824
        %1826 = vmatprep.mubr.bf16.mxu0 %v1395
        %1827 = vmatmul.mubr.bf16.gmra.mrb[0].mxu0 %v1394
        %v1828 = vpop.f32.mrb[0].mxu0
        %v1829 = vadd.f32 0.0, %v1828
        %v1830 = vpop.f32.mrb[0].mxu0
        %v1831 = vadd.f32 0.0, %v1830
        %v1832 = vpop.f32.mrb[0].mxu0
        %v1833 = vadd.f32 0.0, %v1832
        %v1834 = vpop.f32.mrb[0].mxu0
        %v1835 = vadd.f32 0.0, %v1834
        %1836 = vmatprep.mubr.bf16.mxu0 %v1397
        %1837 = vmatmul.mubr.bf16.gmra.mrb[0].mxu0 %v1396
        %v1838 = vpop.f32.mrb[0].mxu0
        %v1839 = vadd.f32 0.0, %v1838
        %v1840 = vpop.f32.mrb[0].mxu0
        %v1841 = vadd.f32 0.0, %v1840
        %v1842 = vpop.f32.mrb[0].mxu0
        %v1843 = vadd.f32 0.0, %v1842
        %v1844 = vpop.f32.mrb[0].mxu0
        %v1845 = vadd.f32 0.0, %v1844
        %1846 = vmatprep.mubr.bf16.mxu0 %v1399
        %1847 = vmatmul.mubr.bf16.gmra.mrb[0].mxu0 %v1398
        %v1848 = vpop.f32.mrb[0].mxu0
        %v1849 = vadd.f32 0.0, %v1848
        %v1850 = vpop.f32.mrb[0].mxu0
        %v1851 = vadd.f32 0.0, %v1850
        %v1852 = vpop.f32.mrb[0].mxu0
        %v1853 = vadd.f32 0.0, %v1852
        %v1854 = vpop.f32.mrb[0].mxu0
        %v1855 = vadd.f32 0.0, %v1854
        %1856 = vmatprep.mubr.bf16.mxu0 %v1401
        %1857 = vmatmul.mubr.bf16.gmra.mrb[0].mxu0 %v1400
        %v1858 = vpop.f32.mrb[0].mxu0
        %v1859 = vadd.f32 0.0, %v1858
        %v1860 = vpop.f32.mrb[0].mxu0
        %v1861 = vadd.f32 0.0, %v1860
        %v1862 = vpop.f32.mrb[0].mxu0
        %v1863 = vadd.f32 0.0, %v1862
        %v1864 = vpop.f32.mrb[0].mxu0
        %v1865 = vadd.f32 0.0, %v1864
        %1866 = vmatprep.mubr.bf16.mxu0 %v1403
        %1867 = vmatmul.mubr.bf16.gmra.mrb[0].mxu0 %v1402
        %v1868 = vpop.f32.mrb[0].mxu0
        %v1869 = vadd.f32 0.0, %v1868
        %v1870 = vpop.f32.mrb[0].mxu0
        %v1871 = vadd.f32 0.0, %v1870
        %v1872 = vpop.f32.mrb[0].mxu0
        %v1873 = vadd.f32 0.0, %v1872
        %v1874 = vpop.f32.mrb[0].mxu0
        %v1875 = vadd.f32 0.0, %v1874
        %1876 = vmatprep.mubr.bf16.mxu0 %v1405
        %1877 = vmatmul.mubr.bf16.gmra.mrb[0].mxu0 %v1404
        %v1878 = vpop.f32.mrb[0].mxu0
        %v1879 = vadd.f32 0.0, %v1878
        %v1880 = vpop.f32.mrb[0].mxu0
        %v1881 = vadd.f32 0.0, %v1880
        %v1882 = vpop.f32.mrb[0].mxu0
        %v1883 = vadd.f32 0.0, %v1882
        %v1884 = vpop.f32.mrb[0].mxu0
        %v1885 = vadd.f32 0.0, %v1884
        %1886 = vmatprep.mubr.bf16.mxu0 %v1407
        %1887 = vmatmul.mubr.bf16.gmra.mrb[0].mxu0 %v1406
        %v1888 = vpop.f32.mrb[0].mxu0
        %v1889 = vadd.f32 0.0, %v1888
        %v1890 = vpop.f32.mrb[0].mxu0
        %v1891 = vadd.f32 0.0, %v1890
        %v1892 = vpop.f32.mrb[0].mxu0
        %v1893 = vadd.f32 0.0, %v1892
        %v1894 = vpop.f32.mrb[0].mxu0
        %v1895 = vadd.f32 0.0, %v1894
        %1896 = vmatprep.mubr.bf16.mxu0 %v1409
        %1897 = vmatmul.mubr.bf16.gmra.mrb[0].mxu0 %v1408
        %v1898 = vpop.f32.mrb[0].mxu0
        %v1899 = vadd.f32 0.0, %v1898
        %v1900 = vpop.f32.mrb[0].mxu0
        %v1901 = vadd.f32 0.0, %v1900
        %v1902 = vpop.f32.mrb[0].mxu0
        %v1903 = vadd.f32 0.0, %v1902
        %v1904 = vpop.f32.mrb[0].mxu0
        %v1905 = vadd.f32 0.0, %v1904
        %1906 = vmatprep.mubr.bf16.mxu0 %v1411
        %1907 = vmatmul.mubr.bf16.gmra.mrb[0].mxu0 %v1410
        %v1908 = vpop.f32.mrb[0].mxu0
        %v1909 = vadd.f32 0.0, %v1908
        %v1910 = vpop.f32.mrb[0].mxu0
        %v1911 = vadd.f32 0.0, %v1910
        %v1912 = vpop.f32.mrb[0].mxu0
        %v1913 = vadd.f32 0.0, %v1912
        %v1914 = vpop.f32.mrb[0].mxu0
        %v1915 = vadd.f32 0.0, %v1914
        %1916 = vmatprep.mubr.bf16.mxu0 %v1413
        %1917 = vmatmul.mubr.bf16.gmra.mrb[0].mxu0 %v1412
        %v1918 = vpop.f32.mrb[0].mxu0
        %v1919 = vadd.f32 0.0, %v1918
        %v1920 = vpop.f32.mrb[0].mxu0
        %v1921 = vadd.f32 0.0, %v1920
        %v1922 = vpop.f32.mrb[0].mxu0
        %v1923 = vadd.f32 0.0, %v1922
        %v1924 = vpop.f32.mrb[0].mxu0
        %v1925 = vadd.f32 0.0, %v1924
        %1926 = vmatprep.mubr.bf16.mxu0 %v1415
        %1927 = vmatmul.mubr.bf16.gmra.mrb[0].mxu0 %v1414
        %v1928 = vpop.f32.mrb[0].mxu0
        %v1929 = vadd.f32 0.0, %v1928
        %v1930 = vpop.f32.mrb[0].mxu0
        %v1931 = vadd.f32 0.0, %v1930
        %v1932 = vpop.f32.mrb[0].mxu0
        %v1933 = vadd.f32 0.0, %v1932
        %v1934 = vpop.f32.mrb[0].mxu0
        %v1935 = vadd.f32 0.0, %v1934
        %1936 = vmatprep.mubr.bf16.mxu0 %v1417
        %1937 = vmatmul.mubr.bf16.gmra.mrb[0].mxu0 %v1416
        %v1938 = vpop.f32.mrb[0].mxu0
        %v1939 = vadd.f32 0.0, %v1938
        %v1940 = vpop.f32.mrb[0].mxu0
        %v1941 = vadd.f32 0.0, %v1940
        %v1942 = vpop.f32.mrb[0].mxu0
        %v1943 = vadd.f32 0.0, %v1942
        %v1944 = vpop.f32.mrb[0].mxu0
        %v1945 = vadd.f32 0.0, %v1944
        %1946 = vmatprep.mubr.bf16.mxu0 %v1419
        %1947 = vmatmul.mubr.bf16.gmra.mrb[0].mxu0 %v1418
        %v1948 = vpop.f32.mrb[0].mxu0
        %v1949 = vadd.f32 0.0, %v1948
        %v1950 = vpop.f32.mrb[0].mxu0
        %v1951 = vadd.f32 0.0, %v1950
        %v1952 = vpop.f32.mrb[0].mxu0
        %v1953 = vadd.f32 0.0, %v1952
        %v1954 = vpop.f32.mrb[0].mxu0
        %v1955 = vadd.f32 0.0, %v1954
        %1956 = vmatprep.mubr.bf16.mxu0 %v1421
        %1957 = vmatmul.mubr.bf16.gmra.mrb[0].mxu0 %v1420
        %v1958 = vpop.f32.mrb[0].mxu0
        %v1959 = vadd.f32 0.0, %v1958
        %v1960 = vpop.f32.mrb[0].mxu0
        %v1961 = vadd.f32 0.0, %v1960
        %v1962 = vpop.f32.mrb[0].mxu0
        %v1963 = vadd.f32 0.0, %v1962
        %v1964 = vpop.f32.mrb[0].mxu0
        %v1965 = vadd.f32 0.0, %v1964
        %1966 = vdwg.mxu0
        %v1967 = vxor.u32 %v1649, 2147483648
        %v1968 = vxor.u32 %v1651, 2147483648
        %v1969 = vxor.u32 %v1653, 2147483648
        %v1970 = vxor.u32 %v1655, 2147483648
        %v1971 = vxor.u32 %v1659, 2147483648
        %v1972 = vxor.u32 %v1661, 2147483648
        %v1973 = vxor.u32 %v1663, 2147483648
        %v1974 = vxor.u32 %v1665, 2147483648
        %v1975 = vxor.u32 %v1669, 2147483648
        %v1976 = vxor.u32 %v1671, 2147483648
        %v1977 = vxor.u32 %v1673, 2147483648
        %v1978 = vxor.u32 %v1675, 2147483648
        %v1979 = vxor.u32 %v1679, 2147483648
        %v1980 = vxor.u32 %v1681, 2147483648
        %v1981 = vxor.u32 %v1683, 2147483648
        %v1982 = vxor.u32 %v1685, 2147483648
        %v1983 = vxor.u32 %v1689, 2147483648
        %v1984 = vxor.u32 %v1691, 2147483648
        %v1985 = vxor.u32 %v1693, 2147483648
        %v1986 = vxor.u32 %v1695, 2147483648
        %v1987 = vxor.u32 %v1699, 2147483648
        %v1988 = vxor.u32 %v1701, 2147483648
        %v1989 = vxor.u32 %v1703, 2147483648
        %v1990 = vxor.u32 %v1705, 2147483648
        %v1991 = vxor.u32 %v1709, 2147483648
        %v1992 = vxor.u32 %v1711, 2147483648
        %v1993 = vxor.u32 %v1713, 2147483648
        %v1994 = vxor.u32 %v1715, 2147483648
        %v1995 = vxor.u32 %v1719, 2147483648
        %v1996 = vxor.u32 %v1721, 2147483648
        %v1997 = vxor.u32 %v1723, 2147483648
        %v1998 = vxor.u32 %v1725, 2147483648
        %v1999 = vxor.u32 %v1729, 2147483648
        %v2000 = vxor.u32 %v1731, 2147483648
        %v2001 = vxor.u32 %v1733, 2147483648
        %v2002 = vxor.u32 %v1735, 2147483648
        %v2003 = vxor.u32 %v1739, 2147483648
        %v2004 = vxor.u32 %v1741, 2147483648
        %v2005 = vxor.u32 %v1743, 2147483648
        %v2006 = vxor.u32 %v1745, 2147483648
        %v2007 = vxor.u32 %v1749, 2147483648
        %v2008 = vxor.u32 %v1751, 2147483648
        %v2009 = vxor.u32 %v1753, 2147483648
        %v2010 = vxor.u32 %v1755, 2147483648
        %v2011 = vxor.u32 %v1759, 2147483648
        %v2012 = vxor.u32 %v1761, 2147483648
        %v2013 = vxor.u32 %v1763, 2147483648
        %v2014 = vxor.u32 %v1765, 2147483648
        %v2015 = vxor.u32 %v1769, 2147483648
        %v2016 = vxor.u32 %v1771, 2147483648
        %v2017 = vxor.u32 %v1773, 2147483648
        %v2018 = vxor.u32 %v1775, 2147483648
        %v2019 = vxor.u32 %v1779, 2147483648
        %v2020 = vxor.u32 %v1781, 2147483648
        %v2021 = vxor.u32 %v1783, 2147483648
        %v2022 = vxor.u32 %v1785, 2147483648
        %v2023 = vxor.u32 %v1789, 2147483648
        %v2024 = vxor.u32 %v1791, 2147483648
        %v2025 = vxor.u32 %v1793, 2147483648
        %v2026 = vxor.u32 %v1795, 2147483648
        %v2027 = vxor.u32 %v1799, 2147483648
        %v2028 = vxor.u32 %v1801, 2147483648
        %v2029 = vxor.u32 %v1803, 2147483648
        %v2030 = vxor.u32 %v1805, 2147483648
        %v2031 = vxor.u32 %v1809, 2147483648
        %v2032 = vxor.u32 %v1811, 2147483648
        %v2033 = vxor.u32 %v1813, 2147483648
        %v2034 = vxor.u32 %v1815, 2147483648
        %v2035 = vxor.u32 %v1819, 2147483648
        %v2036 = vxor.u32 %v1821, 2147483648
        %v2037 = vxor.u32 %v1823, 2147483648
        %v2038 = vxor.u32 %v1825, 2147483648
        %v2039 = vxor.u32 %v1829, 2147483648
        %v2040 = vxor.u32 %v1831, 2147483648
        %v2041 = vxor.u32 %v1833, 2147483648
        %v2042 = vxor.u32 %v1835, 2147483648
        %v2043 = vxor.u32 %v1839, 2147483648
        %v2044 = vxor.u32 %v1841, 2147483648
        %v2045 = vxor.u32 %v1843, 2147483648
        %v2046 = vxor.u32 %v1845, 2147483648
        %v2047 = vxor.u32 %v1849, 2147483648
        %v2048 = vxor.u32 %v1851, 2147483648
        %v2049 = vxor.u32 %v1853, 2147483648
        %v2050 = vxor.u32 %v1855, 2147483648
        %v2051 = vxor.u32 %v1859, 2147483648
        %v2052 = vxor.u32 %v1861, 2147483648
        %v2053 = vxor.u32 %v1863, 2147483648
        %v2054 = vxor.u32 %v1865, 2147483648
        %v2055 = vxor.u32 %v1869, 2147483648
        %v2056 = vxor.u32 %v1871, 2147483648
        %v2057 = vxor.u32 %v1873, 2147483648
        %v2058 = vxor.u32 %v1875, 2147483648
        %v2059 = vxor.u32 %v1879, 2147483648
        %v2060 = vxor.u32 %v1881, 2147483648
        %v2061 = vxor.u32 %v1883, 2147483648
        %v2062 = vxor.u32 %v1885, 2147483648
        %v2063 = vxor.u32 %v1889, 2147483648
        %v2064 = vxor.u32 %v1891, 2147483648
        %v2065 = vxor.u32 %v1893, 2147483648
        %v2066 = vxor.u32 %v1895, 2147483648
        %v2067 = vxor.u32 %v1899, 2147483648
        %v2068 = vxor.u32 %v1901, 2147483648
        %v2069 = vxor.u32 %v1903, 2147483648
        %v2070 = vxor.u32 %v1905, 2147483648
        %v2071 = vxor.u32 %v1909, 2147483648
        %v2072 = vxor.u32 %v1911, 2147483648
        %v2073 = vxor.u32 %v1913, 2147483648
        %v2074 = vxor.u32 %v1915, 2147483648
        %v2075 = vxor.u32 %v1919, 2147483648
        %v2076 = vxor.u32 %v1921, 2147483648
        %v2077 = vxor.u32 %v1923, 2147483648
        %v2078 = vxor.u32 %v1925, 2147483648
        %v2079 = vxor.u32 %v1929, 2147483648
        %v2080 = vxor.u32 %v1931, 2147483648
        %v2081 = vxor.u32 %v1933, 2147483648
        %v2082 = vxor.u32 %v1935, 2147483648
        %v2083 = vxor.u32 %v1939, 2147483648
        %v2084 = vxor.u32 %v1941, 2147483648
        %v2085 = vxor.u32 %v1943, 2147483648
        %v2086 = vxor.u32 %v1945, 2147483648
        %v2087 = vxor.u32 %v1949, 2147483648
        %v2088 = vxor.u32 %v1951, 2147483648
        %v2089 = vxor.u32 %v1953, 2147483648
        %v2090 = vxor.u32 %v1955, 2147483648
        %v2091 = vxor.u32 %v1959, 2147483648
        %v2092 = vxor.u32 %v1961, 2147483648
        %v2093 = vxor.u32 %v1963, 2147483648
        %v2094 = vxor.u32 %v1965, 2147483648
        %v2095 = vmul.f32 %v1967, 1.442695
        %v2096 = vpow.pop %v2095
        %v2097 = vmul.f32 %v1968, 1.442695
        %v2098 = vpow.pop %v2097
        %v2099 = vmul.f32 %v1969, 1.442695
        %v2100 = vpow.pop %v2099
        %v2101 = vmul.f32 %v1970, 1.442695
        %v2102 = vpow.pop %v2101
        %v2103 = vmul.f32 %v1971, 1.442695
        %v2104 = vpow.pop %v2103
        %v2105 = vmul.f32 %v1972, 1.442695
        %v2106 = vpow.pop %v2105
        %v2107 = vmul.f32 %v1973, 1.442695
        %v2108 = vpow.pop %v2107
        %v2109 = vmul.f32 %v1974, 1.442695
        %v2110 = vpow.pop %v2109
        %v2111 = vmul.f32 %v1975, 1.442695
        %v2112 = vpow.pop %v2111
        %v2113 = vmul.f32 %v1976, 1.442695
        %v2114 = vpow.pop %v2113
        %v2115 = vmul.f32 %v1977, 1.442695
        %v2116 = vpow.pop %v2115
        %v2117 = vmul.f32 %v1978, 1.442695
        %v2118 = vpow.pop %v2117
        %v2119 = vmul.f32 %v1979, 1.442695
        %v2120 = vpow.pop %v2119
        %v2121 = vmul.f32 %v1980, 1.442695
        %v2122 = vpow.pop %v2121
        %v2123 = vmul.f32 %v1981, 1.442695
        %v2124 = vpow.pop %v2123
        %v2125 = vmul.f32 %v1982, 1.442695
        %v2126 = vpow.pop %v2125
        %v2127 = vmul.f32 %v1983, 1.442695
        %v2128 = vpow.pop %v2127
        %v2129 = vmul.f32 %v1984, 1.442695
        %v2130 = vpow.pop %v2129
        %v2131 = vmul.f32 %v1985, 1.442695
        %v2132 = vpow.pop %v2131
        %v2133 = vmul.f32 %v1986, 1.442695
        %v2134 = vpow.pop %v2133
        %v2135 = vmul.f32 %v1987, 1.442695
        %v2136 = vpow.pop %v2135
        %v2137 = vmul.f32 %v1988, 1.442695
        %v2138 = vpow.pop %v2137
        %v2139 = vmul.f32 %v1989, 1.442695
        %v2140 = vpow.pop %v2139
        %v2141 = vmul.f32 %v1990, 1.442695
        %v2142 = vpow.pop %v2141
        %v2143 = vmul.f32 %v1991, 1.442695
        %v2144 = vpow.pop %v2143
        %v2145 = vmul.f32 %v1992, 1.442695
        %v2146 = vpow.pop %v2145
        %v2147 = vmul.f32 %v1993, 1.442695
        %v2148 = vpow.pop %v2147
        %v2149 = vmul.f32 %v1994, 1.442695
        %v2150 = vpow.pop %v2149
        %v2151 = vmul.f32 %v1995, 1.442695
        %v2152 = vpow.pop %v2151
        %v2153 = vmul.f32 %v1996, 1.442695
        %v2154 = vpow.pop %v2153
        %v2155 = vmul.f32 %v1997, 1.442695
        %v2156 = vpow.pop %v2155
        %v2157 = vmul.f32 %v1998, 1.442695
        %v2158 = vpow.pop %v2157
        %v2159 = vmul.f32 %v1999, 1.442695
        %v2160 = vpow.pop %v2159
        %v2161 = vmul.f32 %v2000, 1.442695
        %v2162 = vpow.pop %v2161
        %v2163 = vmul.f32 %v2001, 1.442695
        %v2164 = vpow.pop %v2163
        %v2165 = vmul.f32 %v2002, 1.442695
        %v2166 = vpow.pop %v2165
        %v2167 = vmul.f32 %v2003, 1.442695
        %v2168 = vpow.pop %v2167
        %v2169 = vmul.f32 %v2004, 1.442695
        %v2170 = vpow.pop %v2169
        %v2171 = vmul.f32 %v2005, 1.442695
        %v2172 = vpow.pop %v2171
        %v2173 = vmul.f32 %v2006, 1.442695
        %v2174 = vpow.pop %v2173
        %v2175 = vmul.f32 %v2007, 1.442695
        %v2176 = vpow.pop %v2175
        %v2177 = vmul.f32 %v2008, 1.442695
        %v2178 = vpow.pop %v2177
        %v2179 = vmul.f32 %v2009, 1.442695
        %v2180 = vpow.pop %v2179
        %v2181 = vmul.f32 %v2010, 1.442695
        %v2182 = vpow.pop %v2181
        %v2183 = vmul.f32 %v2011, 1.442695
        %v2184 = vpow.pop %v2183
        %v2185 = vmul.f32 %v2012, 1.442695
        %v2186 = vpow.pop %v2185
        %v2187 = vmul.f32 %v2013, 1.442695
        %v2188 = vpow.pop %v2187
        %v2189 = vmul.f32 %v2014, 1.442695
        %v2190 = vpow.pop %v2189
        %v2191 = vmul.f32 %v2015, 1.442695
        %v2192 = vpow.pop %v2191
        %v2193 = vmul.f32 %v2016, 1.442695
        %v2194 = vpow.pop %v2193
        %v2195 = vmul.f32 %v2017, 1.442695
        %v2196 = vpow.pop %v2195
        %v2197 = vmul.f32 %v2018, 1.442695
        %v2198 = vpow.pop %v2197
        %v2199 = vmul.f32 %v2019, 1.442695
        %v2200 = vpow.pop %v2199
        %v2201 = vmul.f32 %v2020, 1.442695
        %v2202 = vpow.pop %v2201
        %v2203 = vmul.f32 %v2021, 1.442695
        %v2204 = vpow.pop %v2203
        %v2205 = vmul.f32 %v2022, 1.442695
        %v2206 = vpow.pop %v2205
        %v2207 = vmul.f32 %v2023, 1.442695
        %v2208 = vpow.pop %v2207
        %v2209 = vmul.f32 %v2024, 1.442695
        %v2210 = vpow.pop %v2209
        %v2211 = vmul.f32 %v2025, 1.442695
        %v2212 = vpow.pop %v2211
        %v2213 = vmul.f32 %v2026, 1.442695
        %v2214 = vpow.pop %v2213
        %v2215 = vmul.f32 %v2027, 1.442695
        %v2216 = vpow.pop %v2215
        %v2217 = vmul.f32 %v2028, 1.442695
        %v2218 = vpow.pop %v2217
        %v2219 = vmul.f32 %v2029, 1.442695
        %v2220 = vpow.pop %v2219
        %v2221 = vmul.f32 %v2030, 1.442695
        %v2222 = vpow.pop %v2221
        %v2223 = vmul.f32 %v2031, 1.442695
        %v2224 = vpow.pop %v2223
        %v2225 = vmul.f32 %v2032, 1.442695
        %v2226 = vpow.pop %v2225
        %v2227 = vmul.f32 %v2033, 1.442695
        %v2228 = vpow.pop %v2227
        %v2229 = vmul.f32 %v2034, 1.442695
        %v2230 = vpow.pop %v2229
        %v2231 = vmul.f32 %v2035, 1.442695
        %v2232 = vpow.pop %v2231
        %v2233 = vmul.f32 %v2036, 1.442695
        %v2234 = vpow.pop %v2233
        %v2235 = vmul.f32 %v2037, 1.442695
        %v2236 = vpow.pop %v2235
        %v2237 = vmul.f32 %v2038, 1.442695
        %v2238 = vpow.pop %v2237
        %v2239 = vmul.f32 %v2039, 1.442695
        %v2240 = vpow.pop %v2239
        %v2241 = vmul.f32 %v2040, 1.442695
        %v2242 = vpow.pop %v2241
        %v2243 = vmul.f32 %v2041, 1.442695
        %v2244 = vpow.pop %v2243
        %v2245 = vmul.f32 %v2042, 1.442695
        %v2246 = vpow.pop %v2245
        %v2247 = vmul.f32 %v2043, 1.442695
        %v2248 = vpow.pop %v2247
        %v2249 = vmul.f32 %v2044, 1.442695
        %v2250 = vpow.pop %v2249
        %v2251 = vmul.f32 %v2045, 1.442695
        %v2252 = vpow.pop %v2251
        %v2253 = vmul.f32 %v2046, 1.442695
        %v2254 = vpow.pop %v2253
        %v2255 = vmul.f32 %v2047, 1.442695
        %v2256 = vpow.pop %v2255
        %v2257 = vmul.f32 %v2048, 1.442695
        %v2258 = vpow.pop %v2257
        %v2259 = vmul.f32 %v2049, 1.442695
        %v2260 = vpow.pop %v2259
        %v2261 = vmul.f32 %v2050, 1.442695
        %v2262 = vpow.pop %v2261
        %v2263 = vmul.f32 %v2051, 1.442695
        %v2264 = vpow.pop %v2263
        %v2265 = vmul.f32 %v2052, 1.442695
        %v2266 = vpow.pop %v2265
        %v2267 = vmul.f32 %v2053, 1.442695
        %v2268 = vpow.pop %v2267
        %v2269 = vmul.f32 %v2054, 1.442695
        %v2270 = vpow.pop %v2269
        %v2271 = vmul.f32 %v2055, 1.442695
        %v2272 = vpow.pop %v2271
        %v2273 = vmul.f32 %v2056, 1.442695
        %v2274 = vpow.pop %v2273
        %v2275 = vmul.f32 %v2057, 1.442695
        %v2276 = vpow.pop %v2275
        %v2277 = vmul.f32 %v2058, 1.442695
        %v2278 = vpow.pop %v2277
        %v2279 = vmul.f32 %v2059, 1.442695
        %v2280 = vpow.pop %v2279
        %v2281 = vmul.f32 %v2060, 1.442695
        %v2282 = vpow.pop %v2281
        %v2283 = vmul.f32 %v2061, 1.442695
        %v2284 = vpow.pop %v2283
        %v2285 = vmul.f32 %v2062, 1.442695
        %v2286 = vpow.pop %v2285
        %v2287 = vmul.f32 %v2063, 1.442695
        %v2288 = vpow.pop %v2287
        %v2289 = vmul.f32 %v2064, 1.442695
        %v2290 = vpow.pop %v2289
        %v2291 = vmul.f32 %v2065, 1.442695
        %v2292 = vpow.pop %v2291
        %v2293 = vmul.f32 %v2066, 1.442695
        %v2294 = vpow.pop %v2293
        %v2295 = vmul.f32 %v2067, 1.442695
        %v2296 = vpow.pop %v2295
        %v2297 = vmul.f32 %v2068, 1.442695
        %v2298 = vpow.pop %v2297
        %v2299 = vmul.f32 %v2069, 1.442695
        %v2300 = vpow.pop %v2299
        %v2301 = vmul.f32 %v2070, 1.442695
        %v2302 = vpow.pop %v2301
        %v2303 = vmul.f32 %v2071, 1.442695
        %v2304 = vpow.pop %v2303
        %v2305 = vmul.f32 %v2072, 1.442695
        %v2306 = vpow.pop %v2305
        %v2307 = vmul.f32 %v2073, 1.442695
        %v2308 = vpow.pop %v2307
        %v2309 = vmul.f32 %v2074, 1.442695
        %v2310 = vpow.pop %v2309
        %v2311 = vmul.f32 %v2075, 1.442695
        %v2312 = vpow.pop %v2311
        %v2313 = vmul.f32 %v2076, 1.442695
        %v2314 = vpow.pop %v2313
        %v2315 = vmul.f32 %v2077, 1.442695
        %v2316 = vpow.pop %v2315
        %v2317 = vmul.f32 %v2078, 1.442695
        %v2318 = vpow.pop %v2317
        %v2319 = vmul.f32 %v2079, 1.442695
        %v2320 = vpow.pop %v2319
        %v2321 = vmul.f32 %v2080, 1.442695
        %v2322 = vpow.pop %v2321
        %v2323 = vmul.f32 %v2081, 1.442695
        %v2324 = vpow.pop %v2323
        %v2325 = vmul.f32 %v2082, 1.442695
        %v2326 = vpow.pop %v2325
        %v2327 = vmul.f32 %v2083, 1.442695
        %v2328 = vpow.pop %v2327
        %v2329 = vmul.f32 %v2084, 1.442695
        %v2330 = vpow.pop %v2329
        %v2331 = vmul.f32 %v2085, 1.442695
        %v2332 = vpow.pop %v2331
        %v2333 = vmul.f32 %v2086, 1.442695
        %v2334 = vpow.pop %v2333
        %v2335 = vmul.f32 %v2087, 1.442695
        %v2336 = vpow.pop %v2335
        %v2337 = vmul.f32 %v2088, 1.442695
        %v2338 = vpow.pop %v2337
        %v2339 = vmul.f32 %v2089, 1.442695
        %v2340 = vpow.pop %v2339
        %v2341 = vmul.f32 %v2090, 1.442695
        %v2342 = vpow.pop %v2341
        %v2343 = vmul.f32 %v2091, 1.442695
        %v2344 = vpow.pop %v2343
        %v2345 = vmul.f32 %v2092, 1.442695
        %v2346 = vpow.pop %v2345
        %v2347 = vmul.f32 %v2093, 1.442695
        %v2348 = vpow.pop %v2347
        %v2349 = vmul.f32 %v2094, 1.442695
        %v2350 = vpow.pop %v2349
        %v2351 = vadd.f32 %v2096, 1.0
        %v2352 = vadd.f32 %v2098, 1.0
        %v2353 = vadd.f32 %v2100, 1.0
        %v2354 = vadd.f32 %v2102, 1.0
        %v2355 = vadd.f32 %v2104, 1.0
        %v2356 = vadd.f32 %v2106, 1.0
        %v2357 = vadd.f32 %v2108, 1.0
        %v2358 = vadd.f32 %v2110, 1.0
        %v2359 = vadd.f32 %v2112, 1.0
        %v2360 = vadd.f32 %v2114, 1.0
        %v2361 = vadd.f32 %v2116, 1.0
        %v2362 = vadd.f32 %v2118, 1.0
        %v2363 = vadd.f32 %v2120, 1.0
        %v2364 = vadd.f32 %v2122, 1.0
        %v2365 = vadd.f32 %v2124, 1.0
        %v2366 = vadd.f32 %v2126, 1.0
        %v2367 = vadd.f32 %v2128, 1.0
        %v2368 = vadd.f32 %v2130, 1.0
        %v2369 = vadd.f32 %v2132, 1.0
        %v2370 = vadd.f32 %v2134, 1.0
        %v2371 = vadd.f32 %v2136, 1.0
        %v2372 = vadd.f32 %v2138, 1.0
        %v2373 = vadd.f32 %v2140, 1.0
        %v2374 = vadd.f32 %v2142, 1.0
        %v2375 = vadd.f32 %v2144, 1.0
        %v2376 = vadd.f32 %v2146, 1.0
        %v2377 = vadd.f32 %v2148, 1.0
        %v2378 = vadd.f32 %v2150, 1.0
        %v2379 = vadd.f32 %v2152, 1.0
        %v2380 = vadd.f32 %v2154, 1.0
        %v2381 = vadd.f32 %v2156, 1.0
        %v2382 = vadd.f32 %v2158, 1.0
        %v2383 = vadd.f32 %v2160, 1.0
        %v2384 = vadd.f32 %v2162, 1.0
        %v2385 = vadd.f32 %v2164, 1.0
        %v2386 = vadd.f32 %v2166, 1.0
        %v2387 = vadd.f32 %v2168, 1.0
        %v2388 = vadd.f32 %v2170, 1.0
        %v2389 = vadd.f32 %v2172, 1.0
        %v2390 = vadd.f32 %v2174, 1.0
        %v2391 = vadd.f32 %v2176, 1.0
        %v2392 = vadd.f32 %v2178, 1.0
        %v2393 = vadd.f32 %v2180, 1.0
        %v2394 = vadd.f32 %v2182, 1.0
        %v2395 = vadd.f32 %v2184, 1.0
        %v2396 = vadd.f32 %v2186, 1.0
        %v2397 = vadd.f32 %v2188, 1.0
        %v2398 = vadd.f32 %v2190, 1.0
        %v2399 = vadd.f32 %v2192, 1.0
        %v2400 = vadd.f32 %v2194, 1.0
        %v2401 = vadd.f32 %v2196, 1.0
        %v2402 = vadd.f32 %v2198, 1.0
        %v2403 = vadd.f32 %v2200, 1.0
        %v2404 = vadd.f32 %v2202, 1.0
        %v2405 = vadd.f32 %v2204, 1.0
        %v2406 = vadd.f32 %v2206, 1.0
        %v2407 = vadd.f32 %v2208, 1.0
        %v2408 = vadd.f32 %v2210, 1.0
        %v2409 = vadd.f32 %v2212, 1.0
        %v2410 = vadd.f32 %v2214, 1.0
        %v2411 = vadd.f32 %v2216, 1.0
        %v2412 = vadd.f32 %v2218, 1.0
        %v2413 = vadd.f32 %v2220, 1.0
        %v2414 = vadd.f32 %v2222, 1.0
        %v2415 = vadd.f32 %v2224, 1.0
        %v2416 = vadd.f32 %v2226, 1.0
        %v2417 = vadd.f32 %v2228, 1.0
        %v2418 = vadd.f32 %v2230, 1.0
        %v2419 = vadd.f32 %v2232, 1.0
        %v2420 = vadd.f32 %v2234, 1.0
        %v2421 = vadd.f32 %v2236, 1.0
        %v2422 = vadd.f32 %v2238, 1.0
        %v2423 = vadd.f32 %v2240, 1.0
        %v2424 = vadd.f32 %v2242, 1.0
        %v2425 = vadd.f32 %v2244, 1.0
        %v2426 = vadd.f32 %v2246, 1.0
        %v2427 = vadd.f32 %v2248, 1.0
        %v2428 = vadd.f32 %v2250, 1.0
        %v2429 = vadd.f32 %v2252, 1.0
        %v2430 = vadd.f32 %v2254, 1.0
        %v2431 = vadd.f32 %v2256, 1.0
        %v2432 = vadd.f32 %v2258, 1.0
        %v2433 = vadd.f32 %v2260, 1.0
        %v2434 = vadd.f32 %v2262, 1.0
        %v2435 = vadd.f32 %v2264, 1.0
        %v2436 = vadd.f32 %v2266, 1.0
        %v2437 = vadd.f32 %v2268, 1.0
        %v2438 = vadd.f32 %v2270, 1.0
        %v2439 = vadd.f32 %v2272, 1.0
        %v2440 = vadd.f32 %v2274, 1.0
        %v2441 = vadd.f32 %v2276, 1.0
        %v2442 = vadd.f32 %v2278, 1.0
        %v2443 = vadd.f32 %v2280, 1.0
        %v2444 = vadd.f32 %v2282, 1.0
        %v2445 = vadd.f32 %v2284, 1.0
        %v2446 = vadd.f32 %v2286, 1.0
        %v2447 = vadd.f32 %v2288, 1.0
        %v2448 = vadd.f32 %v2290, 1.0
        %v2449 = vadd.f32 %v2292, 1.0
        %v2450 = vadd.f32 %v2294, 1.0
        %v2451 = vadd.f32 %v2296, 1.0
        %v2452 = vadd.f32 %v2298, 1.0
        %v2453 = vadd.f32 %v2300, 1.0
        %v2454 = vadd.f32 %v2302, 1.0
        %v2455 = vadd.f32 %v2304, 1.0
        %v2456 = vadd.f32 %v2306, 1.0
        %v2457 = vadd.f32 %v2308, 1.0
        %v2458 = vadd.f32 %v2310, 1.0
        %v2459 = vadd.f32 %v2312, 1.0
        %v2460 = vadd.f32 %v2314, 1.0
        %v2461 = vadd.f32 %v2316, 1.0
        %v2462 = vadd.f32 %v2318, 1.0
        %v2463 = vadd.f32 %v2320, 1.0
        %v2464 = vadd.f32 %v2322, 1.0
        %v2465 = vadd.f32 %v2324, 1.0
        %v2466 = vadd.f32 %v2326, 1.0
        %v2467 = vadd.f32 %v2328, 1.0
        %v2468 = vadd.f32 %v2330, 1.0
        %v2469 = vadd.f32 %v2332, 1.0
        %v2470 = vadd.f32 %v2334, 1.0
        %v2471 = vadd.f32 %v2336, 1.0
        %v2472 = vadd.f32 %v2338, 1.0
        %v2473 = vadd.f32 %v2340, 1.0
        %v2474 = vadd.f32 %v2342, 1.0
        %v2475 = vadd.f32 %v2344, 1.0
        %v2476 = vadd.f32 %v2346, 1.0
        %v2477 = vadd.f32 %v2348, 1.0
        %v2478 = vadd.f32 %v2350, 1.0
        %v2479 = vrcp.pop %v2351
        %v2480 = vmul.f32 1.0, %v2479
        %v2481 = vrcp.pop %v2352
        %v2482 = vmul.f32 1.0, %v2481
        %v2483 = vrcp.pop %v2353
        %v2484 = vmul.f32 1.0, %v2483
        %v2485 = vrcp.pop %v2354
        %v2486 = vmul.f32 1.0, %v2485
        %v2487 = vrcp.pop %v2355
        %v2488 = vmul.f32 1.0, %v2487
        %v2489 = vrcp.pop %v2356
        %v2490 = vmul.f32 1.0, %v2489
        %v2491 = vrcp.pop %v2357
        %v2492 = vmul.f32 1.0, %v2491
        %v2493 = vrcp.pop %v2358
        %v2494 = vmul.f32 1.0, %v2493
        %v2495 = vrcp.pop %v2359
        %v2496 = vmul.f32 1.0, %v2495
        %v2497 = vrcp.pop %v2360
        %v2498 = vmul.f32 1.0, %v2497
        %v2499 = vrcp.pop %v2361
        %v2500 = vmul.f32 1.0, %v2499
        %v2501 = vrcp.pop %v2362
        %v2502 = vmul.f32 1.0, %v2501
        %v2503 = vrcp.pop %v2363
        %v2504 = vmul.f32 1.0, %v2503
        %v2505 = vrcp.pop %v2364
        %v2506 = vmul.f32 1.0, %v2505
        %v2507 = vrcp.pop %v2365
        %v2508 = vmul.f32 1.0, %v2507
        %v2509 = vrcp.pop %v2366
        %v2510 = vmul.f32 1.0, %v2509
        %v2511 = vrcp.pop %v2367
        %v2512 = vmul.f32 1.0, %v2511
        %v2513 = vrcp.pop %v2368
        %v2514 = vmul.f32 1.0, %v2513
        %v2515 = vrcp.pop %v2369
        %v2516 = vmul.f32 1.0, %v2515
        %v2517 = vrcp.pop %v2370
        %v2518 = vmul.f32 1.0, %v2517
        %v2519 = vrcp.pop %v2371
        %v2520 = vmul.f32 1.0, %v2519
        %v2521 = vrcp.pop %v2372
        %v2522 = vmul.f32 1.0, %v2521
        %v2523 = vrcp.pop %v2373
        %v2524 = vmul.f32 1.0, %v2523
        %v2525 = vrcp.pop %v2374
        %v2526 = vmul.f32 1.0, %v2525
        %v2527 = vrcp.pop %v2375
        %v2528 = vmul.f32 1.0, %v2527
        %v2529 = vrcp.pop %v2376
        %v2530 = vmul.f32 1.0, %v2529
        %v2531 = vrcp.pop %v2377
        %v2532 = vmul.f32 1.0, %v2531
        %v2533 = vrcp.pop %v2378
        %v2534 = vmul.f32 1.0, %v2533
        %v2535 = vrcp.pop %v2379
        %v2536 = vmul.f32 1.0, %v2535
        %v2537 = vrcp.pop %v2380
        %v2538 = vmul.f32 1.0, %v2537
        %v2539 = vrcp.pop %v2381
        %v2540 = vmul.f32 1.0, %v2539
        %v2541 = vrcp.pop %v2382
        %v2542 = vmul.f32 1.0, %v2541
        %v2543 = vrcp.pop %v2383
        %v2544 = vmul.f32 1.0, %v2543
        %v2545 = vrcp.pop %v2384
        %v2546 = vmul.f32 1.0, %v2545
        %v2547 = vrcp.pop %v2385
        %v2548 = vmul.f32 1.0, %v2547
        %v2549 = vrcp.pop %v2386
        %v2550 = vmul.f32 1.0, %v2549
        %v2551 = vrcp.pop %v2387
        %v2552 = vmul.f32 1.0, %v2551
        %v2553 = vrcp.pop %v2388
        %v2554 = vmul.f32 1.0, %v2553
        %v2555 = vrcp.pop %v2389
        %v2556 = vmul.f32 1.0, %v2555
        %v2557 = vrcp.pop %v2390
        %v2558 = vmul.f32 1.0, %v2557
        %v2559 = vrcp.pop %v2391
        %v2560 = vmul.f32 1.0, %v2559
        %v2561 = vrcp.pop %v2392
        %v2562 = vmul.f32 1.0, %v2561
        %v2563 = vrcp.pop %v2393
        %v2564 = vmul.f32 1.0, %v2563
        %v2565 = vrcp.pop %v2394
        %v2566 = vmul.f32 1.0, %v2565
        %v2567 = vrcp.pop %v2395
        %v2568 = vmul.f32 1.0, %v2567
        %v2569 = vrcp.pop %v2396
        %v2570 = vmul.f32 1.0, %v2569
        %v2571 = vrcp.pop %v2397
        %v2572 = vmul.f32 1.0, %v2571
        %v2573 = vrcp.pop %v2398
        %v2574 = vmul.f32 1.0, %v2573
        %v2575 = vrcp.pop %v2399
        %v2576 = vmul.f32 1.0, %v2575
        %v2577 = vrcp.pop %v2400
        %v2578 = vmul.f32 1.0, %v2577
        %v2579 = vrcp.pop %v2401
        %v2580 = vmul.f32 1.0, %v2579
        %v2581 = vrcp.pop %v2402
        %v2582 = vmul.f32 1.0, %v2581
        %v2583 = vrcp.pop %v2403
        %v2584 = vmul.f32 1.0, %v2583
        %v2585 = vrcp.pop %v2404
        %v2586 = vmul.f32 1.0, %v2585
        %v2587 = vrcp.pop %v2405
        %v2588 = vmul.f32 1.0, %v2587
        %v2589 = vrcp.pop %v2406
        %v2590 = vmul.f32 1.0, %v2589
        %v2591 = vrcp.pop %v2407
        %v2592 = vmul.f32 1.0, %v2591
        %v2593 = vrcp.pop %v2408
        %v2594 = vmul.f32 1.0, %v2593
        %v2595 = vrcp.pop %v2409
        %v2596 = vmul.f32 1.0, %v2595
        %v2597 = vrcp.pop %v2410
        %v2598 = vmul.f32 1.0, %v2597
        %v2599 = vrcp.pop %v2411
        %v2600 = vmul.f32 1.0, %v2599
        %v2601 = vrcp.pop %v2412
        %v2602 = vmul.f32 1.0, %v2601
        %v2603 = vrcp.pop %v2413
        %v2604 = vmul.f32 1.0, %v2603
        %v2605 = vrcp.pop %v2414
        %v2606 = vmul.f32 1.0, %v2605
        %v2607 = vrcp.pop %v2415
        %v2608 = vmul.f32 1.0, %v2607
        %v2609 = vrcp.pop %v2416
        %v2610 = vmul.f32 1.0, %v2609
        %v2611 = vrcp.pop %v2417
        %v2612 = vmul.f32 1.0, %v2611
        %v2613 = vrcp.pop %v2418
        %v2614 = vmul.f32 1.0, %v2613
        %v2615 = vrcp.pop %v2419
        %v2616 = vmul.f32 1.0, %v2615
        %v2617 = vrcp.pop %v2420
        %v2618 = vmul.f32 1.0, %v2617
        %v2619 = vrcp.pop %v2421
        %v2620 = vmul.f32 1.0, %v2619
        %v2621 = vrcp.pop %v2422
        %v2622 = vmul.f32 1.0, %v2621
        %v2623 = vrcp.pop %v2423
        %v2624 = vmul.f32 1.0, %v2623
        %v2625 = vrcp.pop %v2424
        %v2626 = vmul.f32 1.0, %v2625
        %v2627 = vrcp.pop %v2425
        %v2628 = vmul.f32 1.0, %v2627
        %v2629 = vrcp.pop %v2426
        %v2630 = vmul.f32 1.0, %v2629
        %v2631 = vrcp.pop %v2427
        %v2632 = vmul.f32 1.0, %v2631
        %v2633 = vrcp.pop %v2428
        %v2634 = vmul.f32 1.0, %v2633
        %v2635 = vrcp.pop %v2429
        %v2636 = vmul.f32 1.0, %v2635
        %v2637 = vrcp.pop %v2430
        %v2638 = vmul.f32 1.0, %v2637
        %v2639 = vrcp.pop %v2431
        %v2640 = vmul.f32 1.0, %v2639
        %v2641 = vrcp.pop %v2432
        %v2642 = vmul.f32 1.0, %v2641
        %v2643 = vrcp.pop %v2433
        %v2644 = vmul.f32 1.0, %v2643
        %v2645 = vrcp.pop %v2434
        %v2646 = vmul.f32 1.0, %v2645
        %v2647 = vrcp.pop %v2435
        %v2648 = vmul.f32 1.0, %v2647
        %v2649 = vrcp.pop %v2436
        %v2650 = vmul.f32 1.0, %v2649
        %v2651 = vrcp.pop %v2437
        %v2652 = vmul.f32 1.0, %v2651
        %v2653 = vrcp.pop %v2438
        %v2654 = vmul.f32 1.0, %v2653
        %v2655 = vrcp.pop %v2439
        %v2656 = vmul.f32 1.0, %v2655
        %v2657 = vrcp.pop %v2440
        %v2658 = vmul.f32 1.0, %v2657
        %v2659 = vrcp.pop %v2441
        %v2660 = vmul.f32 1.0, %v2659
        %v2661 = vrcp.pop %v2442
        %v2662 = vmul.f32 1.0, %v2661
        %v2663 = vrcp.pop %v2443
        %v2664 = vmul.f32 1.0, %v2663
        %v2665 = vrcp.pop %v2444
        %v2666 = vmul.f32 1.0, %v2665
        %v2667 = vrcp.pop %v2445
        %v2668 = vmul.f32 1.0, %v2667
        %v2669 = vrcp.pop %v2446
        %v2670 = vmul.f32 1.0, %v2669
        %v2671 = vrcp.pop %v2447
        %v2672 = vmul.f32 1.0, %v2671
        %v2673 = vrcp.pop %v2448
        %v2674 = vmul.f32 1.0, %v2673
        %v2675 = vrcp.pop %v2449
        %v2676 = vmul.f32 1.0, %v2675
        %v2677 = vrcp.pop %v2450
        %v2678 = vmul.f32 1.0, %v2677
        %v2679 = vrcp.pop %v2451
        %v2680 = vmul.f32 1.0, %v2679
        %v2681 = vrcp.pop %v2452
        %v2682 = vmul.f32 1.0, %v2681
        %v2683 = vrcp.pop %v2453
        %v2684 = vmul.f32 1.0, %v2683
        %v2685 = vrcp.pop %v2454
        %v2686 = vmul.f32 1.0, %v2685
        %v2687 = vrcp.pop %v2455
        %v2688 = vmul.f32 1.0, %v2687
        %v2689 = vrcp.pop %v2456
        %v2690 = vmul.f32 1.0, %v2689
        %v2691 = vrcp.pop %v2457
        %v2692 = vmul.f32 1.0, %v2691
        %v2693 = vrcp.pop %v2458
        %v2694 = vmul.f32 1.0, %v2693
        %v2695 = vrcp.pop %v2459
        %v2696 = vmul.f32 1.0, %v2695
        %v2697 = vrcp.pop %v2460
        %v2698 = vmul.f32 1.0, %v2697
        %v2699 = vrcp.pop %v2461
        %v2700 = vmul.f32 1.0, %v2699
        %v2701 = vrcp.pop %v2462
        %v2702 = vmul.f32 1.0, %v2701
        %v2703 = vrcp.pop %v2463
        %v2704 = vmul.f32 1.0, %v2703
        %v2705 = vrcp.pop %v2464
        %v2706 = vmul.f32 1.0, %v2705
        %v2707 = vrcp.pop %v2465
        %v2708 = vmul.f32 1.0, %v2707
        %v2709 = vrcp.pop %v2466
        %v2710 = vmul.f32 1.0, %v2709
        %v2711 = vrcp.pop %v2467
        %v2712 = vmul.f32 1.0, %v2711
        %v2713 = vrcp.pop %v2468
        %v2714 = vmul.f32 1.0, %v2713
        %v2715 = vrcp.pop %v2469
        %v2716 = vmul.f32 1.0, %v2715
        %v2717 = vrcp.pop %v2470
        %v2718 = vmul.f32 1.0, %v2717
        %v2719 = vrcp.pop %v2471
        %v2720 = vmul.f32 1.0, %v2719
        %v2721 = vrcp.pop %v2472
        %v2722 = vmul.f32 1.0, %v2721
        %v2723 = vrcp.pop %v2473
        %v2724 = vmul.f32 1.0, %v2723
        %v2725 = vrcp.pop %v2474
        %v2726 = vmul.f32 1.0, %v2725
        %v2727 = vrcp.pop %v2475
        %v2728 = vmul.f32 1.0, %v2727
        %v2729 = vrcp.pop %v2476
        %v2730 = vmul.f32 1.0, %v2729
        %v2731 = vrcp.pop %v2477
        %v2732 = vmul.f32 1.0, %v2731
        %v2733 = vrcp.pop %v2478
        %v2734 = vmul.f32 1.0, %v2733
        %v2735 = vtanh.pop %v1651
        %v2736 = vtanh.pop %v1655
        %v2737 = vtanh.pop %v1661
        %v2738 = vtanh.pop %v1665
        %v2739 = vtanh.pop %v1671
        %v2740 = vtanh.pop %v1675
        %v2741 = vtanh.pop %v1681
        %v2742 = vtanh.pop %v1685
        %v2743 = vtanh.pop %v1691
        %v2744 = vtanh.pop %v1695
        %v2745 = vtanh.pop %v1701
        %v2746 = vtanh.pop %v1705
        %v2747 = vtanh.pop %v1711
        %v2748 = vtanh.pop %v1715
        %v2749 = vtanh.pop %v1721
        %v2750 = vtanh.pop %v1725
        %v2751 = vtanh.pop %v1731
        %v2752 = vtanh.pop %v1735
        %v2753 = vtanh.pop %v1741
        %v2754 = vtanh.pop %v1745
        %v2755 = vtanh.pop %v1751
        %v2756 = vtanh.pop %v1755
        %v2757 = vtanh.pop %v1761
        %v2758 = vtanh.pop %v1765
        %v2759 = vtanh.pop %v1771
        %v2760 = vtanh.pop %v1775
        %v2761 = vtanh.pop %v1781
        %v2762 = vtanh.pop %v1785
        %v2763 = vtanh.pop %v1791
        %v2764 = vtanh.pop %v1795
        %v2765 = vtanh.pop %v1801
        %v2766 = vtanh.pop %v1805
        %v2767 = vtanh.pop %v1811
        %v2768 = vtanh.pop %v1815
        %v2769 = vtanh.pop %v1821
        %v2770 = vtanh.pop %v1825
        %v2771 = vtanh.pop %v1831
        %v2772 = vtanh.pop %v1835
        %v2773 = vtanh.pop %v1841
        %v2774 = vtanh.pop %v1845
        %v2775 = vtanh.pop %v1851
        %v2776 = vtanh.pop %v1855
        %v2777 = vtanh.pop %v1861
        %v2778 = vtanh.pop %v1865
        %v2779 = vtanh.pop %v1871
        %v2780 = vtanh.pop %v1875
        %v2781 = vtanh.pop %v1881
        %v2782 = vtanh.pop %v1885
        %v2783 = vtanh.pop %v1891
        %v2784 = vtanh.pop %v1895
        %v2785 = vtanh.pop %v1901
        %v2786 = vtanh.pop %v1905
        %v2787 = vtanh.pop %v1911
        %v2788 = vtanh.pop %v1915
        %v2789 = vtanh.pop %v1921
        %v2790 = vtanh.pop %v1925
        %v2791 = vtanh.pop %v1931
        %v2792 = vtanh.pop %v1935
        %v2793 = vtanh.pop %v1941
        %v2794 = vtanh.pop %v1945
        %v2795 = vtanh.pop %v1951
        %v2796 = vtanh.pop %v1955
        %v2797 = vtanh.pop %v1961
        %v2798 = vtanh.pop %v1965
        %v2799 = vld [vmem:[%s197] sm:$0xff]
        %v2800 = vld [vmem:[%s197 + $0x8] sm:$0xff]
        %v2801 = vld [vmem:[%s197 + $0x10] sm:$0xff]
        %v2802 = vld [vmem:[%s197 + $0x18] sm:$0xff]
        %v2803 = vld [vmem:[%s197 + $0x20] sm:$0xff]
        %v2804 = vld [vmem:[%s197 + $0x28] sm:$0xff]
        %v2805 = vld [vmem:[%s197 + $0x30] sm:$0xff]
        %v2806 = vld [vmem:[%s197 + $0x38] sm:$0xff]
        %v2807 = vld [vmem:[%s197 + $0x40] sm:$0xff]
        %v2808 = vld [vmem:[%s197 + $0x48] sm:$0xff]
        %v2809 = vld [vmem:[%s197 + $0x50] sm:$0xff]
        %v2810 = vld [vmem:[%s197 + $0x58] sm:$0xff]
        %v2811 = vld [vmem:[%s197 + $0x60] sm:$0xff]
        %v2812 = vld [vmem:[%s197 + $0x68] sm:$0xff]
        %v2813 = vld [vmem:[%s197 + $0x70] sm:$0xff]
        %v2814 = vld [vmem:[%s197 + $0x78] sm:$0xff]
        %v2815 = vld [vmem:[%s197 + $0x80] sm:$0xff]
        %v2816 = vld [vmem:[%s197 + $0x88] sm:$0xff]
        %v2817 = vld [vmem:[%s197 + $0x90] sm:$0xff]
        %v2818 = vld [vmem:[%s197 + $0x98] sm:$0xff]
        %v2819 = vld [vmem:[%s197 + $0xa0] sm:$0xff]
        %v2820 = vld [vmem:[%s197 + $0xa8] sm:$0xff]
        %v2821 = vld [vmem:[%s197 + $0xb0] sm:$0xff]
        %v2822 = vld [vmem:[%s197 + $0xb8] sm:$0xff]
        %v2823 = vld [vmem:[%s197 + $0xc0] sm:$0xff]
        %v2824 = vld [vmem:[%s197 + $0xc8] sm:$0xff]
        %v2825 = vld [vmem:[%s197 + $0xd0] sm:$0xff]
        %v2826 = vld [vmem:[%s197 + $0xd8] sm:$0xff]
        %v2827 = vld [vmem:[%s197 + $0xe0] sm:$0xff]
        %v2828 = vld [vmem:[%s197 + $0xe8] sm:$0xff]
        %v2829 = vld [vmem:[%s197 + $0xf0] sm:$0xff]
        %v2830 = vld [vmem:[%s197 + $0xf8] sm:$0xff]
        %v2831 = vld [vmem:[%s197 + $0x100] sm:$0xff]
        %v2832 = vld [vmem:[%s197 + $0x108] sm:$0xff]
        %v2833 = vld [vmem:[%s197 + $0x110] sm:$0xff]
        %v2834 = vld [vmem:[%s197 + $0x118] sm:$0xff]
        %v2835 = vld [vmem:[%s197 + $0x120] sm:$0xff]
        %v2836 = vld [vmem:[%s197 + $0x128] sm:$0xff]
        %v2837 = vld [vmem:[%s197 + $0x130] sm:$0xff]
        %v2838 = vld [vmem:[%s197 + $0x138] sm:$0xff]
        %v2839 = vld [vmem:[%s197 + $0x140] sm:$0xff]
        %v2840 = vld [vmem:[%s197 + $0x148] sm:$0xff]
        %v2841 = vld [vmem:[%s197 + $0x150] sm:$0xff]
        %v2842 = vld [vmem:[%s197 + $0x158] sm:$0xff]
        %v2843 = vld [vmem:[%s197 + $0x160] sm:$0xff]
        %v2844 = vld [vmem:[%s197 + $0x168] sm:$0xff]
        %v2845 = vld [vmem:[%s197 + $0x170] sm:$0xff]
        %v2846 = vld [vmem:[%s197 + $0x178] sm:$0xff]
        %v2847 = vld [vmem:[%s197 + $0x180] sm:$0xff]
        %v2848 = vld [vmem:[%s197 + $0x188] sm:$0xff]
        %v2849 = vld [vmem:[%s197 + $0x190] sm:$0xff]
        %v2850 = vld [vmem:[%s197 + $0x198] sm:$0xff]
        %v2851 = vld [vmem:[%s197 + $0x1a0] sm:$0xff]
        %v2852 = vld [vmem:[%s197 + $0x1a8] sm:$0xff]
        %v2853 = vld [vmem:[%s197 + $0x1b0] sm:$0xff]
        %v2854 = vld [vmem:[%s197 + $0x1b8] sm:$0xff]
        %v2855 = vld [vmem:[%s197 + $0x1c0] sm:$0xff]
        %v2856 = vld [vmem:[%s197 + $0x1c8] sm:$0xff]
        %v2857 = vld [vmem:[%s197 + $0x1d0] sm:$0xff]
        %v2858 = vld [vmem:[%s197 + $0x1d8] sm:$0xff]
        %v2859 = vld [vmem:[%s197 + $0x1e0] sm:$0xff]
        %v2860 = vld [vmem:[%s197 + $0x1e8] sm:$0xff]
        %v2861 = vld [vmem:[%s197 + $0x1f0] sm:$0xff]
        %v2862 = vld [vmem:[%s197 + $0x1f8] sm:$0xff]
        %2927 = vrot.lane.b32.xlu0 %v2799, 64
        %v2928 = vpop.permute.xlu0 %2927
        %2929 = vrot.lane.b32.xlu0 %v2800, 64
        %v2930 = vpop.permute.xlu0 %2929
        %2931 = vrot.lane.b32.xlu0 %v2801, 64
        %v2932 = vpop.permute.xlu0 %2931
        %2933 = vrot.lane.b32.xlu0 %v2802, 64
        %v2934 = vpop.permute.xlu0 %2933
        %2935 = vrot.lane.b32.xlu0 %v2803, 64
        %v2936 = vpop.permute.xlu0 %2935
        %2937 = vrot.lane.b32.xlu0 %v2804, 64
        %v2938 = vpop.permute.xlu0 %2937
        %2939 = vrot.lane.b32.xlu0 %v2805, 64
        %v2940 = vpop.permute.xlu0 %2939
        %2941 = vrot.lane.b32.xlu0 %v2806, 64
        %v2942 = vpop.permute.xlu0 %2941
        %2943 = vrot.lane.b32.xlu0 %v2807, 64
        %v2944 = vpop.permute.xlu0 %2943
        %2945 = vrot.lane.b32.xlu0 %v2808, 64
        %v2946 = vpop.permute.xlu0 %2945
        %2947 = vrot.lane.b32.xlu0 %v2809, 64
        %v2948 = vpop.permute.xlu0 %2947
        %2949 = vrot.lane.b32.xlu0 %v2810, 64
        %v2950 = vpop.permute.xlu0 %2949
        %2951 = vrot.lane.b32.xlu0 %v2811, 64
        %v2952 = vpop.permute.xlu0 %2951
        %2953 = vrot.lane.b32.xlu0 %v2812, 64
        %v2954 = vpop.permute.xlu0 %2953
        %2955 = vrot.lane.b32.xlu0 %v2813, 64
        %v2956 = vpop.permute.xlu0 %2955
        %2957 = vrot.lane.b32.xlu0 %v2814, 64
        %v2958 = vpop.permute.xlu0 %2957
        %2959 = vrot.lane.b32.xlu0 %v2815, 64
        %v2960 = vpop.permute.xlu0 %2959
        %2961 = vrot.lane.b32.xlu0 %v2816, 64
        %v2962 = vpop.permute.xlu0 %2961
        %2963 = vrot.lane.b32.xlu0 %v2817, 64
        %v2964 = vpop.permute.xlu0 %2963
        %2965 = vrot.lane.b32.xlu0 %v2818, 64
        %v2966 = vpop.permute.xlu0 %2965
        %2967 = vrot.lane.b32.xlu0 %v2819, 64
        %v2968 = vpop.permute.xlu0 %2967
        %2969 = vrot.lane.b32.xlu0 %v2820, 64
        %v2970 = vpop.permute.xlu0 %2969
        %2971 = vrot.lane.b32.xlu0 %v2821, 64
        %v2972 = vpop.permute.xlu0 %2971
        %2973 = vrot.lane.b32.xlu0 %v2822, 64
        %v2974 = vpop.permute.xlu0 %2973
        %2975 = vrot.lane.b32.xlu0 %v2823, 64
        %v2976 = vpop.permute.xlu0 %2975
        %2977 = vrot.lane.b32.xlu0 %v2824, 64
        %v2978 = vpop.permute.xlu0 %2977
        %2979 = vrot.lane.b32.xlu0 %v2825, 64
        %v2980 = vpop.permute.xlu0 %2979
        %2981 = vrot.lane.b32.xlu0 %v2826, 64
        %v2982 = vpop.permute.xlu0 %2981
        %2983 = vrot.lane.b32.xlu0 %v2827, 64
        %v2984 = vpop.permute.xlu0 %2983
        %2985 = vrot.lane.b32.xlu0 %v2828, 64
        %v2986 = vpop.permute.xlu0 %2985
        %2987 = vrot.lane.b32.xlu0 %v2829, 64
        %v2988 = vpop.permute.xlu0 %2987
        %2989 = vrot.lane.b32.xlu0 %v2830, 64
        %v2990 = vpop.permute.xlu0 %2989
        %2991 = vrot.lane.b32.xlu0 %v2831, 64
        %v2992 = vpop.permute.xlu0 %2991
        %2993 = vrot.lane.b32.xlu0 %v2832, 64
        %v2994 = vpop.permute.xlu0 %2993
        %2995 = vrot.lane.b32.xlu0 %v2833, 64
        %v2996 = vpop.permute.xlu0 %2995
        %2997 = vrot.lane.b32.xlu0 %v2834, 64
        %v2998 = vpop.permute.xlu0 %2997
        %2999 = vrot.lane.b32.xlu0 %v2835, 64
        %v3000 = vpop.permute.xlu0 %2999
        %3001 = vrot.lane.b32.xlu0 %v2836, 64
        %v3002 = vpop.permute.xlu0 %3001
        %3003 = vrot.lane.b32.xlu0 %v2837, 64
        %v3004 = vpop.permute.xlu0 %3003
        %3005 = vrot.lane.b32.xlu0 %v2838, 64
        %v3006 = vpop.permute.xlu0 %3005
        %3007 = vrot.lane.b32.xlu0 %v2839, 64
        %v3008 = vpop.permute.xlu0 %3007
        %3009 = vrot.lane.b32.xlu0 %v2840, 64
        %v3010 = vpop.permute.xlu0 %3009
        %3011 = vrot.lane.b32.xlu0 %v2841, 64
        %v3012 = vpop.permute.xlu0 %3011
        %3013 = vrot.lane.b32.xlu0 %v2842, 64
        %v3014 = vpop.permute.xlu0 %3013
        %3015 = vrot.lane.b32.xlu0 %v2843, 64
        %v3016 = vpop.permute.xlu0 %3015
        %3017 = vrot.lane.b32.xlu0 %v2844, 64
        %v3018 = vpop.permute.xlu0 %3017
        %3019 = vrot.lane.b32.xlu0 %v2845, 64
        %v3020 = vpop.permute.xlu0 %3019
        %3021 = vrot.lane.b32.xlu0 %v2846, 64
        %v3022 = vpop.permute.xlu0 %3021
        %3023 = vrot.lane.b32.xlu0 %v2847, 64
        %v3024 = vpop.permute.xlu0 %3023
        %3025 = vrot.lane.b32.xlu0 %v2848, 64
        %v3026 = vpop.permute.xlu0 %3025
        %3027 = vrot.lane.b32.xlu0 %v2849, 64
        %v3028 = vpop.permute.xlu0 %3027
        %3029 = vrot.lane.b32.xlu0 %v2850, 64
        %v3030 = vpop.permute.xlu0 %3029
        %3031 = vrot.lane.b32.xlu0 %v2851, 64
        %v3032 = vpop.permute.xlu0 %3031
        %3033 = vrot.lane.b32.xlu0 %v2852, 64
        %v3034 = vpop.permute.xlu0 %3033
        %3035 = vrot.lane.b32.xlu0 %v2853, 64
        %v3036 = vpop.permute.xlu0 %3035
        %3037 = vrot.lane.b32.xlu0 %v2854, 64
        %v3038 = vpop.permute.xlu0 %3037
        %3039 = vrot.lane.b32.xlu0 %v2855, 64
        %v3040 = vpop.permute.xlu0 %3039
        %3041 = vrot.lane.b32.xlu0 %v2856, 64
        %v3042 = vpop.permute.xlu0 %3041
        %3043 = vrot.lane.b32.xlu0 %v2857, 64
        %v3044 = vpop.permute.xlu0 %3043
        %3045 = vrot.lane.b32.xlu0 %v2858, 64
        %v3046 = vpop.permute.xlu0 %3045
        %3047 = vrot.lane.b32.xlu0 %v2859, 64
        %v3048 = vpop.permute.xlu0 %3047
        %3049 = vrot.lane.b32.xlu0 %v2860, 64
        %v3050 = vpop.permute.xlu0 %3049
        %3051 = vrot.lane.b32.xlu0 %v2861, 64
        %v3052 = vpop.permute.xlu0 %3051
        %3053 = vrot.lane.b32.xlu0 %v2862, 64
        %v3054 = vpop.permute.xlu0 %3053
        %v3119 = vmul.f32 %v2480, %v2928
        %v3120 = vmul.f32 %v2484, %v2930
        %v3121 = vmul.f32 %v2488, %v2932
        %v3122 = vmul.f32 %v2492, %v2934
        %v3123 = vmul.f32 %v2496, %v2936
        %v3124 = vmul.f32 %v2500, %v2938
        %v3125 = vmul.f32 %v2504, %v2940
        %v3126 = vmul.f32 %v2508, %v2942
        %v3127 = vmul.f32 %v2512, %v2944
        %v3128 = vmul.f32 %v2516, %v2946
        %v3129 = vmul.f32 %v2520, %v2948
        %v3130 = vmul.f32 %v2524, %v2950
        %v3131 = vmul.f32 %v2528, %v2952
        %v3132 = vmul.f32 %v2532, %v2954
        %v3133 = vmul.f32 %v2536, %v2956
        %v3134 = vmul.f32 %v2540, %v2958
        %v3135 = vmul.f32 %v2544, %v2960
        %v3136 = vmul.f32 %v2548, %v2962
        %v3137 = vmul.f32 %v2552, %v2964
        %v3138 = vmul.f32 %v2556, %v2966
        %v3139 = vmul.f32 %v2560, %v2968
        %v3140 = vmul.f32 %v2564, %v2970
        %v3141 = vmul.f32 %v2568, %v2972
        %v3142 = vmul.f32 %v2572, %v2974
        %v3143 = vmul.f32 %v2576, %v2976
        %v3144 = vmul.f32 %v2580, %v2978
        %v3145 = vmul.f32 %v2584, %v2980
        %v3146 = vmul.f32 %v2588, %v2982
        %v3147 = vmul.f32 %v2592, %v2984
        %v3148 = vmul.f32 %v2596, %v2986
        %v3149 = vmul.f32 %v2600, %v2988
        %v3150 = vmul.f32 %v2604, %v2990
        %v3151 = vmul.f32 %v2608, %v2992
        %v3152 = vmul.f32 %v2612, %v2994
        %v3153 = vmul.f32 %v2616, %v2996
        %v3154 = vmul.f32 %v2620, %v2998
        %v3155 = vmul.f32 %v2624, %v3000
        %v3156 = vmul.f32 %v2628, %v3002
        %v3157 = vmul.f32 %v2632, %v3004
        %v3158 = vmul.f32 %v2636, %v3006
        %v3159 = vmul.f32 %v2640, %v3008
        %v3160 = vmul.f32 %v2644, %v3010
        %v3161 = vmul.f32 %v2648, %v3012
        %v3162 = vmul.f32 %v2652, %v3014
        %v3163 = vmul.f32 %v2656, %v3016
        %v3164 = vmul.f32 %v2660, %v3018
        %v3165 = vmul.f32 %v2664, %v3020
        %v3166 = vmul.f32 %v2668, %v3022
        %v3167 = vmul.f32 %v2672, %v3024
        %v3168 = vmul.f32 %v2676, %v3026
        %v3169 = vmul.f32 %v2680, %v3028
        %v3170 = vmul.f32 %v2684, %v3030
        %v3171 = vmul.f32 %v2688, %v3032
        %v3172 = vmul.f32 %v2692, %v3034
        %v3173 = vmul.f32 %v2696, %v3036
        %v3174 = vmul.f32 %v2700, %v3038
        %v3175 = vmul.f32 %v2704, %v3040
        %v3176 = vmul.f32 %v2708, %v3042
        %v3177 = vmul.f32 %v2712, %v3044
        %v3178 = vmul.f32 %v2716, %v3046
        %v3179 = vmul.f32 %v2720, %v3048
        %v3180 = vmul.f32 %v2724, %v3050
        %v3181 = vmul.f32 %v2728, %v3052
        %v3182 = vmul.f32 %v2732, %v3054
        %3247 = vrot.lane.b32.xlu0 %v2735, 64
        %v3248 = vpop.permute.xlu0 %3247
        %3249 = vrot.lane.b32.xlu0 %v2736, 64
        %v3250 = vpop.permute.xlu0 %3249
        %3251 = vrot.lane.b32.xlu0 %v2737, 64
        %v3252 = vpop.permute.xlu0 %3251
        %3253 = vrot.lane.b32.xlu0 %v2738, 64
        %v3254 = vpop.permute.xlu0 %3253
        %3255 = vrot.lane.b32.xlu0 %v2739, 64
        %v3256 = vpop.permute.xlu0 %3255
        %3257 = vrot.lane.b32.xlu0 %v2740, 64
        %v3258 = vpop.permute.xlu0 %3257
        %3259 = vrot.lane.b32.xlu0 %v2741, 64
        %v3260 = vpop.permute.xlu0 %3259
        %3261 = vrot.lane.b32.xlu0 %v2742, 64
        %v3262 = vpop.permute.xlu0 %3261
        %3263 = vrot.lane.b32.xlu0 %v2743, 64
        %v3264 = vpop.permute.xlu0 %3263
        %3265 = vrot.lane.b32.xlu0 %v2744, 64
        %v3266 = vpop.permute.xlu0 %3265
        %3267 = vrot.lane.b32.xlu0 %v2745, 64
        %v3268 = vpop.permute.xlu0 %3267
        %3269 = vrot.lane.b32.xlu0 %v2746, 64
        %v3270 = vpop.permute.xlu0 %3269
        %3271 = vrot.lane.b32.xlu0 %v2747, 64
        %v3272 = vpop.permute.xlu0 %3271
        %3273 = vrot.lane.b32.xlu0 %v2748, 64
        %v3274 = vpop.permute.xlu0 %3273
        %3275 = vrot.lane.b32.xlu0 %v2749, 64
        %v3276 = vpop.permute.xlu0 %3275
        %3277 = vrot.lane.b32.xlu0 %v2750, 64
        %v3278 = vpop.permute.xlu0 %3277
        %3279 = vrot.lane.b32.xlu0 %v2751, 64
        %v3280 = vpop.permute.xlu0 %3279
        %3281 = vrot.lane.b32.xlu0 %v2752, 64
        %v3282 = vpop.permute.xlu0 %3281
        %3283 = vrot.lane.b32.xlu0 %v2753, 64
        %v3284 = vpop.permute.xlu0 %3283
        %3285 = vrot.lane.b32.xlu0 %v2754, 64
        %v3286 = vpop.permute.xlu0 %3285
        %3287 = vrot.lane.b32.xlu0 %v2755, 64
        %v3288 = vpop.permute.xlu0 %3287
        %3289 = vrot.lane.b32.xlu0 %v2756, 64
        %v3290 = vpop.permute.xlu0 %3289
        %3291 = vrot.lane.b32.xlu0 %v2757, 64
        %v3292 = vpop.permute.xlu0 %3291
        %3293 = vrot.lane.b32.xlu0 %v2758, 64
        %v3294 = vpop.permute.xlu0 %3293
        %3295 = vrot.lane.b32.xlu0 %v2759, 64
        %v3296 = vpop.permute.xlu0 %3295
        %3297 = vrot.lane.b32.xlu0 %v2760, 64
        %v3298 = vpop.permute.xlu0 %3297
        %3299 = vrot.lane.b32.xlu0 %v2761, 64
        %v3300 = vpop.permute.xlu0 %3299
        %3301 = vrot.lane.b32.xlu0 %v2762, 64
        %v3302 = vpop.permute.xlu0 %3301
        %3303 = vrot.lane.b32.xlu0 %v2763, 64
        %v3304 = vpop.permute.xlu0 %3303
        %3305 = vrot.lane.b32.xlu0 %v2764, 64
        %v3306 = vpop.permute.xlu0 %3305
        %3307 = vrot.lane.b32.xlu0 %v2765, 64
        %v3308 = vpop.permute.xlu0 %3307
        %3309 = vrot.lane.b32.xlu0 %v2766, 64
        %v3310 = vpop.permute.xlu0 %3309
        %3311 = vrot.lane.b32.xlu0 %v2767, 64
        %v3312 = vpop.permute.xlu0 %3311
        %3313 = vrot.lane.b32.xlu0 %v2768, 64
        %v3314 = vpop.permute.xlu0 %3313
        %3315 = vrot.lane.b32.xlu0 %v2769, 64
        %v3316 = vpop.permute.xlu0 %3315
        %3317 = vrot.lane.b32.xlu0 %v2770, 64
        %v3318 = vpop.permute.xlu0 %3317
        %3319 = vrot.lane.b32.xlu0 %v2771, 64
        %v3320 = vpop.permute.xlu0 %3319
        %3321 = vrot.lane.b32.xlu0 %v2772, 64
        %v3322 = vpop.permute.xlu0 %3321
        %3323 = vrot.lane.b32.xlu0 %v2773, 64
        %v3324 = vpop.permute.xlu0 %3323
        %3325 = vrot.lane.b32.xlu0 %v2774, 64
        %v3326 = vpop.permute.xlu0 %3325
        %3327 = vrot.lane.b32.xlu0 %v2775, 64
        %v3328 = vpop.permute.xlu0 %3327
        %3329 = vrot.lane.b32.xlu0 %v2776, 64
        %v3330 = vpop.permute.xlu0 %3329
        %3331 = vrot.lane.b32.xlu0 %v2777, 64
        %v3332 = vpop.permute.xlu0 %3331
        %3333 = vrot.lane.b32.xlu0 %v2778, 64
        %v3334 = vpop.permute.xlu0 %3333
        %3335 = vrot.lane.b32.xlu0 %v2779, 64
        %v3336 = vpop.permute.xlu0 %3335
        %3337 = vrot.lane.b32.xlu0 %v2780, 64
        %v3338 = vpop.permute.xlu0 %3337
        %3339 = vrot.lane.b32.xlu0 %v2781, 64
        %v3340 = vpop.permute.xlu0 %3339
        %3341 = vrot.lane.b32.xlu0 %v2782, 64
        %v3342 = vpop.permute.xlu0 %3341
        %3343 = vrot.lane.b32.xlu0 %v2783, 64
        %v3344 = vpop.permute.xlu0 %3343
        %3345 = vrot.lane.b32.xlu0 %v2784, 64
        %v3346 = vpop.permute.xlu0 %3345
        %3347 = vrot.lane.b32.xlu0 %v2785, 64
        %v3348 = vpop.permute.xlu0 %3347
        %3349 = vrot.lane.b32.xlu0 %v2786, 64
        %v3350 = vpop.permute.xlu0 %3349
        %3351 = vrot.lane.b32.xlu0 %v2787, 64
        %v3352 = vpop.permute.xlu0 %3351
        %3353 = vrot.lane.b32.xlu0 %v2788, 64
        %v3354 = vpop.permute.xlu0 %3353
        %3355 = vrot.lane.b32.xlu0 %v2789, 64
        %v3356 = vpop.permute.xlu0 %3355
        %3357 = vrot.lane.b32.xlu0 %v2790, 64
        %v3358 = vpop.permute.xlu0 %3357
        %3359 = vrot.lane.b32.xlu0 %v2791, 64
        %v3360 = vpop.permute.xlu0 %3359
        %3361 = vrot.lane.b32.xlu0 %v2792, 64
        %v3362 = vpop.permute.xlu0 %3361
        %3363 = vrot.lane.b32.xlu0 %v2793, 64
        %v3364 = vpop.permute.xlu0 %3363
        %3365 = vrot.lane.b32.xlu0 %v2794, 64
        %v3366 = vpop.permute.xlu0 %3365
        %3367 = vrot.lane.b32.xlu0 %v2795, 64
        %v3368 = vpop.permute.xlu0 %3367
        %3369 = vrot.lane.b32.xlu0 %v2796, 64
        %v3370 = vpop.permute.xlu0 %3369
        %3371 = vrot.lane.b32.xlu0 %v2797, 64
        %v3372 = vpop.permute.xlu0 %3371
        %3373 = vrot.lane.b32.xlu0 %v2798, 64
        %v3374 = vpop.permute.xlu0 %3373
        %v3439 = vmul.f32 %v2480, %v3248
        %v3440 = vmul.f32 %v2484, %v3250
        %v3441 = vmul.f32 %v2488, %v3252
        %v3442 = vmul.f32 %v2492, %v3254
        %v3443 = vmul.f32 %v2496, %v3256
        %v3444 = vmul.f32 %v2500, %v3258
        %v3445 = vmul.f32 %v2504, %v3260
        %v3446 = vmul.f32 %v2508, %v3262
        %v3447 = vmul.f32 %v2512, %v3264
        %v3448 = vmul.f32 %v2516, %v3266
        %v3449 = vmul.f32 %v2520, %v3268
        %v3450 = vmul.f32 %v2524, %v3270
        %v3451 = vmul.f32 %v2528, %v3272
        %v3452 = vmul.f32 %v2532, %v3274
        %v3453 = vmul.f32 %v2536, %v3276
        %v3454 = vmul.f32 %v2540, %v3278
        %v3455 = vmul.f32 %v2544, %v3280
        %v3456 = vmul.f32 %v2548, %v3282
        %v3457 = vmul.f32 %v2552, %v3284
        %v3458 = vmul.f32 %v2556, %v3286
        %v3459 = vmul.f32 %v2560, %v3288
        %v3460 = vmul.f32 %v2564, %v3290
        %v3461 = vmul.f32 %v2568, %v3292
        %v3462 = vmul.f32 %v2572, %v3294
        %v3463 = vmul.f32 %v2576, %v3296
        %v3464 = vmul.f32 %v2580, %v3298
        %v3465 = vmul.f32 %v2584, %v3300
        %v3466 = vmul.f32 %v2588, %v3302
        %v3467 = vmul.f32 %v2592, %v3304
        %v3468 = vmul.f32 %v2596, %v3306
        %v3469 = vmul.f32 %v2600, %v3308
        %v3470 = vmul.f32 %v2604, %v3310
        %v3471 = vmul.f32 %v2608, %v3312
        %v3472 = vmul.f32 %v2612, %v3314
        %v3473 = vmul.f32 %v2616, %v3316
        %v3474 = vmul.f32 %v2620, %v3318
        %v3475 = vmul.f32 %v2624, %v3320
        %v3476 = vmul.f32 %v2628, %v3322
        %v3477 = vmul.f32 %v2632, %v3324
        %v3478 = vmul.f32 %v2636, %v3326
        %v3479 = vmul.f32 %v2640, %v3328
        %v3480 = vmul.f32 %v2644, %v3330
        %v3481 = vmul.f32 %v2648, %v3332
        %v3482 = vmul.f32 %v2652, %v3334
        %v3483 = vmul.f32 %v2656, %v3336
        %v3484 = vmul.f32 %v2660, %v3338
        %v3485 = vmul.f32 %v2664, %v3340
        %v3486 = vmul.f32 %v2668, %v3342
        %v3487 = vmul.f32 %v2672, %v3344
        %v3488 = vmul.f32 %v2676, %v3346
        %v3489 = vmul.f32 %v2680, %v3348
        %v3490 = vmul.f32 %v2684, %v3350
        %v3491 = vmul.f32 %v2688, %v3352
        %v3492 = vmul.f32 %v2692, %v3354
        %v3493 = vmul.f32 %v2696, %v3356
        %v3494 = vmul.f32 %v2700, %v3358
        %v3495 = vmul.f32 %v2704, %v3360
        %v3496 = vmul.f32 %v2708, %v3362
        %v3497 = vmul.f32 %v2712, %v3364
        %v3498 = vmul.f32 %v2716, %v3366
        %v3499 = vmul.f32 %v2720, %v3368
        %v3500 = vmul.f32 %v2724, %v3370
        %v3501 = vmul.f32 %v2728, %v3372
        %v3502 = vmul.f32 %v2732, %v3374
        %3567 = vrot.lane.b32.xlu0 %v3439, 64
        %v3568 = vpop.permute.xlu0 %3567
        %3569 = vrot.lane.b32.xlu0 %v3440, 64
        %v3570 = vpop.permute.xlu0 %3569
        %3571 = vrot.lane.b32.xlu0 %v3441, 64
        %v3572 = vpop.permute.xlu0 %3571
        %3573 = vrot.lane.b32.xlu0 %v3442, 64
        %v3574 = vpop.permute.xlu0 %3573
        %3575 = vrot.lane.b32.xlu0 %v3443, 64
        %v3576 = vpop.permute.xlu0 %3575
        %3577 = vrot.lane.b32.xlu0 %v3444, 64
        %v3578 = vpop.permute.xlu0 %3577
        %3579 = vrot.lane.b32.xlu0 %v3445, 64
        %v3580 = vpop.permute.xlu0 %3579
        %3581 = vrot.lane.b32.xlu0 %v3446, 64
        %v3582 = vpop.permute.xlu0 %3581
        %3583 = vrot.lane.b32.xlu0 %v3447, 64
        %v3584 = vpop.permute.xlu0 %3583
        %3585 = vrot.lane.b32.xlu0 %v3448, 64
        %v3586 = vpop.permute.xlu0 %3585
        %3587 = vrot.lane.b32.xlu0 %v3449, 64
        %v3588 = vpop.permute.xlu0 %3587
        %3589 = vrot.lane.b32.xlu0 %v3450, 64
        %v3590 = vpop.permute.xlu0 %3589
        %3591 = vrot.lane.b32.xlu0 %v3451, 64
        %v3592 = vpop.permute.xlu0 %3591
        %3593 = vrot.lane.b32.xlu0 %v3452, 64
        %v3594 = vpop.permute.xlu0 %3593
        %3595 = vrot.lane.b32.xlu0 %v3453, 64
        %v3596 = vpop.permute.xlu0 %3595
        %3597 = vrot.lane.b32.xlu0 %v3454, 64
        %v3598 = vpop.permute.xlu0 %3597
        %3599 = vrot.lane.b32.xlu0 %v3455, 64
        %v3600 = vpop.permute.xlu0 %3599
        %3601 = vrot.lane.b32.xlu0 %v3456, 64
        %v3602 = vpop.permute.xlu0 %3601
        %3603 = vrot.lane.b32.xlu0 %v3457, 64
        %v3604 = vpop.permute.xlu0 %3603
        %3605 = vrot.lane.b32.xlu0 %v3458, 64
        %v3606 = vpop.permute.xlu0 %3605
        %3607 = vrot.lane.b32.xlu0 %v3459, 64
        %v3608 = vpop.permute.xlu0 %3607
        %3609 = vrot.lane.b32.xlu0 %v3460, 64
        %v3610 = vpop.permute.xlu0 %3609
        %3611 = vrot.lane.b32.xlu0 %v3461, 64
        %v3612 = vpop.permute.xlu0 %3611
        %3613 = vrot.lane.b32.xlu0 %v3462, 64
        %v3614 = vpop.permute.xlu0 %3613
        %3615 = vrot.lane.b32.xlu0 %v3463, 64
        %v3616 = vpop.permute.xlu0 %3615
        %3617 = vrot.lane.b32.xlu0 %v3464, 64
        %v3618 = vpop.permute.xlu0 %3617
        %3619 = vrot.lane.b32.xlu0 %v3465, 64
        %v3620 = vpop.permute.xlu0 %3619
        %3621 = vrot.lane.b32.xlu0 %v3466, 64
        %v3622 = vpop.permute.xlu0 %3621
        %3623 = vrot.lane.b32.xlu0 %v3467, 64
        %v3624 = vpop.permute.xlu0 %3623
        %3625 = vrot.lane.b32.xlu0 %v3468, 64
        %v3626 = vpop.permute.xlu0 %3625
        %3627 = vrot.lane.b32.xlu0 %v3469, 64
        %v3628 = vpop.permute.xlu0 %3627
        %3629 = vrot.lane.b32.xlu0 %v3470, 64
        %v3630 = vpop.permute.xlu0 %3629
        %3631 = vrot.lane.b32.xlu0 %v3471, 64
        %v3632 = vpop.permute.xlu0 %3631
        %3633 = vrot.lane.b32.xlu0 %v3472, 64
        %v3634 = vpop.permute.xlu0 %3633
        %3635 = vrot.lane.b32.xlu0 %v3473, 64
        %v3636 = vpop.permute.xlu0 %3635
        %3637 = vrot.lane.b32.xlu0 %v3474, 64
        %v3638 = vpop.permute.xlu0 %3637
        %3639 = vrot.lane.b32.xlu0 %v3475, 64
        %v3640 = vpop.permute.xlu0 %3639
        %3641 = vrot.lane.b32.xlu0 %v3476, 64
        %v3642 = vpop.permute.xlu0 %3641
        %3643 = vrot.lane.b32.xlu0 %v3477, 64
        %v3644 = vpop.permute.xlu0 %3643
        %3645 = vrot.lane.b32.xlu0 %v3478, 64
        %v3646 = vpop.permute.xlu0 %3645
        %3647 = vrot.lane.b32.xlu0 %v3479, 64
        %v3648 = vpop.permute.xlu0 %3647
        %3649 = vrot.lane.b32.xlu0 %v3480, 64
        %v3650 = vpop.permute.xlu0 %3649
        %3651 = vrot.lane.b32.xlu0 %v3481, 64
        %v3652 = vpop.permute.xlu0 %3651
        %3653 = vrot.lane.b32.xlu0 %v3482, 64
        %v3654 = vpop.permute.xlu0 %3653
        %3655 = vrot.lane.b32.xlu0 %v3483, 64
        %v3656 = vpop.permute.xlu0 %3655
        %3657 = vrot.lane.b32.xlu0 %v3484, 64
        %v3658 = vpop.permute.xlu0 %3657
        %3659 = vrot.lane.b32.xlu0 %v3485, 64
        %v3660 = vpop.permute.xlu0 %3659
        %3661 = vrot.lane.b32.xlu0 %v3486, 64
        %v3662 = vpop.permute.xlu0 %3661
        %3663 = vrot.lane.b32.xlu0 %v3487, 64
        %v3664 = vpop.permute.xlu0 %3663
        %3665 = vrot.lane.b32.xlu0 %v3488, 64
        %v3666 = vpop.permute.xlu0 %3665
        %3667 = vrot.lane.b32.xlu0 %v3489, 64
        %v3668 = vpop.permute.xlu0 %3667
        %3669 = vrot.lane.b32.xlu0 %v3490, 64
        %v3670 = vpop.permute.xlu0 %3669
        %3671 = vrot.lane.b32.xlu0 %v3491, 64
        %v3672 = vpop.permute.xlu0 %3671
        %3673 = vrot.lane.b32.xlu0 %v3492, 64
        %v3674 = vpop.permute.xlu0 %3673
        %3675 = vrot.lane.b32.xlu0 %v3493, 64
        %v3676 = vpop.permute.xlu0 %3675
        %3677 = vrot.lane.b32.xlu0 %v3494, 64
        %v3678 = vpop.permute.xlu0 %3677
        %3679 = vrot.lane.b32.xlu0 %v3495, 64
        %v3680 = vpop.permute.xlu0 %3679
        %3681 = vrot.lane.b32.xlu0 %v3496, 64
        %v3682 = vpop.permute.xlu0 %3681
        %3683 = vrot.lane.b32.xlu0 %v3497, 64
        %v3684 = vpop.permute.xlu0 %3683
        %3685 = vrot.lane.b32.xlu0 %v3498, 64
        %v3686 = vpop.permute.xlu0 %3685
        %3687 = vrot.lane.b32.xlu0 %v3499, 64
        %v3688 = vpop.permute.xlu0 %3687
        %3689 = vrot.lane.b32.xlu0 %v3500, 64
        %v3690 = vpop.permute.xlu0 %3689
        %3691 = vrot.lane.b32.xlu0 %v3501, 64
        %v3692 = vpop.permute.xlu0 %3691
        %3693 = vrot.lane.b32.xlu0 %v3502, 64
        %v3694 = vpop.permute.xlu0 %3693
        %v3759 = vadd.f32 %v3119, %v3568
        %v3760 = vadd.f32 %v3120, %v3570
        %v3761 = vadd.f32 %v3121, %v3572
        %v3762 = vadd.f32 %v3122, %v3574
        %v3763 = vadd.f32 %v3123, %v3576
        %v3764 = vadd.f32 %v3124, %v3578
        %v3765 = vadd.f32 %v3125, %v3580
        %v3766 = vadd.f32 %v3126, %v3582
        %v3767 = vadd.f32 %v3127, %v3584
        %v3768 = vadd.f32 %v3128, %v3586
        %v3769 = vadd.f32 %v3129, %v3588
        %v3770 = vadd.f32 %v3130, %v3590
        %v3771 = vadd.f32 %v3131, %v3592
        %v3772 = vadd.f32 %v3132, %v3594
        %v3773 = vadd.f32 %v3133, %v3596
        %v3774 = vadd.f32 %v3134, %v3598
        %v3775 = vadd.f32 %v3135, %v3600
        %v3776 = vadd.f32 %v3136, %v3602
        %v3777 = vadd.f32 %v3137, %v3604
        %v3778 = vadd.f32 %v3138, %v3606
        %v3779 = vadd.f32 %v3139, %v3608
        %v3780 = vadd.f32 %v3140, %v3610
        %v3781 = vadd.f32 %v3141, %v3612
        %v3782 = vadd.f32 %v3142, %v3614
        %v3783 = vadd.f32 %v3143, %v3616
        %v3784 = vadd.f32 %v3144, %v3618
        %v3785 = vadd.f32 %v3145, %v3620
        %v3786 = vadd.f32 %v3146, %v3622
        %v3787 = vadd.f32 %v3147, %v3624
        %v3788 = vadd.f32 %v3148, %v3626
        %v3789 = vadd.f32 %v3149, %v3628
        %v3790 = vadd.f32 %v3150, %v3630
        %v3791 = vadd.f32 %v3151, %v3632
        %v3792 = vadd.f32 %v3152, %v3634
        %v3793 = vadd.f32 %v3153, %v3636
        %v3794 = vadd.f32 %v3154, %v3638
        %v3795 = vadd.f32 %v3155, %v3640
        %v3796 = vadd.f32 %v3156, %v3642
        %v3797 = vadd.f32 %v3157, %v3644
        %v3798 = vadd.f32 %v3158, %v3646
        %v3799 = vadd.f32 %v3159, %v3648
        %v3800 = vadd.f32 %v3160, %v3650
        %v3801 = vadd.f32 %v3161, %v3652
        %v3802 = vadd.f32 %v3162, %v3654
        %v3803 = vadd.f32 %v3163, %v3656
        %v3804 = vadd.f32 %v3164, %v3658
        %v3805 = vadd.f32 %v3165, %v3660
        %v3806 = vadd.f32 %v3166, %v3662
        %v3807 = vadd.f32 %v3167, %v3664
        %v3808 = vadd.f32 %v3168, %v3666
        %v3809 = vadd.f32 %v3169, %v3668
        %v3810 = vadd.f32 %v3170, %v3670
        %v3811 = vadd.f32 %v3171, %v3672
        %v3812 = vadd.f32 %v3172, %v3674
        %v3813 = vadd.f32 %v3173, %v3676
        %v3814 = vadd.f32 %v3174, %v3678
        %v3815 = vadd.f32 %v3175, %v3680
        %v3816 = vadd.f32 %v3176, %v3682
        %v3817 = vadd.f32 %v3177, %v3684
        %v3818 = vadd.f32 %v3178, %v3686
        %v3819 = vadd.f32 %v3179, %v3688
        %v3820 = vadd.f32 %v3180, %v3690
        %v3821 = vadd.f32 %v3181, %v3692
        %v3822 = vadd.f32 %v3182, %v3694
        %v3823 = vtanh.pop %v3759
        %v3824 = vtanh.pop %v3760
        %v3825 = vtanh.pop %v3761
        %v3826 = vtanh.pop %v3762
        %v3827 = vtanh.pop %v3763
        %v3828 = vtanh.pop %v3764
        %v3829 = vtanh.pop %v3765
        %v3830 = vtanh.pop %v3766
        %v3831 = vtanh.pop %v3767
        %v3832 = vtanh.pop %v3768
        %v3833 = vtanh.pop %v3769
        %v3834 = vtanh.pop %v3770
        %v3835 = vtanh.pop %v3771
        %v3836 = vtanh.pop %v3772
        %v3837 = vtanh.pop %v3773
        %v3838 = vtanh.pop %v3774
        %v3839 = vtanh.pop %v3775
        %v3840 = vtanh.pop %v3776
        %v3841 = vtanh.pop %v3777
        %v3842 = vtanh.pop %v3778
        %v3843 = vtanh.pop %v3779
        %v3844 = vtanh.pop %v3780
        %v3845 = vtanh.pop %v3781
        %v3846 = vtanh.pop %v3782
        %v3847 = vtanh.pop %v3783
        %v3848 = vtanh.pop %v3784
        %v3849 = vtanh.pop %v3785
        %v3850 = vtanh.pop %v3786
        %v3851 = vtanh.pop %v3787
        %v3852 = vtanh.pop %v3788
        %v3853 = vtanh.pop %v3789
        %v3854 = vtanh.pop %v3790
        %v3855 = vtanh.pop %v3791
        %v3856 = vtanh.pop %v3792
        %v3857 = vtanh.pop %v3793
        %v3858 = vtanh.pop %v3794
        %v3859 = vtanh.pop %v3795
        %v3860 = vtanh.pop %v3796
        %v3861 = vtanh.pop %v3797
        %v3862 = vtanh.pop %v3798
        %v3863 = vtanh.pop %v3799
        %v3864 = vtanh.pop %v3800
        %v3865 = vtanh.pop %v3801
        %v3866 = vtanh.pop %v3802
        %v3867 = vtanh.pop %v3803
        %v3868 = vtanh.pop %v3804
        %v3869 = vtanh.pop %v3805
        %v3870 = vtanh.pop %v3806
        %v3871 = vtanh.pop %v3807
        %v3872 = vtanh.pop %v3808
        %v3873 = vtanh.pop %v3809
        %v3874 = vtanh.pop %v3810
        %v3875 = vtanh.pop %v3811
        %v3876 = vtanh.pop %v3812
        %v3877 = vtanh.pop %v3813
        %v3878 = vtanh.pop %v3814
        %v3879 = vtanh.pop %v3815
        %v3880 = vtanh.pop %v3816
        %v3881 = vtanh.pop %v3817
        %v3882 = vtanh.pop %v3818
        %v3883 = vtanh.pop %v3819
        %v3884 = vtanh.pop %v3820
        %v3885 = vtanh.pop %v3821
        %v3886 = vtanh.pop %v3822
        %3951 = vrot.lane.b32.xlu0 %v3823, 64
        %v3952 = vpop.permute.xlu0 %3951
        %3953 = vrot.lane.b32.xlu0 %v3824, 64
        %v3954 = vpop.permute.xlu0 %3953
        %3955 = vrot.lane.b32.xlu0 %v3825, 64
        %v3956 = vpop.permute.xlu0 %3955
        %3957 = vrot.lane.b32.xlu0 %v3826, 64
        %v3958 = vpop.permute.xlu0 %3957
        %3959 = vrot.lane.b32.xlu0 %v3827, 64
        %v3960 = vpop.permute.xlu0 %3959
        %3961 = vrot.lane.b32.xlu0 %v3828, 64
        %v3962 = vpop.permute.xlu0 %3961
        %3963 = vrot.lane.b32.xlu0 %v3829, 64
        %v3964 = vpop.permute.xlu0 %3963
        %3965 = vrot.lane.b32.xlu0 %v3830, 64
        %v3966 = vpop.permute.xlu0 %3965
        %3967 = vrot.lane.b32.xlu0 %v3831, 64
        %v3968 = vpop.permute.xlu0 %3967
        %3969 = vrot.lane.b32.xlu0 %v3832, 64
        %v3970 = vpop.permute.xlu0 %3969
        %3971 = vrot.lane.b32.xlu0 %v3833, 64
        %v3972 = vpop.permute.xlu0 %3971
        %3973 = vrot.lane.b32.xlu0 %v3834, 64
        %v3974 = vpop.permute.xlu0 %3973
        %3975 = vrot.lane.b32.xlu0 %v3835, 64
        %v3976 = vpop.permute.xlu0 %3975
        %3977 = vrot.lane.b32.xlu0 %v3836, 64
        %v3978 = vpop.permute.xlu0 %3977
        %3979 = vrot.lane.b32.xlu0 %v3837, 64
        %v3980 = vpop.permute.xlu0 %3979
        %3981 = vrot.lane.b32.xlu0 %v3838, 64
        %v3982 = vpop.permute.xlu0 %3981
        %3983 = vrot.lane.b32.xlu0 %v3839, 64
        %v3984 = vpop.permute.xlu0 %3983
        %3985 = vrot.lane.b32.xlu0 %v3840, 64
        %v3986 = vpop.permute.xlu0 %3985
        %3987 = vrot.lane.b32.xlu0 %v3841, 64
        %v3988 = vpop.permute.xlu0 %3987
        %3989 = vrot.lane.b32.xlu0 %v3842, 64
        %v3990 = vpop.permute.xlu0 %3989
        %3991 = vrot.lane.b32.xlu0 %v3843, 64
        %v3992 = vpop.permute.xlu0 %3991
        %3993 = vrot.lane.b32.xlu0 %v3844, 64
        %v3994 = vpop.permute.xlu0 %3993
        %3995 = vrot.lane.b32.xlu0 %v3845, 64
        %v3996 = vpop.permute.xlu0 %3995
        %3997 = vrot.lane.b32.xlu0 %v3846, 64
        %v3998 = vpop.permute.xlu0 %3997
        %3999 = vrot.lane.b32.xlu0 %v3847, 64
        %v4000 = vpop.permute.xlu0 %3999
        %4001 = vrot.lane.b32.xlu0 %v3848, 64
        %v4002 = vpop.permute.xlu0 %4001
        %4003 = vrot.lane.b32.xlu0 %v3849, 64
        %v4004 = vpop.permute.xlu0 %4003
        %4005 = vrot.lane.b32.xlu0 %v3850, 64
        %v4006 = vpop.permute.xlu0 %4005
        %4007 = vrot.lane.b32.xlu0 %v3851, 64
        %v4008 = vpop.permute.xlu0 %4007
        %4009 = vrot.lane.b32.xlu0 %v3852, 64
        %v4010 = vpop.permute.xlu0 %4009
        %4011 = vrot.lane.b32.xlu0 %v3853, 64
        %v4012 = vpop.permute.xlu0 %4011
        %4013 = vrot.lane.b32.xlu0 %v3854, 64
        %v4014 = vpop.permute.xlu0 %4013
        %4015 = vrot.lane.b32.xlu0 %v3855, 64
        %v4016 = vpop.permute.xlu0 %4015
        %4017 = vrot.lane.b32.xlu0 %v3856, 64
        %v4018 = vpop.permute.xlu0 %4017
        %4019 = vrot.lane.b32.xlu0 %v3857, 64
        %v4020 = vpop.permute.xlu0 %4019
        %4021 = vrot.lane.b32.xlu0 %v3858, 64
        %v4022 = vpop.permute.xlu0 %4021
        %4023 = vrot.lane.b32.xlu0 %v3859, 64
        %v4024 = vpop.permute.xlu0 %4023
        %4025 = vrot.lane.b32.xlu0 %v3860, 64
        %v4026 = vpop.permute.xlu0 %4025
        %4027 = vrot.lane.b32.xlu0 %v3861, 64
        %v4028 = vpop.permute.xlu0 %4027
        %4029 = vrot.lane.b32.xlu0 %v3862, 64
        %v4030 = vpop.permute.xlu0 %4029
        %4031 = vrot.lane.b32.xlu0 %v3863, 64
        %v4032 = vpop.permute.xlu0 %4031
        %4033 = vrot.lane.b32.xlu0 %v3864, 64
        %v4034 = vpop.permute.xlu0 %4033
        %4035 = vrot.lane.b32.xlu0 %v3865, 64
        %v4036 = vpop.permute.xlu0 %4035
        %4037 = vrot.lane.b32.xlu0 %v3866, 64
        %v4038 = vpop.permute.xlu0 %4037
        %4039 = vrot.lane.b32.xlu0 %v3867, 64
        %v4040 = vpop.permute.xlu0 %4039
        %4041 = vrot.lane.b32.xlu0 %v3868, 64
        %v4042 = vpop.permute.xlu0 %4041
        %4043 = vrot.lane.b32.xlu0 %v3869, 64
        %v4044 = vpop.permute.xlu0 %4043
        %4045 = vrot.lane.b32.xlu0 %v3870, 64
        %v4046 = vpop.permute.xlu0 %4045
        %4047 = vrot.lane.b32.xlu0 %v3871, 64
        %v4048 = vpop.permute.xlu0 %4047
        %4049 = vrot.lane.b32.xlu0 %v3872, 64
        %v4050 = vpop.permute.xlu0 %4049
        %4051 = vrot.lane.b32.xlu0 %v3873, 64
        %v4052 = vpop.permute.xlu0 %4051
        %4053 = vrot.lane.b32.xlu0 %v3874, 64
        %v4054 = vpop.permute.xlu0 %4053
        %4055 = vrot.lane.b32.xlu0 %v3875, 64
        %v4056 = vpop.permute.xlu0 %4055
        %4057 = vrot.lane.b32.xlu0 %v3876, 64
        %v4058 = vpop.permute.xlu0 %4057
        %4059 = vrot.lane.b32.xlu0 %v3877, 64
        %v4060 = vpop.permute.xlu0 %4059
        %4061 = vrot.lane.b32.xlu0 %v3878, 64
        %v4062 = vpop.permute.xlu0 %4061
        %4063 = vrot.lane.b32.xlu0 %v3879, 64
        %v4064 = vpop.permute.xlu0 %4063
        %4065 = vrot.lane.b32.xlu0 %v3880, 64
        %v4066 = vpop.permute.xlu0 %4065
        %4067 = vrot.lane.b32.xlu0 %v3881, 64
        %v4068 = vpop.permute.xlu0 %4067
        %4069 = vrot.lane.b32.xlu0 %v3882, 64
        %v4070 = vpop.permute.xlu0 %4069
        %4071 = vrot.lane.b32.xlu0 %v3883, 64
        %v4072 = vpop.permute.xlu0 %4071
        %4073 = vrot.lane.b32.xlu0 %v3884, 64
        %v4074 = vpop.permute.xlu0 %4073
        %4075 = vrot.lane.b32.xlu0 %v3885, 64
        %v4076 = vpop.permute.xlu0 %4075
        %4077 = vrot.lane.b32.xlu0 %v3886, 64
        %v4078 = vpop.permute.xlu0 %4077
        %v4143 = vmul.f32 %v2482, %v3952
        %v4144 = vmul.f32 %v2486, %v3954
        %v4145 = vmul.f32 %v2490, %v3956
        %v4146 = vmul.f32 %v2494, %v3958
        %v4147 = vmul.f32 %v2498, %v3960
        %v4148 = vmul.f32 %v2502, %v3962
        %v4149 = vmul.f32 %v2506, %v3964
        %v4150 = vmul.f32 %v2510, %v3966
        %v4151 = vmul.f32 %v2514, %v3968
        %v4152 = vmul.f32 %v2518, %v3970
        %v4153 = vmul.f32 %v2522, %v3972
        %v4154 = vmul.f32 %v2526, %v3974
        %v4155 = vmul.f32 %v2530, %v3976
        %v4156 = vmul.f32 %v2534, %v3978
        %v4157 = vmul.f32 %v2538, %v3980
        %v4158 = vmul.f32 %v2542, %v3982
        %v4159 = vmul.f32 %v2546, %v3984
        %v4160 = vmul.f32 %v2550, %v3986
        %v4161 = vmul.f32 %v2554, %v3988
        %v4162 = vmul.f32 %v2558, %v3990
        %v4163 = vmul.f32 %v2562, %v3992
        %v4164 = vmul.f32 %v2566, %v3994
        %v4165 = vmul.f32 %v2570, %v3996
        %v4166 = vmul.f32 %v2574, %v3998
        %v4167 = vmul.f32 %v2578, %v4000
        %v4168 = vmul.f32 %v2582, %v4002
        %v4169 = vmul.f32 %v2586, %v4004
        %v4170 = vmul.f32 %v2590, %v4006
        %v4171 = vmul.f32 %v2594, %v4008
        %v4172 = vmul.f32 %v2598, %v4010
        %v4173 = vmul.f32 %v2602, %v4012
        %v4174 = vmul.f32 %v2606, %v4014
        %v4175 = vmul.f32 %v2610, %v4016
        %v4176 = vmul.f32 %v2614, %v4018
        %v4177 = vmul.f32 %v2618, %v4020
        %v4178 = vmul.f32 %v2622, %v4022
        %v4179 = vmul.f32 %v2626, %v4024
        %v4180 = vmul.f32 %v2630, %v4026
        %v4181 = vmul.f32 %v2634, %v4028
        %v4182 = vmul.f32 %v2638, %v4030
        %v4183 = vmul.f32 %v2642, %v4032
        %v4184 = vmul.f32 %v2646, %v4034
        %v4185 = vmul.f32 %v2650, %v4036
        %v4186 = vmul.f32 %v2654, %v4038
        %v4187 = vmul.f32 %v2658, %v4040
        %v4188 = vmul.f32 %v2662, %v4042
        %v4189 = vmul.f32 %v2666, %v4044
        %v4190 = vmul.f32 %v2670, %v4046
        %v4191 = vmul.f32 %v2674, %v4048
        %v4192 = vmul.f32 %v2678, %v4050
        %v4193 = vmul.f32 %v2682, %v4052
        %v4194 = vmul.f32 %v2686, %v4054
        %v4195 = vmul.f32 %v2690, %v4056
        %v4196 = vmul.f32 %v2694, %v4058
        %v4197 = vmul.f32 %v2698, %v4060
        %v4198 = vmul.f32 %v2702, %v4062
        %v4199 = vmul.f32 %v2706, %v4064
        %v4200 = vmul.f32 %v2710, %v4066
        %v4201 = vmul.f32 %v2714, %v4068
        %v4202 = vmul.f32 %v2718, %v4070
        %v4203 = vmul.f32 %v2722, %v4072
        %v4204 = vmul.f32 %v2726, %v4074
        %v4205 = vmul.f32 %v2730, %v4076
        %v4206 = vmul.f32 %v2734, %v4078
        %vm4207 = vcmask 523264
        %v4208 = vsel %vm4207, %v4143, %v3759
        %v4209 = vsel %vm4207, %v4144, %v3760
        %v4210 = vsel %vm4207, %v4145, %v3761
        %v4211 = vsel %vm4207, %v4146, %v3762
        %v4212 = vsel %vm4207, %v4147, %v3763
        %v4213 = vsel %vm4207, %v4148, %v3764
        %v4214 = vsel %vm4207, %v4149, %v3765
        %v4215 = vsel %vm4207, %v4150, %v3766
        %v4216 = vsel %vm4207, %v4151, %v3767
        %v4217 = vsel %vm4207, %v4152, %v3768
        %v4218 = vsel %vm4207, %v4153, %v3769
        %v4219 = vsel %vm4207, %v4154, %v3770
        %v4220 = vsel %vm4207, %v4155, %v3771
        %v4221 = vsel %vm4207, %v4156, %v3772
        %v4222 = vsel %vm4207, %v4157, %v3773
        %v4223 = vsel %vm4207, %v4158, %v3774
        %v4224 = vsel %vm4207, %v4159, %v3775
        %v4225 = vsel %vm4207, %v4160, %v3776
        %v4226 = vsel %vm4207, %v4161, %v3777
        %v4227 = vsel %vm4207, %v4162, %v3778
        %v4228 = vsel %vm4207, %v4163, %v3779
        %v4229 = vsel %vm4207, %v4164, %v3780
        %v4230 = vsel %vm4207, %v4165, %v3781
        %v4231 = vsel %vm4207, %v4166, %v3782
        %v4232 = vsel %vm4207, %v4167, %v3783
        %v4233 = vsel %vm4207, %v4168, %v3784
        %v4234 = vsel %vm4207, %v4169, %v3785
        %v4235 = vsel %vm4207, %v4170, %v3786
        %v4236 = vsel %vm4207, %v4171, %v3787
        %v4237 = vsel %vm4207, %v4172, %v3788
        %v4238 = vsel %vm4207, %v4173, %v3789
        %v4239 = vsel %vm4207, %v4174, %v3790
        %v4240 = vsel %vm4207, %v4175, %v3791
        %v4241 = vsel %vm4207, %v4176, %v3792
        %v4242 = vsel %vm4207, %v4177, %v3793
        %v4243 = vsel %vm4207, %v4178, %v3794
        %v4244 = vsel %vm4207, %v4179, %v3795
        %v4245 = vsel %vm4207, %v4180, %v3796
        %v4246 = vsel %vm4207, %v4181, %v3797
        %v4247 = vsel %vm4207, %v4182, %v3798
        %v4248 = vsel %vm4207, %v4183, %v3799
        %v4249 = vsel %vm4207, %v4184, %v3800
        %v4250 = vsel %vm4207, %v4185, %v3801
        %v4251 = vsel %vm4207, %v4186, %v3802
        %v4252 = vsel %vm4207, %v4187, %v3803
        %v4253 = vsel %vm4207, %v4188, %v3804
        %v4254 = vsel %vm4207, %v4189, %v3805
        %v4255 = vsel %vm4207, %v4190, %v3806
        %v4256 = vsel %vm4207, %v4191, %v3807
        %v4257 = vsel %vm4207, %v4192, %v3808
        %v4258 = vsel %vm4207, %v4193, %v3809
        %v4259 = vsel %vm4207, %v4194, %v3810
        %v4260 = vsel %vm4207, %v4195, %v3811
        %v4261 = vsel %vm4207, %v4196, %v3812
        %v4262 = vsel %vm4207, %v4197, %v3813
        %v4263 = vsel %vm4207, %v4198, %v3814
        %v4264 = vsel %vm4207, %v4199, %v3815
        %v4265 = vsel %vm4207, %v4200, %v3816
        %v4266 = vsel %vm4207, %v4201, %v3817
        %v4267 = vsel %vm4207, %v4202, %v3818
        %v4268 = vsel %vm4207, %v4203, %v3819
        %v4269 = vsel %vm4207, %v4204, %v3820
        %v4270 = vsel %vm4207, %v4205, %v3821
        %v4271 = vsel %vm4207, %v4206, %v3822
        %4272 = vst [vmem:[%s184] sm:$0xff] %v4208
        %4273 = vst [vmem:[%s184 + $0x8] sm:$0xff] %v4209
        %4274 = vst [vmem:[%s184 + $0x10] sm:$0xff] %v4210
        %4275 = vst [vmem:[%s184 + $0x18] sm:$0xff] %v4211
        %4276 = vst [vmem:[%s184 + $0x20] sm:$0xff] %v4212
        %4277 = vst [vmem:[%s184 + $0x28] sm:$0xff] %v4213
        %4278 = vst [vmem:[%s184 + $0x30] sm:$0xff] %v4214
        %4279 = vst [vmem:[%s184 + $0x38] sm:$0xff] %v4215
        %4280 = vst [vmem:[%s184 + $0x40] sm:$0xff] %v4216
        %4281 = vst [vmem:[%s184 + $0x48] sm:$0xff] %v4217
        %4282 = vst [vmem:[%s184 + $0x50] sm:$0xff] %v4218
        %4283 = vst [vmem:[%s184 + $0x58] sm:$0xff] %v4219
        %4284 = vst [vmem:[%s184 + $0x60] sm:$0xff] %v4220
        %4285 = vst [vmem:[%s184 + $0x68] sm:$0xff] %v4221
        %4286 = vst [vmem:[%s184 + $0x70] sm:$0xff] %v4222
        %4287 = vst [vmem:[%s184 + $0x78] sm:$0xff] %v4223
        %4288 = vst [vmem:[%s184 + $0x80] sm:$0xff] %v4224
        %4289 = vst [vmem:[%s184 + $0x88] sm:$0xff] %v4225
        %4290 = vst [vmem:[%s184 + $0x90] sm:$0xff] %v4226
        %4291 = vst [vmem:[%s184 + $0x98] sm:$0xff] %v4227
        %4292 = vst [vmem:[%s184 + $0xa0] sm:$0xff] %v4228
        %4293 = vst [vmem:[%s184 + $0xa8] sm:$0xff] %v4229
        %4294 = vst [vmem:[%s184 + $0xb0] sm:$0xff] %v4230
        %4295 = vst [vmem:[%s184 + $0xb8] sm:$0xff] %v4231
        %4296 = vst [vmem:[%s184 + $0xc0] sm:$0xff] %v4232
        %4297 = vst [vmem:[%s184 + $0xc8] sm:$0xff] %v4233
        %4298 = vst [vmem:[%s184 + $0xd0] sm:$0xff] %v4234
        %4299 = vst [vmem:[%s184 + $0xd8] sm:$0xff] %v4235
        %4300 = vst [vmem:[%s184 + $0xe0] sm:$0xff] %v4236
        %4301 = vst [vmem:[%s184 + $0xe8] sm:$0xff] %v4237
        %4302 = vst [vmem:[%s184 + $0xf0] sm:$0xff] %v4238
        %4303 = vst [vmem:[%s184 + $0xf8] sm:$0xff] %v4239
        %4304 = vst [vmem:[%s184 + $0x100] sm:$0xff] %v4240
        %4305 = vst [vmem:[%s184 + $0x108] sm:$0xff] %v4241
        %4306 = vst [vmem:[%s184 + $0x110] sm:$0xff] %v4242
        %4307 = vst [vmem:[%s184 + $0x118] sm:$0xff] %v4243
        %4308 = vst [vmem:[%s184 + $0x120] sm:$0xff] %v4244
        %4309 = vst [vmem:[%s184 + $0x128] sm:$0xff] %v4245
        %4310 = vst [vmem:[%s184 + $0x130] sm:$0xff] %v4246
        %4311 = vst [vmem:[%s184 + $0x138] sm:$0xff] %v4247
        %4312 = vst [vmem:[%s184 + $0x140] sm:$0xff] %v4248
        %4313 = vst [vmem:[%s184 + $0x148] sm:$0xff] %v4249
        %4314 = vst [vmem:[%s184 + $0x150] sm:$0xff] %v4250
        %4315 = vst [vmem:[%s184 + $0x158] sm:$0xff] %v4251
        %4316 = vst [vmem:[%s184 + $0x160] sm:$0xff] %v4252
        %4317 = vst [vmem:[%s184 + $0x168] sm:$0xff] %v4253
        %4318 = vst [vmem:[%s184 + $0x170] sm:$0xff] %v4254
        %4319 = vst [vmem:[%s184 + $0x178] sm:$0xff] %v4255
        %4320 = vst [vmem:[%s184 + $0x180] sm:$0xff] %v4256
        %4321 = vst [vmem:[%s184 + $0x188] sm:$0xff] %v4257
        %4322 = vst [vmem:[%s184 + $0x190] sm:$0xff] %v4258
        %4323 = vst [vmem:[%s184 + $0x198] sm:$0xff] %v4259
        %4324 = vst [vmem:[%s184 + $0x1a0] sm:$0xff] %v4260
        %4325 = vst [vmem:[%s184 + $0x1a8] sm:$0xff] %v4261
        %4326 = vst [vmem:[%s184 + $0x1b0] sm:$0xff] %v4262
        %4327 = vst [vmem:[%s184 + $0x1b8] sm:$0xff] %v4263
        %4328 = vst [vmem:[%s184 + $0x1c0] sm:$0xff] %v4264
        %4329 = vst [vmem:[%s184 + $0x1c8] sm:$0xff] %v4265
        %4330 = vst [vmem:[%s184 + $0x1d0] sm:$0xff] %v4266
        %4331 = vst [vmem:[%s184 + $0x1d8] sm:$0xff] %v4267
        %4332 = vst [vmem:[%s184 + $0x1e0] sm:$0xff] %v4268
        %4333 = vst [vmem:[%s184 + $0x1e8] sm:$0xff] %v4269
        %4334 = vst [vmem:[%s184 + $0x1f0] sm:$0xff] %v4270
        %4335 = vst [vmem:[%s184 + $0x1f8] sm:$0xff] %v4271
        %s4336 = sand.u32 %s98, 1
        %s4337 = scalar_lea.sflag [#allocation3], %s4336
        %s4338 = sand.u32 %s98, 1
        %s4339 = smul.addr %s4338, 512
        %s4340 = scalar_lea.vmem [#allocation2], %s4339
        // Predicated region
        $region33: #{tpu_custom_call.1} parent=31 // pred_check
          %p4341 = pneg %p108
        $region34: #{tpu_custom_call.1} parent=31 // pred_check_branch
          %4343 = sbr.rel (%p4341) target = $region36
        $region35: #{tpu_custom_call.1} parent=31 // pred_region
          %s4344 = smul.u32 32, %s17
          %s4346 = ssub.s32 8192, 8192
          %4347 = vsyncadd %s4337, %s4346
          %s4348 = smul.addr %s4344, 2
          %s4349 = smul.addr %s4348, 128
          %s4350 = scalar_lea.hbm %s3, %s4349
          %s4351 = sshll.u32 %s4340, 4
          %s4352 = int_to_ptr.vmem [resolvable:$true] %s4351
          %4357 = dma.vmem_to_hbm [thread:$0]  %s4352, 8192, %s4350, %s4337, 128, 128, 8
        $region36: #{tpu_custom_call.1} parent=31 // pred_fallthru
          _
      $region32: #{tpu_custom_call.1} parent=5 // pred_fallthru
        _
      %p4358 = scmp.le.s32.totalorder 2, %s12
      // Predicated region
      $region37: #{tpu_custom_call.1} parent=5 // pred_check
        %p4359 = pneg %p4358
      $region38: #{tpu_custom_call.1} parent=5 // pred_check_branch
        %4361 = sbr.rel (%p4359) target = $region40
      $region39: #{tpu_custom_call.1} parent=5 // pred_region
        %s4362 = ssub.s32 %s12, 2
        // Predicated region
        $region41: #{tpu_custom_call.1} parent=39 // pred_check
          %p4363 = pneg %p114
        $region42: #{tpu_custom_call.1} parent=39 // pred_check_branch
          %4365 = sbr.rel (%p4363) target = $region44
        $region43: #{tpu_custom_call.1} parent=39 // pred_region
          %s4366 = sand.u32 %s99, 1
          %s4367 = scalar_lea.sflag [#allocation3], %s4366
          %s4368 = sand.u32 %s99, 1
          %s4369 = smul.addr %s4368, 512
          %s4370 = scalar_lea.vmem [#allocation2], %s4369
          %4371 = dma.done %s4367, 8192
        $region44: #{tpu_custom_call.1} parent=39 // pred_fallthru
          _
      $region40: #{tpu_custom_call.1} parent=5 // pred_fallthru
        _
    $region6: #{tpu_custom_call.1} parent=1 // loop_footer
      %s16 = sadd.s32 1, %s12
    $region7: #{tpu_custom_call.1} parent=1 // loop_footer_branch
      %11 = sbr.rel target = $region3
    $region8: #{tpu_custom_call.1} parent=1 // loop_exit
      _
    %4372 = vsyncpa [#allocation3], 1
    %s4373 = scalar_lea.sflag [#allocation3], 1
    %4374 = vsyncpa %s4373, 1

</llo_original>
